<compile_context>
chip_gen: v6e
topology: v6e:2x2x1
jax: 0.10.0
libtpu: 0.0.40
codegen_flags: <defaults>
</compile_context>

<pallas_src>
import functools

import jax
import jax.numpy as jnp
from jax.experimental import pallas as pl
from jax.experimental.pallas import tpu as pltpu

_BN_EPS = 1e-5
_LANE = 128


def _round_up(x, m):
    return (x + m - 1) // m * m


# ----------------------------------------------------------------------------
# Fused Pallas kernel: conv1+bn1+relu -> conv2+bn2 -> (+shortcut) -> relu
# ----------------------------------------------------------------------------
def _resblock_kernel(xph_ref, w1_ref, b1_ref, w2_ref, b2_ref, xs_ref, *rest,
                     ho, wo, stride, projection):
    if projection:
        wsc_ref, bsc_ref, o_ref, pad1_ref = rest
    else:
        o_ref, pad1_ref = rest

    cpi = xph_ref.shape[-1]          # padded in-channels  (multiple of 128)
    cpo = w1_ref.shape[-1]           # padded out-channels (multiple of 128)
    m = ho * wo

    # ---- conv1 (BN1 scale folded into w1) + bias + ReLU ---------------------
    # xph_ref holds the stride x stride phase-split of the padded input; tap
    # (dy, dx) is the contiguous window [qy:qy+ho, qx:qx+wo] of phase (ry, rx).
    acc1 = jnp.zeros((m, cpo), jnp.float32)
    for dy in range(3):
        for dx in range(3):
            ry, qy = dy % stride, dy // stride
            rx, qx = dx % stride, dx // stride
            slab = xph_ref[ry * stride + rx, pl.ds(qy, ho), pl.ds(qx, wo), :]
            acc1 = acc1 + jnp.dot(slab.reshape(m, cpi), w1_ref[dy * 3 + dx],
                                  preferred_element_type=jnp.float32)
    out1 = jnp.maximum(acc1 + b1_ref[...], 0.0)

    # Stage out1 into a zero-padded VMEM scratch (never leaves VMEM) so conv2's
    # nine taps are plain shifted slices.
    pad1_ref[...] = jnp.zeros_like(pad1_ref)
    pad1_ref[pl.ds(1, ho), pl.ds(1, wo), :] = (
        out1.reshape(ho, wo, cpo).astype(pad1_ref.dtype))

    # ---- conv2 (BN2 scale folded into w2) + bias ----------------------------
    acc2 = jnp.zeros((m, cpo), jnp.float32)
    for dy in range(3):
        for dx in range(3):
            slab = pad1_ref[pl.ds(dy, ho), pl.ds(dx, wo), :]
            acc2 = acc2 + jnp.dot(slab.reshape(m, cpo), w2_ref[dy * 3 + dx],
                                  preferred_element_type=jnp.float32)
    acc2 = acc2 + b2_ref[...]

    # ---- shortcut + add + ReLU ----------------------------------------------
    xs = xs_ref[0].reshape(m, xs_ref.shape[-1])
    if projection:                     # 1x1 conv + BN (scale folded into wsc)
        sc = jnp.dot(xs, wsc_ref[...], preferred_element_type=jnp.float32)
        sc = sc + bsc_ref[...]
    else:                              # identity: free VPU add, no matmul
        sc = xs.astype(jnp.float32)

    y = jnp.maximum(acc2 + sc, 0.0)
    o_ref[...] = y.reshape(1, ho, wo, cpo).astype(o_ref.dtype)


# ----------------------------------------------------------------------------
# Glue: BN folding, padding, phase split, pallas_call wrapper
# ----------------------------------------------------------------------------
def _bn_fold(gamma, beta, mean, var, eps=_BN_EPS):
    scale = gamma / jnp.sqrt(var + eps)
    bias = beta - mean * scale
    return scale.astype(jnp.float32), bias.astype(jnp.float32)


def _pad_last(x, target):
    pad = target - x.shape[-1]
    if pad == 0:
        return x
    return jnp.pad(x, [(0, 0)] * (x.ndim - 1) + [(0, pad)])


def _fold_conv3x3(w, scale, cpi, cpo):
    """PyTorch (Cout,Cin,3,3) -> (9, cpi, cpo) bf16 with BN scale folded in."""
    cout, cin = w.shape[0], w.shape[1]
    wm = jnp.transpose(w, (2, 3, 1, 0)).reshape(9, cin, cout) * scale[None, None, :]
    wm = jnp.pad(wm, ((0, 0), (0, cpi - cin), (0, cpo - cout)))
    return wm.astype(jnp.bfloat16)


def residual_block_forward(x_nchw, params, stride=1):
    """Forward pass of the PyTorch ResidualBlock. Input/output are NCHW."""
    x = x_nchw.astype(jnp.float32)
    n, cin, h, w = x.shape
    cout = params["w1"].shape[0]
    ho = (h - 1) // stride + 1
    wo = (w - 1) // stride + 1
    cpi = _round_up(cin, _LANE)
    cpo = _round_up(cout, _LANE)
    projection = (stride != 1) or (cin != cout)

    # NHWC, channel-pad to a lane-dense multiple of 128.
    xh = _pad_last(jnp.transpose(x, (0, 2, 3, 1)), cpi)

    # Spatial zero-pad by 1 (conv padding), then split into stride x stride
    # phases (space-to-depth) so in-kernel tap windows are contiguous slices.
    q = 2 // stride
    hph, wph = ho + q, wo + q
    th, tw = stride * hph, stride * wph
    xp = jnp.pad(xh, ((0, 0), (1, 1), (1, 1), (0, 0)))
    eh, ew = th - (h + 2), tw - (w + 2)
    if eh > 0 or ew > 0:
        xp = jnp.pad(xp, ((0, 0), (0, max(eh, 0)), (0, max(ew, 0)), (0, 0)))
    xp = xp[:, :th, :tw, :]
    xph = xp.reshape(n, hph, stride, wph, stride, cpi)
    xph = jnp.transpose(xph, (0, 2, 4, 1, 3, 5))            # (n, s, s, hph, wph, c)
    xph = xph.reshape(n * stride * stride, hph, wph, cpi).astype(jnp.bfloat16)

    # Fold BN into weights / bias.
    s1, b1 = _bn_fold(params["g1"], params["b1"], params["m1"], params["v1"])
    s2, b2 = _bn_fold(params["g2"], params["b2"], params["m2"], params["v2"])
    w1m = _fold_conv3x3(params["w1"], s1, cpi, cpo)
    w2m = _fold_conv3x3(params["w2"], s2, cpo, cpo)
    b1p = _pad_last(b1.reshape(1, cout), cpo)
    b2p = _pad_last(b2.reshape(1, cout), cpo)

    # Shortcut input: stride-sampled positions of x (channel-padded NHWC).
    xs = xh[:, ::stride, ::stride, :][:, :ho, :wo, :]

    inputs = [xph, w1m, b1p, w2m, b2p]
    in_specs = [
        pl.BlockSpec((stride * stride, hph, wph, cpi), lambda i: (i, 0, 0, 0)),
        pl.BlockSpec((9, cpi, cpo), lambda i: (0, 0, 0)),
        pl.BlockSpec((1, cpo), lambda i: (0, 0)),
        pl.BlockSpec((9, cpo, cpo), lambda i: (0, 0, 0)),
        pl.BlockSpec((1, cpo), lambda i: (0, 0)),
    ]
    if projection:
        ssc, bsc = _bn_fold(params["gsc"], params["bsc"], params["msc"], params["vsc"])
        wsc = params["wsc"].reshape(cout, cin).T * ssc[None, :]
        wsc = jnp.pad(wsc, ((0, cpi - cin), (0, cpo - cout))).astype(jnp.bfloat16)
        bscp = _pad_last(bsc.reshape(1, cout), cpo)
        inputs += [xs.astype(jnp.bfloat16), wsc, bscp]
        in_specs += [
            pl.BlockSpec((1, ho, wo, cpi), lambda i: (i, 0, 0, 0)),
            pl.BlockSpec((cpi, cpo), lambda i: (0, 0)),
            pl.BlockSpec((1, cpo), lambda i: (0, 0)),
        ]
    else:
        inputs += [xs]    # identity residual stays f32, added exactly
        in_specs += [pl.BlockSpec((1, ho, wo, cpi), lambda i: (i, 0, 0, 0))]

    kernel = functools.partial(_resblock_kernel, ho=ho, wo=wo,
                               stride=stride, projection=projection)
    out = pl.pallas_call(
        kernel,
        out_shape=jax.ShapeDtypeStruct((n, ho, wo, cpo), jnp.float32),
        grid=(n,),
        in_specs=in_specs,
        out_specs=pl.BlockSpec((1, ho, wo, cpo), lambda i: (i, 0, 0, 0)),
        scratch_shapes=[pltpu.VMEM((ho + 2, wo + 2, cpo), jnp.bfloat16)],
        compiler_params=pltpu.CompilerParams(
            dimension_semantics=("parallel",)),
    )(*inputs)

    out = out[:, :, :, :cout]                                  # drop channel pad
    return jnp.transpose(out, (0, 3, 1, 2))                    # NCHW


# ----------------------------------------------------------------------------
# Pure-JAX reference (correctness smoke test)
# ----------------------------------------------------------------------------
def _ref_forward(x, params, stride):
    def conv(inp, w, s, pad):
        return jax.lax.conv_general_dilated(
            inp, w, (s, s), [(pad, pad), (pad, pad)],
            dimension_numbers=("NCHW", "OIHW", "NCHW"))

    def bn(inp, g, b, mu, var):
        g, b, mu, var = (t[None, :, None, None] for t in (g, b, mu, var))
        return (inp - mu) / jnp.sqrt(var + _BN_EPS) * g + b

    cin, cout = x.shape[1], params["w1"].shape[0]
    out = jax.nn.relu(bn(conv(x, params["w1"], stride, 1),
                         params["g1"], params["b1"], params["m1"], params["v1"]))
    out = bn(conv(out, params["w2"], 1, 1),
             params["g2"], params["b2"], params["m2"], params["v2"])
    if stride != 1 or cin != cout:
        sc = bn(conv(x, params["wsc"], stride, 0),
                params["gsc"], params["bsc"], params["msc"], params["vsc"])
    else:
        sc = x
    return jax.nn.relu(out + sc)


def _make_params(key, cin, cout):
    ks = jax.random.split(key, 8)
    f32 = jnp.float32

    def bn_params(k):
        k1, k2, k3, k4 = jax.random.split(k, 4)
        gamma = jax.random.uniform(k1, (cout,), f32, 0.5, 1.5)
        beta = 0.1 * jax.random.normal(k2, (cout,), f32)
        mean = 0.1 * jax.random.normal(k3, (cout,), f32)
        var = jax.random.uniform(k4, (cout,), f32, 0.5, 1.5)
        return gamma, beta, mean, var

    w1 = 0.1 * jax.random.normal(ks[0], (cout, cin, 3, 3), f32)
    w2 = 0.1 * jax.random.normal(ks[1], (cout, cout, 3, 3), f32)
    wsc = 0.1 * jax.random.normal(ks[2], (cout, cin, 1, 1), f32)
    g1, b1, m1, v1 = bn_params(ks[3])
    g2, b2, m2, v2 = bn_params(ks[4])
    gsc, bsc, msc, vsc = bn_params(ks[5])
    return dict(w1=w1, g1=g1, b1=b1, m1=m1, v1=v1,
                w2=w2, g2=g2, b2=b2, m2=m2, v2=v2,
                wsc=wsc, gsc=gsc, bsc=bsc, msc=msc, vsc=vsc)


if __name__ == "__main__":
    key = jax.random.PRNGKey(0)
    k1, k2, k3, k4 = jax.random.split(key, 4)

    # Case 1: projection shortcut — ResidualBlock(in=4, out=8, stride=2)
    N, CIN, COUT, H, W, STRIDE = 2, 4, 8, 16, 16, 2
    params = _make_params(k1, CIN, COUT)
    x = jax.random.normal(k2, (N, CIN, H, W), jnp.float32)
    fwd = jax.jit(functools.partial(residual_block_forward, stride=STRIDE))
    out = jax.block_until_ready(fwd(x, params))
    ref = _ref_forward(x, params, STRIDE)
    assert out.shape == ref.shape == (N, COUT, H // STRIDE, W // STRIDE), out.shape
    err = float(jnp.max(jnp.abs(out - ref)))
    assert err < 2e-2, f"projection block mismatch (bf16 matmul path): {err}"

    # Case 2: identity shortcut — ResidualBlock(in=8, out=8, stride=1)
    params2 = _make_params(k3, COUT, COUT)
    x2 = jax.random.normal(k4, (N, COUT, 8, 8), jnp.float32)
    fwd2 = jax.jit(functools.partial(residual_block_forward, stride=1))
    out2 = jax.block_until_ready(fwd2(x2, params2))
    ref2 = _ref_forward(x2, params2, 1)
    assert out2.shape == ref2.shape == (N, COUT, 8, 8), out2.shape
    err2 = float(jnp.max(jnp.abs(out2 - ref2)))
    assert err2 < 2e-2, f"identity block mismatch (bf16 matmul path): {err2}"

    print("KERNEL_OK")
</pallas_src>

<mosaic_0001>
module attributes {stable_mosaic.version = 11 : i64} {
  func.func @_resblock_kernel(%arg0: i32, %arg1: memref<4x9x9x128xbf16, #tpu.memory_space<vmem>>, %arg2: memref<9x128x128xbf16, #tpu.memory_space<vmem>>, %arg3: memref<1x128xf32, #tpu.memory_space<vmem>>, %arg4: memref<9x128x128xbf16, #tpu.memory_space<vmem>>, %arg5: memref<1x128xf32, #tpu.memory_space<vmem>>, %arg6: memref<1x8x8x128xbf16, #tpu.memory_space<vmem>>, %arg7: memref<128x128xbf16, #tpu.memory_space<vmem>>, %arg8: memref<1x128xf32, #tpu.memory_space<vmem>>, %arg9: memref<1x8x8x128xf32, #tpu.memory_space<vmem>>, %arg10: memref<10x10x128xbf16, #tpu.memory_space<vmem>>) attributes {dimension_semantics = [#tpu.dimension_semantics<parallel>], iteration_bounds = array<i64: 2>, scalar_prefetch = 0 : i64, scratch_operands = 1 : i64, tpu.core_type = #tpu.core_type<tc>, window_params = [{transform_indices = @transform_0, window_bounds = array<i64: 4, 9, 9, 128>}, {pipeline_mode = #tpu.pipeline_mode<synchronous>, transform_indices = @transform_1, window_bounds = array<i64: 9, 128, 128>}, {pipeline_mode = #tpu.pipeline_mode<synchronous>, transform_indices = @transform_2, window_bounds = array<i64: 1, 128>}, {pipeline_mode = #tpu.pipeline_mode<synchronous>, transform_indices = @transform_3, window_bounds = array<i64: 9, 128, 128>}, {pipeline_mode = #tpu.pipeline_mode<synchronous>, transform_indices = @transform_4, window_bounds = array<i64: 1, 128>}, {transform_indices = @transform_5, window_bounds = array<i64: 1, 8, 8, 128>}, {pipeline_mode = #tpu.pipeline_mode<synchronous>, transform_indices = @transform_6, window_bounds = array<i64: 128, 128>}, {pipeline_mode = #tpu.pipeline_mode<synchronous>, transform_indices = @transform_7, window_bounds = array<i64: 1, 128>}, {transform_indices = @transform_8, window_bounds = array<i64: 1, 8, 8, 128>}]} {
    %cst = arith.constant 0.000000e+00 : f32
    %0 = vector.broadcast %cst : f32 to vector<64x128xf32>
    %c0 = arith.constant 0 : index
    %c0_0 = arith.constant 0 : index
    %c0_1 = arith.constant 0 : index
    %c0_2 = arith.constant 0 : index
    %1 = vector.load %arg1[%c0, %c0_0, %c0_1, %c0_2] : memref<4x9x9x128xbf16, #tpu.memory_space<vmem>>, vector<1x8x8x128xbf16>
    %2 = vector.shape_cast %1 : vector<1x8x8x128xbf16> to vector<8x8x128xbf16>
    %3 = vector.shape_cast %2 : vector<8x8x128xbf16> to vector<64x128xbf16>
    %c0_3 = arith.constant 0 : index
    %c0_4 = arith.constant 0 : index
    %c0_5 = arith.constant 0 : index
    %4 = vector.load %arg2[%c0_3, %c0_4, %c0_5] : memref<9x128x128xbf16, #tpu.memory_space<vmem>>, vector<1x128x128xbf16>
    %5 = vector.shape_cast %4 : vector<1x128x128xbf16> to vector<128x128xbf16>
    %cst_6 = arith.constant dense<0.000000e+00> : vector<64x128xf32>
    %6 = tpu.matmul %3, %5, %cst_6 {dimension_numbers = #tpu.dot_dimension_numbers<[1], [0], [0], [1], [0, 0, 1, 1], [], []>} : vector<64x128xbf16>, vector<128x128xbf16>, vector<64x128xf32> -> vector<64x128xf32>
    %7 = arith.addf %0, %6 : vector<64x128xf32>
    %c1 = arith.constant 1 : index
    %c0_7 = arith.constant 0 : index
    %c0_8 = arith.constant 0 : index
    %c0_9 = arith.constant 0 : index
    %8 = vector.load %arg1[%c1, %c0_7, %c0_8, %c0_9] : memref<4x9x9x128xbf16, #tpu.memory_space<vmem>>, vector<1x8x8x128xbf16>
    %9 = vector.shape_cast %8 : vector<1x8x8x128xbf16> to vector<8x8x128xbf16>
    %10 = vector.shape_cast %9 : vector<8x8x128xbf16> to vector<64x128xbf16>
    %c1_10 = arith.constant 1 : index
    %c0_11 = arith.constant 0 : index
    %c0_12 = arith.constant 0 : index
    %11 = vector.load %arg2[%c1_10, %c0_11, %c0_12] : memref<9x128x128xbf16, #tpu.memory_space<vmem>>, vector<1x128x128xbf16>
    %12 = vector.shape_cast %11 : vector<1x128x128xbf16> to vector<128x128xbf16>
    %cst_13 = arith.constant dense<0.000000e+00> : vector<64x128xf32>
    %13 = tpu.matmul %10, %12, %cst_13 {dimension_numbers = #tpu.dot_dimension_numbers<[1], [0], [0], [1], [0, 0, 1, 1], [], []>} : vector<64x128xbf16>, vector<128x128xbf16>, vector<64x128xf32> -> vector<64x128xf32>
    %14 = arith.addf %7, %13 : vector<64x128xf32>
    %c0_14 = arith.constant 0 : index
    %c0_15 = arith.constant 0 : index
    %c1_16 = arith.constant 1 : index
    %c0_17 = arith.constant 0 : index
    %15 = vector.load %arg1[%c0_14, %c0_15, %c1_16, %c0_17] : memref<4x9x9x128xbf16, #tpu.memory_space<vmem>>, vector<1x8x8x128xbf16>
    %16 = vector.shape_cast %15 : vector<1x8x8x128xbf16> to vector<8x8x128xbf16>
    %17 = vector.shape_cast %16 : vector<8x8x128xbf16> to vector<64x128xbf16>
    %c2 = arith.constant 2 : index
    %c0_18 = arith.constant 0 : index
    %c0_19 = arith.constant 0 : index
    %18 = vector.load %arg2[%c2, %c0_18, %c0_19] : memref<9x128x128xbf16, #tpu.memory_space<vmem>>, vector<1x128x128xbf16>
    %19 = vector.shape_cast %18 : vector<1x128x128xbf16> to vector<128x128xbf16>
    %cst_20 = arith.constant dense<0.000000e+00> : vector<64x128xf32>
    %20 = tpu.matmul %17, %19, %cst_20 {dimension_numbers = #tpu.dot_dimension_numbers<[1], [0], [0], [1], [0, 0, 1, 1], [], []>} : vector<64x128xbf16>, vector<128x128xbf16>, vector<64x128xf32> -> vector<64x128xf32>
    %21 = arith.addf %14, %20 : vector<64x128xf32>
    %c2_21 = arith.constant 2 : index
    %c0_22 = arith.constant 0 : index
    %c0_23 = arith.constant 0 : index
    %c0_24 = arith.constant 0 : index
    %22 = vector.load %arg1[%c2_21, %c0_22, %c0_23, %c0_24] : memref<4x9x9x128xbf16, #tpu.memory_space<vmem>>, vector<1x8x8x128xbf16>
    %23 = vector.shape_cast %22 : vector<1x8x8x128xbf16> to vector<8x8x128xbf16>
    %24 = vector.shape_cast %23 : vector<8x8x128xbf16> to vector<64x128xbf16>
    %c3 = arith.constant 3 : index
    %c0_25 = arith.constant 0 : index
    %c0_26 = arith.constant 0 : index
    %25 = vector.load %arg2[%c3, %c0_25, %c0_26] : memref<9x128x128xbf16, #tpu.memory_space<vmem>>, vector<1x128x128xbf16>
    %26 = vector.shape_cast %25 : vector<1x128x128xbf16> to vector<128x128xbf16>
    %cst_27 = arith.constant dense<0.000000e+00> : vector<64x128xf32>
    %27 = tpu.matmul %24, %26, %cst_27 {dimension_numbers = #tpu.dot_dimension_numbers<[1], [0], [0], [1], [0, 0, 1, 1], [], []>} : vector<64x128xbf16>, vector<128x128xbf16>, vector<64x128xf32> -> vector<64x128xf32>
    %28 = arith.addf %21, %27 : vector<64x128xf32>
    %c3_28 = arith.constant 3 : index
    %c0_29 = arith.constant 0 : index
    %c0_30 = arith.constant 0 : index
    %c0_31 = arith.constant 0 : index
    %29 = vector.load %arg1[%c3_28, %c0_29, %c0_30, %c0_31] : memref<4x9x9x128xbf16, #tpu.memory_space<vmem>>, vector<1x8x8x128xbf16>
    %30 = vector.shape_cast %29 : vector<1x8x8x128xbf16> to vector<8x8x128xbf16>
    %31 = vector.shape_cast %30 : vector<8x8x128xbf16> to vector<64x128xbf16>
    %c4 = arith.constant 4 : index
    %c0_32 = arith.constant 0 : index
    %c0_33 = arith.constant 0 : index
    %32 = vector.load %arg2[%c4, %c0_32, %c0_33] : memref<9x128x128xbf16, #tpu.memory_space<vmem>>, vector<1x128x128xbf16>
    %33 = vector.shape_cast %32 : vector<1x128x128xbf16> to vector<128x128xbf16>
    %cst_34 = arith.constant dense<0.000000e+00> : vector<64x128xf32>
    %34 = tpu.matmul %31, %33, %cst_34 {dimension_numbers = #tpu.dot_dimension_numbers<[1], [0], [0], [1], [0, 0, 1, 1], [], []>} : vector<64x128xbf16>, vector<128x128xbf16>, vector<64x128xf32> -> vector<64x128xf32>
    %35 = arith.addf %28, %34 : vector<64x128xf32>
    %c2_35 = arith.constant 2 : index
    %c0_36 = arith.constant 0 : index
    %c1_37 = arith.constant 1 : index
    %c0_38 = arith.constant 0 : index
    %36 = vector.load %arg1[%c2_35, %c0_36, %c1_37, %c0_38] : memref<4x9x9x128xbf16, #tpu.memory_space<vmem>>, vector<1x8x8x128xbf16>
    %37 = vector.shape_cast %36 : vector<1x8x8x128xbf16> to vector<8x8x128xbf16>
    %38 = vector.shape_cast %37 : vector<8x8x128xbf16> to vector<64x128xbf16>
    %c5 = arith.constant 5 : index
    %c0_39 = arith.constant 0 : index
    %c0_40 = arith.constant 0 : index
    %39 = vector.load %arg2[%c5, %c0_39, %c0_40] : memref<9x128x128xbf16, #tpu.memory_space<vmem>>, vector<1x128x128xbf16>
    %40 = vector.shape_cast %39 : vector<1x128x128xbf16> to vector<128x128xbf16>
    %cst_41 = arith.constant dense<0.000000e+00> : vector<64x128xf32>
    %41 = tpu.matmul %38, %40, %cst_41 {dimension_numbers = #tpu.dot_dimension_numbers<[1], [0], [0], [1], [0, 0, 1, 1], [], []>} : vector<64x128xbf16>, vector<128x128xbf16>, vector<64x128xf32> -> vector<64x128xf32>
    %42 = arith.addf %35, %41 : vector<64x128xf32>
    %c0_42 = arith.constant 0 : index
    %c1_43 = arith.constant 1 : index
    %c0_44 = arith.constant 0 : index
    %c0_45 = arith.constant 0 : index
    %43 = vector.load %arg1[%c0_42, %c1_43, %c0_44, %c0_45] : memref<4x9x9x128xbf16, #tpu.memory_space<vmem>>, vector<1x8x8x128xbf16>
    %44 = vector.shape_cast %43 : vector<1x8x8x128xbf16> to vector<8x8x128xbf16>
    %45 = vector.shape_cast %44 : vector<8x8x128xbf16> to vector<64x128xbf16>
    %c6 = arith.constant 6 : index
    %c0_46 = arith.constant 0 : index
    %c0_47 = arith.constant 0 : index
    %46 = vector.load %arg2[%c6, %c0_46, %c0_47] : memref<9x128x128xbf16, #tpu.memory_space<vmem>>, vector<1x128x128xbf16>
    %47 = vector.shape_cast %46 : vector<1x128x128xbf16> to vector<128x128xbf16>
    %cst_48 = arith.constant dense<0.000000e+00> : vector<64x128xf32>
    %48 = tpu.matmul %45, %47, %cst_48 {dimension_numbers = #tpu.dot_dimension_numbers<[1], [0], [0], [1], [0, 0, 1, 1], [], []>} : vector<64x128xbf16>, vector<128x128xbf16>, vector<64x128xf32> -> vector<64x128xf32>
    %49 = arith.addf %42, %48 : vector<64x128xf32>
    %c1_49 = arith.constant 1 : index
    %c1_50 = arith.constant 1 : index
    %c0_51 = arith.constant 0 : index
    %c0_52 = arith.constant 0 : index
    %50 = vector.load %arg1[%c1_49, %c1_50, %c0_51, %c0_52] : memref<4x9x9x128xbf16, #tpu.memory_space<vmem>>, vector<1x8x8x128xbf16>
    %51 = vector.shape_cast %50 : vector<1x8x8x128xbf16> to vector<8x8x128xbf16>
    %52 = vector.shape_cast %51 : vector<8x8x128xbf16> to vector<64x128xbf16>
    %c7 = arith.constant 7 : index
    %c0_53 = arith.constant 0 : index
    %c0_54 = arith.constant 0 : index
    %53 = vector.load %arg2[%c7, %c0_53, %c0_54] : memref<9x128x128xbf16, #tpu.memory_space<vmem>>, vector<1x128x128xbf16>
    %54 = vector.shape_cast %53 : vector<1x128x128xbf16> to vector<128x128xbf16>
    %cst_55 = arith.constant dense<0.000000e+00> : vector<64x128xf32>
    %55 = tpu.matmul %52, %54, %cst_55 {dimension_numbers = #tpu.dot_dimension_numbers<[1], [0], [0], [1], [0, 0, 1, 1], [], []>} : vector<64x128xbf16>, vector<128x128xbf16>, vector<64x128xf32> -> vector<64x128xf32>
    %56 = arith.addf %49, %55 : vector<64x128xf32>
    %c0_56 = arith.constant 0 : index
    %c1_57 = arith.constant 1 : index
    %c1_58 = arith.constant 1 : index
    %c0_59 = arith.constant 0 : index
    %57 = vector.load %arg1[%c0_56, %c1_57, %c1_58, %c0_59] : memref<4x9x9x128xbf16, #tpu.memory_space<vmem>>, vector<1x8x8x128xbf16>
    %58 = vector.shape_cast %57 : vector<1x8x8x128xbf16> to vector<8x8x128xbf16>
    %59 = vector.shape_cast %58 : vector<8x8x128xbf16> to vector<64x128xbf16>
    %c8 = arith.constant 8 : index
    %c0_60 = arith.constant 0 : index
    %c0_61 = arith.constant 0 : index
    %60 = vector.load %arg2[%c8, %c0_60, %c0_61] : memref<9x128x128xbf16, #tpu.memory_space<vmem>>, vector<1x128x128xbf16>
    %61 = vector.shape_cast %60 : vector<1x128x128xbf16> to vector<128x128xbf16>
    %cst_62 = arith.constant dense<0.000000e+00> : vector<64x128xf32>
    %62 = tpu.matmul %59, %61, %cst_62 {dimension_numbers = #tpu.dot_dimension_numbers<[1], [0], [0], [1], [0, 0, 1, 1], [], []>} : vector<64x128xbf16>, vector<128x128xbf16>, vector<64x128xf32> -> vector<64x128xf32>
    %63 = arith.addf %56, %62 : vector<64x128xf32>
    %c0_63 = arith.constant 0 : index
    %c0_64 = arith.constant 0 : index
    %64 = vector.load %arg3[%c0_63, %c0_64] : memref<1x128xf32, #tpu.memory_space<vmem>>, vector<1x128xf32>
    %65 = vector.broadcast %64 : vector<1x128xf32> to vector<64x128xf32>
    %66 = arith.addf %63, %65 : vector<64x128xf32>
    %cst_65 = arith.constant 0.000000e+00 : f32
    %67 = vector.broadcast %cst_65 : f32 to vector<64x128xf32>
    %68 = arith.maximumf %66, %67 : vector<64x128xf32>
    %cst_66 = arith.constant 0.000000e+00 : bf16
    %69 = vector.broadcast %cst_66 : bf16 to vector<10x10x128xbf16>
    %c0_67 = arith.constant 0 : index
    %c0_68 = arith.constant 0 : index
    %c0_69 = arith.constant 0 : index
    %70 = vector.load %arg10[%c0_67, %c0_68, %c0_69] : memref<10x10x128xbf16, #tpu.memory_space<vmem>>, vector<10x10x128xbf16>
    tpu.vector_store %arg10[%c0_67, %c0_68, %c0_69], %69 {strides = array<i32>} : memref<10x10x128xbf16, #tpu.memory_space<vmem>>, vector<10x10x128xbf16>,
    %71 = vector.shape_cast %68 : vector<64x128xf32> to vector<8x8x128xf32>
    %72 = arith.truncf %71 : vector<8x8x128xf32> to vector<8x8x128xbf16>
    %c1_70 = arith.constant 1 : index
    %c1_71 = arith.constant 1 : index
    %c0_72 = arith.constant 0 : index
    %73 = vector.load %arg10[%c1_70, %c1_71, %c0_72] : memref<10x10x128xbf16, #tpu.memory_space<vmem>>, vector<8x8x128xbf16>
    tpu.vector_store %arg10[%c1_70, %c1_71, %c0_72], %72 {strides = array<i32>} : memref<10x10x128xbf16, #tpu.memory_space<vmem>>, vector<8x8x128xbf16>,
    %cst_73 = arith.constant 0.000000e+00 : f32
    %74 = vector.broadcast %cst_73 : f32 to vector<64x128xf32>
    %c0_74 = arith.constant 0 : index
    %c0_75 = arith.constant 0 : index
    %c0_76 = arith.constant 0 : index
    %75 = vector.load %arg10[%c0_74, %c0_75, %c0_76] : memref<10x10x128xbf16, #tpu.memory_space<vmem>>, vector<8x8x128xbf16>
    %76 = vector.shape_cast %75 : vector<8x8x128xbf16> to vector<64x128xbf16>
    %c0_77 = arith.constant 0 : index
    %c0_78 = arith.constant 0 : index
    %c0_79 = arith.constant 0 : index
    %77 = vector.load %arg4[%c0_77, %c0_78, %c0_79] : memref<9x128x128xbf16, #tpu.memory_space<vmem>>, vector<1x128x128xbf16>
    %78 = vector.shape_cast %77 : vector<1x128x128xbf16> to vector<128x128xbf16>
    %cst_80 = arith.constant dense<0.000000e+00> : vector<64x128xf32>
    %79 = tpu.matmul %76, %78, %cst_80 {dimension_numbers = #tpu.dot_dimension_numbers<[1], [0], [0], [1], [0, 0, 1, 1], [], []>} : vector<64x128xbf16>, vector<128x128xbf16>, vector<64x128xf32> -> vector<64x128xf32>
    %80 = arith.addf %74, %79 : vector<64x128xf32>
    %c0_81 = arith.constant 0 : index
    %c1_82 = arith.constant 1 : index
    %c0_83 = arith.constant 0 : index
    %81 = vector.load %arg10[%c0_81, %c1_82, %c0_83] : memref<10x10x128xbf16, #tpu.memory_space<vmem>>, vector<8x8x128xbf16>
    %82 = vector.shape_cast %81 : vector<8x8x128xbf16> to vector<64x128xbf16>
    %c1_84 = arith.constant 1 : index
    %c0_85 = arith.constant 0 : index
    %c0_86 = arith.constant 0 : index
    %83 = vector.load %arg4[%c1_84, %c0_85, %c0_86] : memref<9x128x128xbf16, #tpu.memory_space<vmem>>, vector<1x128x128xbf16>
    %84 = vector.shape_cast %83 : vector<1x128x128xbf16> to vector<128x128xbf16>
    %cst_87 = arith.constant dense<0.000000e+00> : vector<64x128xf32>
    %85 = tpu.matmul %82, %84, %cst_87 {dimension_numbers = #tpu.dot_dimension_numbers<[1], [0], [0], [1], [0, 0, 1, 1], [], []>} : vector<64x128xbf16>, vector<128x128xbf16>, vector<64x128xf32> -> vector<64x128xf32>
    %86 = arith.addf %80, %85 : vector<64x128xf32>
    %c0_88 = arith.constant 0 : index
    %c2_89 = arith.constant 2 : index
    %c0_90 = arith.constant 0 : index
    %87 = vector.load %arg10[%c0_88, %c2_89, %c0_90] : memref<10x10x128xbf16, #tpu.memory_space<vmem>>, vector<8x8x128xbf16>
    %88 = vector.shape_cast %87 : vector<8x8x128xbf16> to vector<64x128xbf16>
    %c2_91 = arith.constant 2 : index
    %c0_92 = arith.constant 0 : index
    %c0_93 = arith.constant 0 : index
    %89 = vector.load %arg4[%c2_91, %c0_92, %c0_93] : memref<9x128x128xbf16, #tpu.memory_space<vmem>>, vector<1x128x128xbf16>
    %90 = vector.shape_cast %89 : vector<1x128x128xbf16> to vector<128x128xbf16>
    %cst_94 = arith.constant dense<0.000000e+00> : vector<64x128xf32>
    %91 = tpu.matmul %88, %90, %cst_94 {dimension_numbers = #tpu.dot_dimension_numbers<[1], [0], [0], [1], [0, 0, 1, 1], [], []>} : vector<64x128xbf16>, vector<128x128xbf16>, vector<64x128xf32> -> vector<64x128xf32>
    %92 = arith.addf %86, %91 : vector<64x128xf32>
    %c1_95 = arith.constant 1 : index
    %c0_96 = arith.constant 0 : index
    %c0_97 = arith.constant 0 : index
    %93 = vector.load %arg10[%c1_95, %c0_96, %c0_97] : memref<10x10x128xbf16, #tpu.memory_space<vmem>>, vector<8x8x128xbf16>
    %94 = vector.shape_cast %93 : vector<8x8x128xbf16> to vector<64x128xbf16>
    %c3_98 = arith.constant 3 : index
    %c0_99 = arith.constant 0 : index
    %c0_100 = arith.constant 0 : index
    %95 = vector.load %arg4[%c3_98, %c0_99, %c0_100] : memref<9x128x128xbf16, #tpu.memory_space<vmem>>, vector<1x128x128xbf16>
    %96 = vector.shape_cast %95 : vector<1x128x128xbf16> to vector<128x128xbf16>
    %cst_101 = arith.constant dense<0.000000e+00> : vector<64x128xf32>
    %97 = tpu.matmul %94, %96, %cst_101 {dimension_numbers = #tpu.dot_dimension_numbers<[1], [0], [0], [1], [0, 0, 1, 1], [], []>} : vector<64x128xbf16>, vector<128x128xbf16>, vector<64x128xf32> -> vector<64x128xf32>
    %98 = arith.addf %92, %97 : vector<64x128xf32>
    %c1_102 = arith.constant 1 : index
    %c1_103 = arith.constant 1 : index
    %c0_104 = arith.constant 0 : index
    %99 = vector.load %arg10[%c1_102, %c1_103, %c0_104] : memref<10x10x128xbf16, #tpu.memory_space<vmem>>, vector<8x8x128xbf16>
    %100 = vector.shape_cast %99 : vector<8x8x128xbf16> to vector<64x128xbf16>
    %c4_105 = arith.constant 4 : index
    %c0_106 = arith.constant 0 : index
    %c0_107 = arith.constant 0 : index
    %101 = vector.load %arg4[%c4_105, %c0_106, %c0_107] : memref<9x128x128xbf16, #tpu.memory_space<vmem>>, vector<1x128x128xbf16>
    %102 = vector.shape_cast %101 : vector<1x128x128xbf16> to vector<128x128xbf16>
    %cst_108 = arith.constant dense<0.000000e+00> : vector<64x128xf32>
    %103 = tpu.matmul %100, %102, %cst_108 {dimension_numbers = #tpu.dot_dimension_numbers<[1], [0], [0], [1], [0, 0, 1, 1], [], []>} : vector<64x128xbf16>, vector<128x128xbf16>, vector<64x128xf32> -> vector<64x128xf32>
    %104 = arith.addf %98, %103 : vector<64x128xf32>
    %c1_109 = arith.constant 1 : index
    %c2_110 = arith.constant 2 : index
    %c0_111 = arith.constant 0 : index
    %105 = vector.load %arg10[%c1_109, %c2_110, %c0_111] : memref<10x10x128xbf16, #tpu.memory_space<vmem>>, vector<8x8x128xbf16>
    %106 = vector.shape_cast %105 : vector<8x8x128xbf16> to vector<64x128xbf16>
    %c5_112 = arith.constant 5 : index
    %c0_113 = arith.constant 0 : index
    %c0_114 = arith.constant 0 : index
    %107 = vector.load %arg4[%c5_112, %c0_113, %c0_114] : memref<9x128x128xbf16, #tpu.memory_space<vmem>>, vector<1x128x128xbf16>
    %108 = vector.shape_cast %107 : vector<1x128x128xbf16> to vector<128x128xbf16>
    %cst_115 = arith.constant dense<0.000000e+00> : vector<64x128xf32>
    %109 = tpu.matmul %106, %108, %cst_115 {dimension_numbers = #tpu.dot_dimension_numbers<[1], [0], [0], [1], [0, 0, 1, 1], [], []>} : vector<64x128xbf16>, vector<128x128xbf16>, vector<64x128xf32> -> vector<64x128xf32>
    %110 = arith.addf %104, %109 : vector<64x128xf32>
    %c2_116 = arith.constant 2 : index
    %c0_117 = arith.constant 0 : index
    %c0_118 = arith.constant 0 : index
    %111 = vector.load %arg10[%c2_116, %c0_117, %c0_118] : memref<10x10x128xbf16, #tpu.memory_space<vmem>>, vector<8x8x128xbf16>
    %112 = vector.shape_cast %111 : vector<8x8x128xbf16> to vector<64x128xbf16>
    %c6_119 = arith.constant 6 : index
    %c0_120 = arith.constant 0 : index
    %c0_121 = arith.constant 0 : index
    %113 = vector.load %arg4[%c6_119, %c0_120, %c0_121] : memref<9x128x128xbf16, #tpu.memory_space<vmem>>, vector<1x128x128xbf16>
    %114 = vector.shape_cast %113 : vector<1x128x128xbf16> to vector<128x128xbf16>
    %cst_122 = arith.constant dense<0.000000e+00> : vector<64x128xf32>
    %115 = tpu.matmul %112, %114, %cst_122 {dimension_numbers = #tpu.dot_dimension_numbers<[1], [0], [0], [1], [0, 0, 1, 1], [], []>} : vector<64x128xbf16>, vector<128x128xbf16>, vector<64x128xf32> -> vector<64x128xf32>
    %116 = arith.addf %110, %115 : vector<64x128xf32>
    %c2_123 = arith.constant 2 : index
    %c1_124 = arith.constant 1 : index
    %c0_125 = arith.constant 0 : index
    %117 = vector.load %arg10[%c2_123, %c1_124, %c0_125] : memref<10x10x128xbf16, #tpu.memory_space<vmem>>, vector<8x8x128xbf16>
    %118 = vector.shape_cast %117 : vector<8x8x128xbf16> to vector<64x128xbf16>
    %c7_126 = arith.constant 7 : index
    %c0_127 = arith.constant 0 : index
    %c0_128 = arith.constant 0 : index
    %119 = vector.load %arg4[%c7_126, %c0_127, %c0_128] : memref<9x128x128xbf16, #tpu.memory_space<vmem>>, vector<1x128x128xbf16>
    %120 = vector.shape_cast %119 : vector<1x128x128xbf16> to vector<128x128xbf16>
    %cst_129 = arith.constant dense<0.000000e+00> : vector<64x128xf32>
    %121 = tpu.matmul %118, %120, %cst_129 {dimension_numbers = #tpu.dot_dimension_numbers<[1], [0], [0], [1], [0, 0, 1, 1], [], []>} : vector<64x128xbf16>, vector<128x128xbf16>, vector<64x128xf32> -> vector<64x128xf32>
    %122 = arith.addf %116, %121 : vector<64x128xf32>
    %c2_130 = arith.constant 2 : index
    %c2_131 = arith.constant 2 : index
    %c0_132 = arith.constant 0 : index
    %123 = vector.load %arg10[%c2_130, %c2_131, %c0_132] : memref<10x10x128xbf16, #tpu.memory_space<vmem>>, vector<8x8x128xbf16>
    %124 = vector.shape_cast %123 : vector<8x8x128xbf16> to vector<64x128xbf16>
    %c8_133 = arith.constant 8 : index
    %c0_134 = arith.constant 0 : index
    %c0_135 = arith.constant 0 : index
    %125 = vector.load %arg4[%c8_133, %c0_134, %c0_135] : memref<9x128x128xbf16, #tpu.memory_space<vmem>>, vector<1x128x128xbf16>
    %126 = vector.shape_cast %125 : vector<1x128x128xbf16> to vector<128x128xbf16>
    %cst_136 = arith.constant dense<0.000000e+00> : vector<64x128xf32>
    %127 = tpu.matmul %124, %126, %cst_136 {dimension_numbers = #tpu.dot_dimension_numbers<[1], [0], [0], [1], [0, 0, 1, 1], [], []>} : vector<64x128xbf16>, vector<128x128xbf16>, vector<64x128xf32> -> vector<64x128xf32>
    %128 = arith.addf %122, %127 : vector<64x128xf32>
    %c0_137 = arith.constant 0 : index
    %c0_138 = arith.constant 0 : index
    %129 = vector.load %arg5[%c0_137, %c0_138] : memref<1x128xf32, #tpu.memory_space<vmem>>, vector<1x128xf32>
    %130 = vector.broadcast %129 : vector<1x128xf32> to vector<64x128xf32>
    %131 = arith.addf %128, %130 : vector<64x128xf32>
    %c0_139 = arith.constant 0 : index
    %c0_140 = arith.constant 0 : index
    %c0_141 = arith.constant 0 : index
    %c0_142 = arith.constant 0 : index
    %132 = vector.load %arg6[%c0_139, %c0_140, %c0_141, %c0_142] : memref<1x8x8x128xbf16, #tpu.memory_space<vmem>>, vector<1x8x8x128xbf16>
    %133 = vector.shape_cast %132 : vector<1x8x8x128xbf16> to vector<8x8x128xbf16>
    %134 = vector.shape_cast %133 : vector<8x8x128xbf16> to vector<64x128xbf16>
    %c0_143 = arith.constant 0 : index
    %c0_144 = arith.constant 0 : index
    %135 = vector.load %arg7[%c0_143, %c0_144] : memref<128x128xbf16, #tpu.memory_space<vmem>>, vector<128x128xbf16>
    %cst_145 = arith.constant dense<0.000000e+00> : vector<64x128xf32>
    %136 = tpu.matmul %134, %135, %cst_145 {dimension_numbers = #tpu.dot_dimension_numbers<[1], [0], [0], [1], [0, 0, 1, 1], [], []>} : vector<64x128xbf16>, vector<128x128xbf16>, vector<64x128xf32> -> vector<64x128xf32>
    %c0_146 = arith.constant 0 : index
    %c0_147 = arith.constant 0 : index
    %137 = vector.load %arg8[%c0_146, %c0_147] : memref<1x128xf32, #tpu.memory_space<vmem>>, vector<1x128xf32>
    %138 = vector.broadcast %137 : vector<1x128xf32> to vector<64x128xf32>
    %139 = arith.addf %136, %138 : vector<64x128xf32>
    %140 = arith.addf %131, %139 : vector<64x128xf32>
    %cst_148 = arith.constant 0.000000e+00 : f32
    %141 = vector.broadcast %cst_148 : f32 to vector<64x128xf32>
    %142 = arith.maximumf %140, %141 : vector<64x128xf32>
    %143 = vector.shape_cast %142 : vector<64x128xf32> to vector<1x8x8x128xf32>
    %c0_149 = arith.constant 0 : index
    %c0_150 = arith.constant 0 : index
    %c0_151 = arith.constant 0 : index
    %c0_152 = arith.constant 0 : index
    %144 = vector.load %arg9[%c0_149, %c0_150, %c0_151, %c0_152] : memref<1x8x8x128xf32, #tpu.memory_space<vmem>>, vector<1x8x8x128xf32>
    tpu.vector_store %arg9[%c0_149, %c0_150, %c0_151, %c0_152], %143 {strides = array<i32>} : memref<1x8x8x128xf32, #tpu.memory_space<vmem>>, vector<1x8x8x128xf32>,
    return
  }
  func.func @transform_0(%arg0: i32) -> (i32, i32, i32, i32) {
    %c0_i32 = arith.constant 0 : i32
    %c0_i32_0 = arith.constant 0 : i32
    %c0_i32_1 = arith.constant 0 : i32
    %c0_i32_2 = arith.constant 0 : i32
    return %arg0, %c0_i32, %c0_i32_0, %c0_i32_1 : i32, i32, i32, i32
  }
  func.func @transform_1(%arg0: i32) -> (i32, i32, i32) {
    %c0_i32 = arith.constant 0 : i32
    %c0_i32_0 = arith.constant 0 : i32
    %c0_i32_1 = arith.constant 0 : i32
    %c0_i32_2 = arith.constant 0 : i32
    return %c0_i32, %c0_i32_0, %c0_i32_1 : i32, i32, i32
  }
  func.func @transform_2(%arg0: i32) -> (i32, i32) {
    %c0_i32 = arith.constant 0 : i32
    %c0_i32_0 = arith.constant 0 : i32
    %c0_i32_1 = arith.constant 0 : i32
    return %c0_i32, %c0_i32_0 : i32, i32
  }
  func.func @transform_3(%arg0: i32) -> (i32, i32, i32) {
    %c0_i32 = arith.constant 0 : i32
    %c0_i32_0 = arith.constant 0 : i32
    %c0_i32_1 = arith.constant 0 : i32
    %c0_i32_2 = arith.constant 0 : i32
    return %c0_i32, %c0_i32_0, %c0_i32_1 : i32, i32, i32
  }
  func.func @transform_4(%arg0: i32) -> (i32, i32) {
    %c0_i32 = arith.constant 0 : i32
    %c0_i32_0 = arith.constant 0 : i32
    %c0_i32_1 = arith.constant 0 : i32
    return %c0_i32, %c0_i32_0 : i32, i32
  }
  func.func @transform_5(%arg0: i32) -> (i32, i32, i32, i32) {
    %c0_i32 = arith.constant 0 : i32
    %c0_i32_0 = arith.constant 0 : i32
    %c0_i32_1 = arith.constant 0 : i32
    %c0_i32_2 = arith.constant 0 : i32
    return %arg0, %c0_i32, %c0_i32_0, %c0_i32_1 : i32, i32, i32, i32
  }
  func.func @transform_6(%arg0: i32) -> (i32, i32) {
    %c0_i32 = arith.constant 0 : i32
    %c0_i32_0 = arith.constant 0 : i32
    %c0_i32_1 = arith.constant 0 : i32
    return %c0_i32, %c0_i32_0 : i32, i32
  }
  func.func @transform_7(%arg0: i32) -> (i32, i32) {
    %c0_i32 = arith.constant 0 : i32
    %c0_i32_0 = arith.constant 0 : i32
    %c0_i32_1 = arith.constant 0 : i32
    return %c0_i32, %c0_i32_0 : i32, i32
  }
  func.func @transform_8(%arg0: i32) -> (i32, i32, i32, i32) {
    %c0_i32 = arith.constant 0 : i32
    %c0_i32_0 = arith.constant 0 : i32
    %c0_i32_1 = arith.constant 0 : i32
    %c0_i32_2 = arith.constant 0 : i32
    return %arg0, %c0_i32, %c0_i32_0, %c0_i32_1 : i32, i32, i32, i32
  }
}

</mosaic_0001>

<llo_original>
// kernel: residual_block_forward.1
$region0: #{residual_block_forward.1}
  #allocation0 [shape = 'u32[]', space=smem, size = 0x4, offset = 0x4, fixed_abs, tag = 'smem constant byte address 0x4 - core index']
  #allocation1 [shape = 'u32[144,128]{1,0:T(1,128)}', space=vmem, size = 0x12000, scoped, tag = 'internal scratch']
  #allocation2 [shape = 'bf16[10,10,128]{2,1,0:T(8,128)(2,1)}', space=vmem, size = 0xa000, scoped, tag = 'scratch operand']
  %s0 = inlined_call_operand.vmem [shape: bf16[8,9,9,128], index: 0, kind: input, shape index: {}]
  %s1 = inlined_call_operand.vmem [shape: bf16[9,128,128], index: 1, kind: input, shape index: {}]
  %s2 = inlined_call_operand.vmem [shape: f32[1,128], index: 2, kind: input, shape index: {}]
  %s3 = inlined_call_operand.vmem [shape: bf16[9,128,128], index: 3, kind: input, shape index: {}]
  %s4 = inlined_call_operand.vmem [shape: f32[1,128], index: 4, kind: input, shape index: {}]
  %s5 = inlined_call_operand.vmem [shape: bf16[2,8,8,128], index: 5, kind: input, shape index: {}]
  %s6 = inlined_call_operand.vmem [shape: bf16[128,128], index: 6, kind: input, shape index: {}]
  %s7 = inlined_call_operand.vmem [shape: f32[1,128], index: 7, kind: input, shape index: {}]
  %s8 = inlined_call_operand.vmem [shape: f32[2,8,8,128], index: 8, kind: output, shape index: {}]
  %s9 = sld [smem:[#allocation0]]
  $region65: #{residual_block_forward.1} parent=0
    _
  %s11 = ssub.s32 1, %s9
  %s12 = scalar_select 0, %s11, %s9
  loop: start=0, step=1, limit=4
  $region2: #{residual_block_forward.1} parent=0 // loop_pre_header
    _
  $region3: #{residual_block_forward.1} parent=0 // loop_header
    %s14 = sphi 0, %s18
    %p15 = scmp.ge.s32.totalorder %s14, 4
    %s24 = sphi 0, %s26
    %s27 = sphi 0, %s24
    %s28 = sphi 0, %s27
    %s44 = sphi 0, %s28
    %s48 = sphi 0, %s48
    %s50 = sphi 0, %s48
    %s51 = sphi 0, %s50
    %s65 = sphi 0, %s51
    %s69 = sphi 0, %s69
    %s71 = sphi 0, %s69
    %s72 = sphi 0, %s71
    %s86 = sphi 0, %s72
    %s90 = sphi 0, %s90
    %s92 = sphi 0, %s90
    %s93 = sphi 0, %s92
    %s107 = sphi 0, %s93
    %s111 = sphi 0, %s111
    %s113 = sphi 0, %s111
    %s114 = sphi 0, %s113
    %s128 = sphi 0, %s114
    %s134 = sphi 0, %s136
    %s137 = sphi 0, %s134
    %s138 = sphi 0, %s137
    %s154 = sphi 0, %s138
    %s158 = sphi 0, %s158
    %s160 = sphi 0, %s158
    %s161 = sphi 0, %s160
    %s175 = sphi 0, %s161
    %s179 = sphi 0, %s179
    %s181 = sphi 0, %s179
    %s182 = sphi 0, %s181
    %s196 = sphi 0, %s182
    %s202 = sphi 0, %s204
    %s205 = sphi 0, %s202
    %s206 = sphi 0, %s205
    %s222 = sphi 0, %s206
  $region4: #{residual_block_forward.1} parent=0 // loop_header_branch
    %17 = sbr.rel (%p15) target = $region8
  $region5: #{residual_block_forward.1} parent=0 // loop_body
    %s19 = ssub.s32 %s14, 1
    %s20 = ssub.s32 %s14, 2
    %s21 = sadd.s32 %s14, 1
    %s22 = ssub.s32 %s14, %s21
    %p23 = scmp.eq.s32.totalorder %s22, 0
    %s25 = sadd.s32 %s24, 1
    %s26 = scalar_select %p23, %s24, %s25
    %p29 = pneg %p23
    %p30 = scmp.eq.s32.totalorder %s14, 1
    %p31 = por %p29, %p30
    %p32 = scmp.ne.s32.totalorder %s24, %s27
    %p33 = scmp.eq.s32.totalorder %s14, 0
    %p34 = por %p32, %p33
    %p35 = scmp.ne.s32.totalorder %s24, %s27
    %p36 = scmp.eq.s32.totalorder %s19, 1
    %p37 = por %p35, %p36
    %p38 = scmp.ne.s32.totalorder %s27, %s28
    %p39 = scmp.eq.s32.totalorder %s19, 0
    %p40 = por %p38, %p39
    %p41 = scmp.ne.s32.totalorder %s27, %s28
    %p42 = scmp.eq.s32.totalorder %s20, 1
    %p43 = por %p41, %p42
    %p45 = scmp.ne.s32.totalorder %s28, %s44
    %p46 = scmp.eq.s32.totalorder %s20, 0
    %p47 = por %p45, %p46
    %s49 = sadd.s32 %s48, 1
    %p52 = scmp.eq.s32.totalorder %s14, 1
    %p53 = scmp.ne.s32.totalorder %s48, %s50
    %p54 = scmp.eq.s32.totalorder %s14, 0
    %p55 = por %p53, %p54
    %p56 = scmp.ne.s32.totalorder %s48, %s50
    %p57 = scmp.eq.s32.totalorder %s19, 1
    %p58 = por %p56, %p57
    %p59 = scmp.ne.s32.totalorder %s50, %s51
    %p60 = scmp.eq.s32.totalorder %s19, 0
    %p61 = por %p59, %p60
    %p62 = scmp.ne.s32.totalorder %s50, %s51
    %p63 = scmp.eq.s32.totalorder %s20, 1
    %p64 = por %p62, %p63
    %p66 = scmp.ne.s32.totalorder %s51, %s65
    %p67 = scmp.eq.s32.totalorder %s20, 0
    %p68 = por %p66, %p67
    %s70 = sadd.s32 %s69, 1
    %p73 = scmp.eq.s32.totalorder %s14, 1
    %p74 = scmp.ne.s32.totalorder %s69, %s71
    %p75 = scmp.eq.s32.totalorder %s14, 0
    %p76 = por %p74, %p75
    %p77 = scmp.ne.s32.totalorder %s69, %s71
    %p78 = scmp.eq.s32.totalorder %s19, 1
    %p79 = por %p77, %p78
    %p80 = scmp.ne.s32.totalorder %s71, %s72
    %p81 = scmp.eq.s32.totalorder %s19, 0
    %p82 = por %p80, %p81
    %p83 = scmp.ne.s32.totalorder %s71, %s72
    %p84 = scmp.eq.s32.totalorder %s20, 1
    %p85 = por %p83, %p84
    %p87 = scmp.ne.s32.totalorder %s72, %s86
    %p88 = scmp.eq.s32.totalorder %s20, 0
    %p89 = por %p87, %p88
    %s91 = sadd.s32 %s90, 1
    %p94 = scmp.eq.s32.totalorder %s14, 1
    %p95 = scmp.ne.s32.totalorder %s90, %s92
    %p96 = scmp.eq.s32.totalorder %s14, 0
    %p97 = por %p95, %p96
    %p98 = scmp.ne.s32.totalorder %s90, %s92
    %p99 = scmp.eq.s32.totalorder %s19, 1
    %p100 = por %p98, %p99
    %p101 = scmp.ne.s32.totalorder %s92, %s93
    %p102 = scmp.eq.s32.totalorder %s19, 0
    %p103 = por %p101, %p102
    %p104 = scmp.ne.s32.totalorder %s92, %s93
    %p105 = scmp.eq.s32.totalorder %s20, 1
    %p106 = por %p104, %p105
    %p108 = scmp.ne.s32.totalorder %s93, %s107
    %p109 = scmp.eq.s32.totalorder %s20, 0
    %p110 = por %p108, %p109
    %s112 = sadd.s32 %s111, 1
    %p115 = scmp.eq.s32.totalorder %s14, 1
    %p116 = scmp.ne.s32.totalorder %s111, %s113
    %p117 = scmp.eq.s32.totalorder %s14, 0
    %p118 = por %p116, %p117
    %p119 = scmp.ne.s32.totalorder %s111, %s113
    %p120 = scmp.eq.s32.totalorder %s19, 1
    %p121 = por %p119, %p120
    %p122 = scmp.ne.s32.totalorder %s113, %s114
    %p123 = scmp.eq.s32.totalorder %s19, 0
    %p124 = por %p122, %p123
    %p125 = scmp.ne.s32.totalorder %s113, %s114
    %p126 = scmp.eq.s32.totalorder %s20, 1
    %p127 = por %p125, %p126
    %p129 = scmp.ne.s32.totalorder %s114, %s128
    %p130 = scmp.eq.s32.totalorder %s20, 0
    %p131 = por %p129, %p130
    %s132 = ssub.s32 %s14, %s21
    %p133 = scmp.eq.s32.totalorder %s132, 0
    %s135 = sadd.s32 %s134, 1
    %s136 = scalar_select %p133, %s134, %s135
    %p139 = pneg %p133
    %p140 = scmp.eq.s32.totalorder %s14, 1
    %p141 = por %p139, %p140
    %p142 = scmp.ne.s32.totalorder %s134, %s137
    %p143 = scmp.eq.s32.totalorder %s14, 0
    %p144 = por %p142, %p143
    %p145 = scmp.ne.s32.totalorder %s134, %s137
    %p146 = scmp.eq.s32.totalorder %s19, 1
    %p147 = por %p145, %p146
    %p148 = scmp.ne.s32.totalorder %s137, %s138
    %p149 = scmp.eq.s32.totalorder %s19, 0
    %p150 = por %p148, %p149
    %p151 = scmp.ne.s32.totalorder %s137, %s138
    %p152 = scmp.eq.s32.totalorder %s20, 1
    %p153 = por %p151, %p152
    %p155 = scmp.ne.s32.totalorder %s138, %s154
    %p156 = scmp.eq.s32.totalorder %s20, 0
    %p157 = por %p155, %p156
    %s159 = sadd.s32 %s158, 1
    %p162 = scmp.eq.s32.totalorder %s14, 1
    %p163 = scmp.ne.s32.totalorder %s158, %s160
    %p164 = scmp.eq.s32.totalorder %s14, 0
    %p165 = por %p163, %p164
    %p166 = scmp.ne.s32.totalorder %s158, %s160
    %p167 = scmp.eq.s32.totalorder %s19, 1
    %p168 = por %p166, %p167
    %p169 = scmp.ne.s32.totalorder %s160, %s161
    %p170 = scmp.eq.s32.totalorder %s19, 0
    %p171 = por %p169, %p170
    %p172 = scmp.ne.s32.totalorder %s160, %s161
    %p173 = scmp.eq.s32.totalorder %s20, 1
    %p174 = por %p172, %p173
    %p176 = scmp.ne.s32.totalorder %s161, %s175
    %p177 = scmp.eq.s32.totalorder %s20, 0
    %p178 = por %p176, %p177
    %s180 = sadd.s32 %s179, 1
    %p183 = scmp.eq.s32.totalorder %s14, 1
    %p184 = scmp.ne.s32.totalorder %s179, %s181
    %p185 = scmp.eq.s32.totalorder %s14, 0
    %p186 = por %p184, %p185
    %p187 = scmp.ne.s32.totalorder %s179, %s181
    %p188 = scmp.eq.s32.totalorder %s19, 1
    %p189 = por %p187, %p188
    %p190 = scmp.ne.s32.totalorder %s181, %s182
    %p191 = scmp.eq.s32.totalorder %s19, 0
    %p192 = por %p190, %p191
    %p193 = scmp.ne.s32.totalorder %s181, %s182
    %p194 = scmp.eq.s32.totalorder %s20, 1
    %p195 = por %p193, %p194
    %p197 = scmp.ne.s32.totalorder %s182, %s196
    %p198 = scmp.eq.s32.totalorder %s20, 0
    %p199 = por %p197, %p198
    %s200 = ssub.s32 %s14, %s21
    %p201 = scmp.eq.s32.totalorder %s200, 0
    %s203 = sadd.s32 %s202, 1
    %s204 = scalar_select %p201, %s202, %s203
    %p207 = pneg %p201
    %p208 = scmp.eq.s32.totalorder %s14, 1
    %p209 = por %p207, %p208
    %p210 = scmp.ne.s32.totalorder %s202, %s205
    %p211 = scmp.eq.s32.totalorder %s14, 0
    %p212 = por %p210, %p211
    %p213 = scmp.ne.s32.totalorder %s202, %s205
    %p214 = scmp.eq.s32.totalorder %s19, 1
    %p215 = por %p213, %p214
    %p216 = scmp.ne.s32.totalorder %s205, %s206
    %p217 = scmp.eq.s32.totalorder %s19, 0
    %p218 = por %p216, %p217
    %p219 = scmp.ne.s32.totalorder %s205, %s206
    %p220 = scmp.eq.s32.totalorder %s20, 1
    %p221 = por %p219, %p220
    %p223 = scmp.ne.s32.totalorder %s206, %s222
    %p224 = scmp.eq.s32.totalorder %s20, 0
    %p225 = por %p223, %p224
    %p226 = scmp.le.s32.totalorder 1, %s14
    %p227 = scmp.lt.s32.totalorder %s14, 3
    %p228 = pnand %p226, %p227
    %p229 = pneg %p228
    // Predicated region
    $region9: #{residual_block_forward.1} parent=5 // pred_check
      _
    $region10: #{residual_block_forward.1} parent=5 // pred_check_branch
      %231 = sbr.rel (%p228) target = $region12
    $region11: #{residual_block_forward.1} parent=5 // pred_region
      %s232 = ssub.s32 %s14, 1
      // Predicated region
      $region13: #{residual_block_forward.1} parent=11 // pred_check
        %p233 = pneg %p61
      $region14: #{residual_block_forward.1} parent=11 // pred_check_branch
        %235 = sbr.rel (%p233) target = $region16
      $region15: #{residual_block_forward.1} parent=11 // pred_region
        _
      $region16: #{residual_block_forward.1} parent=11 // pred_fallthru
        _
      // Predicated region
      $region17: #{residual_block_forward.1} parent=11 // pred_check
        %p236 = pneg %p82
      $region18: #{residual_block_forward.1} parent=11 // pred_check_branch
        %238 = sbr.rel (%p236) target = $region20
      $region19: #{residual_block_forward.1} parent=11 // pred_region
        _
      $region20: #{residual_block_forward.1} parent=11 // pred_fallthru
        _
      // Predicated region
      $region21: #{residual_block_forward.1} parent=11 // pred_check
        %p239 = pneg %p103
      $region22: #{residual_block_forward.1} parent=11 // pred_check_branch
        %241 = sbr.rel (%p239) target = $region24
      $region23: #{residual_block_forward.1} parent=11 // pred_region
        _
      $region24: #{residual_block_forward.1} parent=11 // pred_fallthru
        _
      // Predicated region
      $region25: #{residual_block_forward.1} parent=11 // pred_check
        %p242 = pneg %p124
      $region26: #{residual_block_forward.1} parent=11 // pred_check_branch
        %244 = sbr.rel (%p242) target = $region28
      $region27: #{residual_block_forward.1} parent=11 // pred_region
        _
      $region28: #{residual_block_forward.1} parent=11 // pred_fallthru
        _
      // Predicated region
      $region29: #{residual_block_forward.1} parent=11 // pred_check
        %p245 = pneg %p171
      $region30: #{residual_block_forward.1} parent=11 // pred_check_branch
        %247 = sbr.rel (%p245) target = $region32
      $region31: #{residual_block_forward.1} parent=11 // pred_region
        _
      $region32: #{residual_block_forward.1} parent=11 // pred_fallthru
        _
      // Predicated region
      $region33: #{residual_block_forward.1} parent=11 // pred_check
        %p248 = pneg %p192
      $region34: #{residual_block_forward.1} parent=11 // pred_check_branch
        %250 = sbr.rel (%p248) target = $region36
      $region35: #{residual_block_forward.1} parent=11 // pred_region
        _
      $region36: #{residual_block_forward.1} parent=11 // pred_fallthru
        _
    $region12: #{residual_block_forward.1} parent=5 // pred_fallthru
      _
    %p251 = scmp.lt.s32.totalorder %s14, 2
    // Predicated region
    $region37: #{residual_block_forward.1} parent=5 // pred_check
      %p252 = pneg %p251
    $region38: #{residual_block_forward.1} parent=5 // pred_check_branch
      %254 = sbr.rel (%p252) target = $region40
    $region39: #{residual_block_forward.1} parent=5 // pred_region
      // Predicated region
      $region41: #{residual_block_forward.1} parent=39 // pred_check
        %p255 = pneg %p34
      $region42: #{residual_block_forward.1} parent=39 // pred_check_branch
        %257 = sbr.rel (%p255) target = $region44
      $region43: #{residual_block_forward.1} parent=39 // pred_region
        %s258 = smul.u32 4, %s14
        %p259 = scmp.lt.s32.totalorder %s258, 7
        %s260 = scalar_select %p259, %s258, 7
        %s261 = smul.addr %s260, 18
        %s262 = smul.addr %s261, 4
        %s263 = scalar_lea.vmem %s0, %s262
        %s264 = smul.u32 4, %s14
      $region44: #{residual_block_forward.1} parent=39 // pred_fallthru
        _
      // Predicated region
      $region45: #{residual_block_forward.1} parent=39 // pred_check
        %p265 = pneg %p144
      $region46: #{residual_block_forward.1} parent=39 // pred_check_branch
        %267 = sbr.rel (%p265) target = $region48
      $region47: #{residual_block_forward.1} parent=39 // pred_region
        %p268 = scmp.lt.s32.totalorder %s14, 1
        %s269 = scalar_select %p268, %s14, 1
        %s270 = smul.addr %s269, 8
        %s271 = smul.addr %s270, 4
        %s272 = scalar_lea.vmem %s5, %s271
      $region48: #{residual_block_forward.1} parent=39 // pred_fallthru
        _
    $region40: #{residual_block_forward.1} parent=5 // pred_fallthru
      _
    %p273 = scmp.le.s32.totalorder 1, %s14
    %p274 = scmp.lt.s32.totalorder %s14, 3
    %p275 = pnand %p273, %p274
    %p276 = pneg %p275
    // Predicated region
    $region49: #{residual_block_forward.1} parent=5 // pred_check
      _
    $region50: #{residual_block_forward.1} parent=5 // pred_check_branch
      %278 = sbr.rel (%p275) target = $region52
    $region51: #{residual_block_forward.1} parent=5 // pred_region
      %s279 = ssub.s32 %s14, 1
      %s280 = smul.u32 4, %s19
      %p281 = scmp.lt.s32.totalorder %s280, 7
      %s282 = scalar_select %p281, %s280, 7
      %s283 = smul.addr %s282, 18
      %s284 = smul.addr %s283, 4
      %s285 = scalar_lea.vmem %s0, %s284
      %p286 = pneg %p40
      %p287 = pneg %p37
      %p288 = pneg %p61
      %p289 = pneg %p58
      %p290 = pneg %p82
      %p291 = pneg %p79
      %p292 = pneg %p103
      %p293 = pneg %p100
      %p294 = pneg %p124
      %p295 = pneg %p121
      %p296 = scmp.lt.s32.totalorder %s19, 1
      %s297 = scalar_select %p296, %s19, 1
      %s298 = smul.addr %s297, 8
      %s299 = smul.addr %s298, 4
      %s300 = scalar_lea.vmem %s5, %s299
      %p301 = pneg %p150
      %p302 = pneg %p147
      %p303 = pneg %p171
      %p304 = pneg %p168
      %p305 = pneg %p192
      %p306 = pneg %p189
      %p307 = pneg %p218
      %p308 = pneg %p215
      %p309 = scmp.lt.s32.totalorder %s19, 1
      %s310 = scalar_select %p309, %s19, 1
      %s311 = smul.addr %s310, 8
      %s312 = smul.addr %s311, 8
      %s313 = scalar_lea.vmem %s8, %s312
      %s314 = smul.u32 4, %s19
      %p315 = scmp.lt.s32.totalorder %s314, 7
      %s316 = scalar_select %p315, %s314, 7
      %s317 = smul.addr %s316, 18
      %s318 = smul.addr %s317, 4
      %s319 = scalar_lea.vmem %s0, %s318
      %s320 = smul.u32 4, %s19
      %p321 = scmp.lt.s32.totalorder %s19, 1
      %s322 = scalar_select %p321, %s19, 1
      %s323 = smul.addr %s322, 8
      %s324 = smul.addr %s323, 4
      %s325 = scalar_lea.vmem %s5, %s324
      %p326 = scmp.lt.s32.totalorder %s19, 1
      %s327 = scalar_select %p326, %s19, 1
      %s328 = smul.addr %s327, 8
      %s329 = smul.addr %s328, 8
      %s330 = scalar_lea.vmem %s8, %s329
      %v332 = vld [vmem:[%s319] sm:$0xf]
      %v333 = vld [vmem:[%s319 + $0x8] sm:$0xf]
      %v334 = vld [vmem:[%s319 + $0x10] sm:$0xf]
      %v335 = vld [vmem:[%s319 + $0x18] sm:$0xf]
      %v336 = vld [vmem:[%s319 + $0x20] sm:$0xf]
      %v337 = vld [vmem:[%s319 + $0x28] sm:$0xf]
      %v338 = vld [vmem:[%s319 + $0x30] sm:$0xf]
      %v339 = vld [vmem:[%s319 + $0x38] sm:$0xf]
      %v340 = vld [vmem:[%s1] sm:$0xf]
      %v341 = vld [vmem:[%s1 + $0x4] sm:$0xf]
      %v342 = vld [vmem:[%s1 + $0x8] sm:$0xf]
      %v343 = vld [vmem:[%s1 + $0xc] sm:$0xf]
      %v344 = vld [vmem:[%s1 + $0x10] sm:$0xf]
      %v345 = vld [vmem:[%s1 + $0x14] sm:$0xf]
      %v346 = vld [vmem:[%s1 + $0x18] sm:$0xf]
      %v347 = vld [vmem:[%s1 + $0x1c] sm:$0xf]
      %v348 = vld [vmem:[%s1 + $0x20] sm:$0xf]
      %v349 = vld [vmem:[%s1 + $0x24] sm:$0xf]
      %v350 = vld [vmem:[%s1 + $0x28] sm:$0xf]
      %v351 = vld [vmem:[%s1 + $0x2c] sm:$0xf]
      %v352 = vld [vmem:[%s1 + $0x30] sm:$0xf]
      %v353 = vld [vmem:[%s1 + $0x34] sm:$0xf]
      %v354 = vld [vmem:[%s1 + $0x38] sm:$0xf]
      %v355 = vld [vmem:[%s1 + $0x3c] sm:$0xf]
      %s356 = scalar_lea.vmem %s319, 72
      %v357 = vld [vmem:[%s356] sm:$0xf]
      %v358 = vld [vmem:[%s356 + $0x8] sm:$0xf]
      %v359 = vld [vmem:[%s356 + $0x10] sm:$0xf]
      %v360 = vld [vmem:[%s356 + $0x18] sm:$0xf]
      %v361 = vld [vmem:[%s356 + $0x20] sm:$0xf]
      %v362 = vld [vmem:[%s356 + $0x28] sm:$0xf]
      %v363 = vld [vmem:[%s356 + $0x30] sm:$0xf]
      %v364 = vld [vmem:[%s356 + $0x38] sm:$0xf]
      %s365 = scalar_lea.vmem %s1, 64
      %v366 = vld [vmem:[%s365] sm:$0xf]
      %v367 = vld [vmem:[%s365 + $0x4] sm:$0xf]
      %v368 = vld [vmem:[%s365 + $0x8] sm:$0xf]
      %v369 = vld [vmem:[%s365 + $0xc] sm:$0xf]
      %v370 = vld [vmem:[%s365 + $0x10] sm:$0xf]
      %v371 = vld [vmem:[%s365 + $0x14] sm:$0xf]
      %v372 = vld [vmem:[%s365 + $0x18] sm:$0xf]
      %v373 = vld [vmem:[%s365 + $0x1c] sm:$0xf]
      %v374 = vld [vmem:[%s365 + $0x20] sm:$0xf]
      %v375 = vld [vmem:[%s365 + $0x24] sm:$0xf]
      %v376 = vld [vmem:[%s365 + $0x28] sm:$0xf]
      %v377 = vld [vmem:[%s365 + $0x2c] sm:$0xf]
      %v378 = vld [vmem:[%s365 + $0x30] sm:$0xf]
      %v379 = vld [vmem:[%s365 + $0x34] sm:$0xf]
      %v380 = vld [vmem:[%s365 + $0x38] sm:$0xf]
      %v381 = vld [vmem:[%s365 + $0x3c] sm:$0xf]
      %v390 = vunpack.c.l.b16 %v357
      %v391 = vunpack.c.l.b16 %v358
      %v392 = vunpack.c.l.b16 %v359
      %v393 = vunpack.c.l.b16 %v360
      %v394 = vunpack.c.l.b16 %v361
      %v395 = vunpack.c.l.b16 %v362
      %v396 = vunpack.c.l.b16 %v363
      %v397 = vunpack.c.l.b16 %v364
      %v398 = vpack.c.b16 %v391, %v390
      %v399 = vpack.c.b16 %v393, %v392
      %v400 = vpack.c.b16 %v395, %v394
      %v401 = vpack.c.b16 %v397, %v396
      %v422 = vunpack.c.l.b16 %v366
      %v423 = vunpack.c.l.b16 %v367
      %v424 = vunpack.c.l.b16 %v368
      %v425 = vunpack.c.l.b16 %v369
      %v426 = vunpack.c.l.b16 %v370
      %v427 = vunpack.c.l.b16 %v371
      %v428 = vunpack.c.l.b16 %v372
      %v429 = vunpack.c.l.b16 %v373
      %v430 = vunpack.c.l.b16 %v374
      %v431 = vunpack.c.l.b16 %v375
      %v432 = vunpack.c.l.b16 %v376
      %v433 = vunpack.c.l.b16 %v377
      %v434 = vunpack.c.l.b16 %v378
      %v435 = vunpack.c.l.b16 %v379
      %v436 = vunpack.c.l.b16 %v380
      %v437 = vunpack.c.l.b16 %v381
      %v438 = vpack.c.b16 %v423, %v422
      %v439 = vpack.c.b16 %v425, %v424
      %v440 = vpack.c.b16 %v427, %v426
      %v441 = vpack.c.b16 %v429, %v428
      %v442 = vpack.c.b16 %v431, %v430
      %v443 = vpack.c.b16 %v433, %v432
      %v444 = vpack.c.b16 %v435, %v434
      %v445 = vpack.c.b16 %v437, %v436
      %454 = vmatprep.subr.bf16.mxu0 0
      %455 = vmatpush1.bf16.msra.mxu0 %v445
      %456 = vmatprep.subr.bf16.mxu0 0
      %457 = vmatpush1.bf16.msra.mxu0 %v444
      %458 = vmatprep.subr.bf16.mxu0 0
      %459 = vmatpush1.bf16.msra.mxu0 %v443
      %460 = vmatprep.subr.bf16.mxu0 0
      %461 = vmatpush1.bf16.msra.mxu0 %v442
      %462 = vmatprep.subr.bf16.mxu0 0
      %463 = vmatpush1.bf16.msra.mxu0 %v441
      %464 = vmatprep.subr.bf16.mxu0 0
      %465 = vmatpush1.bf16.msra.mxu0 %v440
      %466 = vmatprep.subr.bf16.mxu0 0
      %467 = vmatpush1.bf16.msra.mxu0 %v439
      %468 = vmatprep.subr.bf16.mxu0 0
      %469 = vmatpush1.bf16.msra.mxu0 %v438
      %470 = vmatprep.subr.bf16.mxu0 0
      %471 = vmatpush2.bf16.msra.mxu0 0
      %472 = vmatprep.subr.bf16.mxu0 0
      %473 = vmatpush2.bf16.msra.mxu0 0
      %474 = vmatprep.subr.bf16.mxu0 0
      %475 = vmatpush2.bf16.msra.mxu0 0
      %476 = vmatprep.subr.bf16.mxu0 0
      %477 = vmatpush2.bf16.msra.mxu0 0
      %478 = vmatprep.subr.bf16.mxu0 0
      %479 = vmatpush2.bf16.msra.mxu0 0
      %480 = vmatprep.subr.bf16.mxu0 0
      %481 = vmatpush2.bf16.msra.mxu0 0
      %482 = vmatprep.subr.bf16.mxu0 0
      %483 = vmatpush2.bf16.msra.mxu0 0
      %484 = vmatprep.subr.bf16.mxu0 0
      %485 = vmatpush2.bf16.msra.mxu0 0
      %486 = vmatprep.mubr.bf16.mxu0 0
      %487 = vmatmul.mubr.bf16.gmra.mxu0 %v398
      %v488 = vpop.f32.mrf.mxu0
      %v489 = vadd.f32 0.0, %v488
      %v490 = vpop.f32.mrf.mxu0
      %v491 = vpop.f32.mrf.mxu0
      %v492 = vadd.f32 0.0, %v491
      %v493 = vpop.f32.mrf.mxu0
      %494 = vmatprep.mubr.bf16.mxu0 0
      %495 = vmatmul.mubr.bf16.gmra.mxu0 %v399
      %v496 = vpop.f32.mrf.mxu0
      %v497 = vadd.f32 0.0, %v496
      %v498 = vpop.f32.mrf.mxu0
      %v499 = vpop.f32.mrf.mxu0
      %v500 = vadd.f32 0.0, %v499
      %v501 = vpop.f32.mrf.mxu0
      %502 = vmatprep.mubr.bf16.mxu0 0
      %503 = vmatmul.mubr.bf16.gmra.mxu0 %v400
      %v504 = vpop.f32.mrf.mxu0
      %v505 = vadd.f32 0.0, %v504
      %v506 = vpop.f32.mrf.mxu0
      %v507 = vpop.f32.mrf.mxu0
      %v508 = vadd.f32 0.0, %v507
      %v509 = vpop.f32.mrf.mxu0
      %510 = vmatprep.mubr.bf16.mxu0 0
      %511 = vmatmul.mubr.bf16.gmra.mxu0 %v401
      %v512 = vpop.f32.mrf.mxu0
      %v513 = vadd.f32 0.0, %v512
      %v514 = vpop.f32.mrf.mxu0
      %v515 = vpop.f32.mrf.mxu0
      %v516 = vadd.f32 0.0, %v515
      %v517 = vpop.f32.mrf.mxu0
      %518 = vdwg.mxu0
      %v527 = vunpack.c.l.b16 %v332
      %v528 = vunpack.c.l.b16 %v333
      %v529 = vunpack.c.l.b16 %v334
      %v530 = vunpack.c.l.b16 %v335
      %v531 = vunpack.c.l.b16 %v336
      %v532 = vunpack.c.l.b16 %v337
      %v533 = vunpack.c.l.b16 %v338
      %v534 = vunpack.c.l.b16 %v339
      %v535 = vpack.c.b16 %v528, %v527
      %v536 = vpack.c.b16 %v530, %v529
      %v537 = vpack.c.b16 %v532, %v531
      %v538 = vpack.c.b16 %v534, %v533
      %v559 = vunpack.c.l.b16 %v340
      %v560 = vunpack.c.l.b16 %v341
      %v561 = vunpack.c.l.b16 %v342
      %v562 = vunpack.c.l.b16 %v343
      %v563 = vunpack.c.l.b16 %v344
      %v564 = vunpack.c.l.b16 %v345
      %v565 = vunpack.c.l.b16 %v346
      %v566 = vunpack.c.l.b16 %v347
      %v567 = vunpack.c.l.b16 %v348
      %v568 = vunpack.c.l.b16 %v349
      %v569 = vunpack.c.l.b16 %v350
      %v570 = vunpack.c.l.b16 %v351
      %v571 = vunpack.c.l.b16 %v352
      %v572 = vunpack.c.l.b16 %v353
      %v573 = vunpack.c.l.b16 %v354
      %v574 = vunpack.c.l.b16 %v355
      %v575 = vpack.c.b16 %v560, %v559
      %v576 = vpack.c.b16 %v562, %v561
      %v577 = vpack.c.b16 %v564, %v563
      %v578 = vpack.c.b16 %v566, %v565
      %v579 = vpack.c.b16 %v568, %v567
      %v580 = vpack.c.b16 %v570, %v569
      %v581 = vpack.c.b16 %v572, %v571
      %v582 = vpack.c.b16 %v574, %v573
      %591 = vmatprep.subr.bf16.mxu0 0
      %592 = vmatpush1.bf16.msra.mxu0 %v582
      %593 = vmatprep.subr.bf16.mxu0 0
      %594 = vmatpush1.bf16.msra.mxu0 %v581
      %595 = vmatprep.subr.bf16.mxu0 0
      %596 = vmatpush1.bf16.msra.mxu0 %v580
      %597 = vmatprep.subr.bf16.mxu0 0
      %598 = vmatpush1.bf16.msra.mxu0 %v579
      %599 = vmatprep.subr.bf16.mxu0 0
      %600 = vmatpush1.bf16.msra.mxu0 %v578
      %601 = vmatprep.subr.bf16.mxu0 0
      %602 = vmatpush1.bf16.msra.mxu0 %v577
      %603 = vmatprep.subr.bf16.mxu0 0
      %604 = vmatpush1.bf16.msra.mxu0 %v576
      %605 = vmatprep.subr.bf16.mxu0 0
      %606 = vmatpush1.bf16.msra.mxu0 %v575
      %607 = vmatprep.subr.bf16.mxu0 0
      %608 = vmatpush2.bf16.msra.mxu0 0
      %609 = vmatprep.subr.bf16.mxu0 0
      %610 = vmatpush2.bf16.msra.mxu0 0
      %611 = vmatprep.subr.bf16.mxu0 0
      %612 = vmatpush2.bf16.msra.mxu0 0
      %613 = vmatprep.subr.bf16.mxu0 0
      %614 = vmatpush2.bf16.msra.mxu0 0
      %615 = vmatprep.subr.bf16.mxu0 0
      %616 = vmatpush2.bf16.msra.mxu0 0
      %617 = vmatprep.subr.bf16.mxu0 0
      %618 = vmatpush2.bf16.msra.mxu0 0
      %619 = vmatprep.subr.bf16.mxu0 0
      %620 = vmatpush2.bf16.msra.mxu0 0
      %621 = vmatprep.subr.bf16.mxu0 0
      %622 = vmatpush2.bf16.msra.mxu0 0
      %623 = vmatprep.mubr.bf16.mxu0 0
      %624 = vmatmul.mubr.bf16.gmra.mxu0 %v535
      %v625 = vpop.f32.mrf.mxu0
      %v626 = vadd.f32 %v489, %v625
      %v627 = vpop.f32.mrf.mxu0
      %v628 = vpop.f32.mrf.mxu0
      %v629 = vadd.f32 %v492, %v628
      %v630 = vpop.f32.mrf.mxu0
      %631 = vmatprep.mubr.bf16.mxu0 0
      %632 = vmatmul.mubr.bf16.gmra.mxu0 %v536
      %v633 = vpop.f32.mrf.mxu0
      %v634 = vadd.f32 %v497, %v633
      %v635 = vpop.f32.mrf.mxu0
      %v636 = vpop.f32.mrf.mxu0
      %v637 = vadd.f32 %v500, %v636
      %v638 = vpop.f32.mrf.mxu0
      %639 = vmatprep.mubr.bf16.mxu0 0
      %640 = vmatmul.mubr.bf16.gmra.mxu0 %v537
      %v641 = vpop.f32.mrf.mxu0
      %v642 = vadd.f32 %v505, %v641
      %v643 = vpop.f32.mrf.mxu0
      %v644 = vpop.f32.mrf.mxu0
      %v645 = vadd.f32 %v508, %v644
      %v646 = vpop.f32.mrf.mxu0
      %647 = vmatprep.mubr.bf16.mxu0 0
      %648 = vmatmul.mubr.bf16.gmra.mxu0 %v538
      %v649 = vpop.f32.mrf.mxu0
      %v650 = vadd.f32 %v513, %v649
      %v651 = vpop.f32.mrf.mxu0
      %v652 = vpop.f32.mrf.mxu0
      %v653 = vadd.f32 %v516, %v652
      %v654 = vpop.f32.mrf.mxu0
      %655 = vdwg.mxu0
      %v656 = vld [vmem:[%s319] sm:$0xf]
      %v657 = vld [vmem:[%s319 + $0x4] sm:$0x1]
      %v658 = vld [vmem:[%s319 + $0x8] sm:$0xf]
      %v659 = vld [vmem:[%s319 + $0xc] sm:$0x1]
      %v660 = vld [vmem:[%s319 + $0x10] sm:$0xf]
      %v661 = vld [vmem:[%s319 + $0x14] sm:$0x1]
      %v662 = vld [vmem:[%s319 + $0x18] sm:$0xf]
      %v663 = vld [vmem:[%s319 + $0x1c] sm:$0x1]
      %v664 = vld [vmem:[%s319 + $0x20] sm:$0xf]
      %v665 = vld [vmem:[%s319 + $0x24] sm:$0x1]
      %v666 = vld [vmem:[%s319 + $0x28] sm:$0xf]
      %v667 = vld [vmem:[%s319 + $0x2c] sm:$0x1]
      %v668 = vld [vmem:[%s319 + $0x30] sm:$0xf]
      %v669 = vld [vmem:[%s319 + $0x34] sm:$0x1]
      %v670 = vld [vmem:[%s319 + $0x38] sm:$0xf]
      %v671 = vld [vmem:[%s319 + $0x3c] sm:$0x1]
      %vm672 = vsmask.f32 3328
      %vm673 = vsmask.f32 7440
      %vm674 = vmor %vm672, %vm673
      %v676 = vshrl.u32 %v656, 16
      %v678 = vrot.slane %v676, 4
      %v679 = vshll.u32 %v656, 16
      %v681 = vrot.slane %v679, 5
      %v682 = vor.u32 %v678, %v681
      %v683 = vrot.slane %v682, 4
      %v685 = vshll.u32 %v657, 16
      %v687 = vrot.slane %v685, 5
      %v688 = vsel %vm674, %v683, %v687
      %v690 = vshrl.u32 %v658, 16
      %v692 = vrot.slane %v690, 4
      %v693 = vshll.u32 %v658, 16
      %v695 = vrot.slane %v693, 5
      %v696 = vor.u32 %v692, %v695
      %v697 = vrot.slane %v696, 4
      %v699 = vshll.u32 %v659, 16
      %v701 = vrot.slane %v699, 5
      %v702 = vsel %vm674, %v697, %v701
      %v704 = vshrl.u32 %v660, 16
      %v706 = vrot.slane %v704, 4
      %v707 = vshll.u32 %v660, 16
      %v709 = vrot.slane %v707, 5
      %v710 = vor.u32 %v706, %v709
      %v711 = vrot.slane %v710, 4
      %v713 = vshll.u32 %v661, 16
      %v715 = vrot.slane %v713, 5
      %v716 = vsel %vm674, %v711, %v715
      %v718 = vshrl.u32 %v662, 16
      %v720 = vrot.slane %v718, 4
      %v721 = vshll.u32 %v662, 16
      %v723 = vrot.slane %v721, 5
      %v724 = vor.u32 %v720, %v723
      %v725 = vrot.slane %v724, 4
      %v727 = vshll.u32 %v663, 16
      %v729 = vrot.slane %v727, 5
      %v730 = vsel %vm674, %v725, %v729
      %v732 = vshrl.u32 %v664, 16
      %v734 = vrot.slane %v732, 4
      %v735 = vshll.u32 %v664, 16
      %v737 = vrot.slane %v735, 5
      %v738 = vor.u32 %v734, %v737
      %v739 = vrot.slane %v738, 4
      %v741 = vshll.u32 %v665, 16
      %v743 = vrot.slane %v741, 5
      %v744 = vsel %vm674, %v739, %v743
      %v746 = vshrl.u32 %v666, 16
      %v748 = vrot.slane %v746, 4
      %v749 = vshll.u32 %v666, 16
      %v751 = vrot.slane %v749, 5
      %v752 = vor.u32 %v748, %v751
      %v753 = vrot.slane %v752, 4
      %v755 = vshll.u32 %v667, 16
      %v757 = vrot.slane %v755, 5
      %v758 = vsel %vm674, %v753, %v757
      %v760 = vshrl.u32 %v668, 16
      %v762 = vrot.slane %v760, 4
      %v763 = vshll.u32 %v668, 16
      %v765 = vrot.slane %v763, 5
      %v766 = vor.u32 %v762, %v765
      %v767 = vrot.slane %v766, 4
      %v769 = vshll.u32 %v669, 16
      %v771 = vrot.slane %v769, 5
      %v772 = vsel %vm674, %v767, %v771
      %v774 = vshrl.u32 %v670, 16
      %v776 = vrot.slane %v774, 4
      %v777 = vshll.u32 %v670, 16
      %v779 = vrot.slane %v777, 5
      %v780 = vor.u32 %v776, %v779
      %v781 = vrot.slane %v780, 4
      %v783 = vshll.u32 %v671, 16
      %v785 = vrot.slane %v783, 5
      %v786 = vsel %vm674, %v781, %v785
      %s787 = scalar_lea.vmem %s1, 128
      %v788 = vld [vmem:[%s787] sm:$0xf]
      %v789 = vld [vmem:[%s787 + $0x4] sm:$0xf]
      %v790 = vld [vmem:[%s787 + $0x8] sm:$0xf]
      %v791 = vld [vmem:[%s787 + $0xc] sm:$0xf]
      %v792 = vld [vmem:[%s787 + $0x10] sm:$0xf]
      %v793 = vld [vmem:[%s787 + $0x14] sm:$0xf]
      %v794 = vld [vmem:[%s787 + $0x18] sm:$0xf]
      %v795 = vld [vmem:[%s787 + $0x1c] sm:$0xf]
      %v796 = vld [vmem:[%s787 + $0x20] sm:$0xf]
      %v797 = vld [vmem:[%s787 + $0x24] sm:$0xf]
      %v798 = vld [vmem:[%s787 + $0x28] sm:$0xf]
      %v799 = vld [vmem:[%s787 + $0x2c] sm:$0xf]
      %v800 = vld [vmem:[%s787 + $0x30] sm:$0xf]
      %v801 = vld [vmem:[%s787 + $0x34] sm:$0xf]
      %v802 = vld [vmem:[%s787 + $0x38] sm:$0xf]
      %v803 = vld [vmem:[%s787 + $0x3c] sm:$0xf]
      %v804 = vunpack.c.l.b16 %v688
      %v805 = vunpack.c.l.b16 %v702
      %v806 = vunpack.c.l.b16 %v716
      %v807 = vunpack.c.l.b16 %v730
      %v808 = vunpack.c.l.b16 %v744
      %v809 = vunpack.c.l.b16 %v758
      %v810 = vunpack.c.l.b16 %v772
      %v811 = vunpack.c.l.b16 %v786
      %v812 = vpack.c.b16 %v805, %v804
      %v813 = vpack.c.b16 %v807, %v806
      %v814 = vpack.c.b16 %v809, %v808
      %v815 = vpack.c.b16 %v811, %v810
      %v836 = vunpack.c.l.b16 %v788
      %v837 = vunpack.c.l.b16 %v789
      %v838 = vunpack.c.l.b16 %v790
      %v839 = vunpack.c.l.b16 %v791
      %v840 = vunpack.c.l.b16 %v792
      %v841 = vunpack.c.l.b16 %v793
      %v842 = vunpack.c.l.b16 %v794
      %v843 = vunpack.c.l.b16 %v795
      %v844 = vunpack.c.l.b16 %v796
      %v845 = vunpack.c.l.b16 %v797
      %v846 = vunpack.c.l.b16 %v798
      %v847 = vunpack.c.l.b16 %v799
      %v848 = vunpack.c.l.b16 %v800
      %v849 = vunpack.c.l.b16 %v801
      %v850 = vunpack.c.l.b16 %v802
      %v851 = vunpack.c.l.b16 %v803
      %v852 = vpack.c.b16 %v837, %v836
      %v853 = vpack.c.b16 %v839, %v838
      %v854 = vpack.c.b16 %v841, %v840
      %v855 = vpack.c.b16 %v843, %v842
      %v856 = vpack.c.b16 %v845, %v844
      %v857 = vpack.c.b16 %v847, %v846
      %v858 = vpack.c.b16 %v849, %v848
      %v859 = vpack.c.b16 %v851, %v850
      %868 = vmatprep.subr.bf16.mxu0 0
      %869 = vmatpush1.bf16.msra.mxu0 %v859
      %870 = vmatprep.subr.bf16.mxu0 0
      %871 = vmatpush1.bf16.msra.mxu0 %v858
      %872 = vmatprep.subr.bf16.mxu0 0
      %873 = vmatpush1.bf16.msra.mxu0 %v857
      %874 = vmatprep.subr.bf16.mxu0 0
      %875 = vmatpush1.bf16.msra.mxu0 %v856
      %876 = vmatprep.subr.bf16.mxu0 0
      %877 = vmatpush1.bf16.msra.mxu0 %v855
      %878 = vmatprep.subr.bf16.mxu0 0
      %879 = vmatpush1.bf16.msra.mxu0 %v854
      %880 = vmatprep.subr.bf16.mxu0 0
      %881 = vmatpush1.bf16.msra.mxu0 %v853
      %882 = vmatprep.subr.bf16.mxu0 0
      %883 = vmatpush1.bf16.msra.mxu0 %v852
      %884 = vmatprep.subr.bf16.mxu0 0
      %885 = vmatpush2.bf16.msra.mxu0 0
      %886 = vmatprep.subr.bf16.mxu0 0
      %887 = vmatpush2.bf16.msra.mxu0 0
      %888 = vmatprep.subr.bf16.mxu0 0
      %889 = vmatpush2.bf16.msra.mxu0 0
      %890 = vmatprep.subr.bf16.mxu0 0
      %891 = vmatpush2.bf16.msra.mxu0 0
      %892 = vmatprep.subr.bf16.mxu0 0
      %893 = vmatpush2.bf16.msra.mxu0 0
      %894 = vmatprep.subr.bf16.mxu0 0
      %895 = vmatpush2.bf16.msra.mxu0 0
      %896 = vmatprep.subr.bf16.mxu0 0
      %897 = vmatpush2.bf16.msra.mxu0 0
      %898 = vmatprep.subr.bf16.mxu0 0
      %899 = vmatpush2.bf16.msra.mxu0 0
      %900 = vmatprep.mubr.bf16.mxu0 0
      %901 = vmatmul.mubr.bf16.gmra.mxu0 %v812
      %v902 = vpop.f32.mrf.mxu0
      %v903 = vadd.f32 0.0, %v902
      %v904 = vpop.f32.mrf.mxu0
      %v905 = vpop.f32.mrf.mxu0
      %v906 = vadd.f32 0.0, %v905
      %v907 = vpop.f32.mrf.mxu0
      %908 = vmatprep.mubr.bf16.mxu0 0
      %909 = vmatmul.mubr.bf16.gmra.mxu0 %v813
      %v910 = vpop.f32.mrf.mxu0
      %v911 = vadd.f32 0.0, %v910
      %v912 = vpop.f32.mrf.mxu0
      %v913 = vpop.f32.mrf.mxu0
      %v914 = vadd.f32 0.0, %v913
      %v915 = vpop.f32.mrf.mxu0
      %916 = vmatprep.mubr.bf16.mxu0 0
      %917 = vmatmul.mubr.bf16.gmra.mxu0 %v814
      %v918 = vpop.f32.mrf.mxu0
      %v919 = vadd.f32 0.0, %v918
      %v920 = vpop.f32.mrf.mxu0
      %v921 = vpop.f32.mrf.mxu0
      %v922 = vadd.f32 0.0, %v921
      %v923 = vpop.f32.mrf.mxu0
      %924 = vmatprep.mubr.bf16.mxu0 0
      %925 = vmatmul.mubr.bf16.gmra.mxu0 %v815
      %v926 = vpop.f32.mrf.mxu0
      %v927 = vadd.f32 0.0, %v926
      %v928 = vpop.f32.mrf.mxu0
      %v929 = vpop.f32.mrf.mxu0
      %v930 = vadd.f32 0.0, %v929
      %v931 = vpop.f32.mrf.mxu0
      %932 = vdwg.mxu0
      %v933 = vadd.f32 %v626, %v903
      %v934 = vadd.f32 %v629, %v906
      %v935 = vadd.f32 %v634, %v911
      %v936 = vadd.f32 %v637, %v914
      %v937 = vadd.f32 %v642, %v919
      %v938 = vadd.f32 %v645, %v922
      %v939 = vadd.f32 %v650, %v927
      %v940 = vadd.f32 %v653, %v930
      %s941 = scalar_lea.vmem %s319, 144
      %v942 = vld [vmem:[%s941] sm:$0xf]
      %v943 = vld [vmem:[%s941 + $0x8] sm:$0xf]
      %v944 = vld [vmem:[%s941 + $0x10] sm:$0xf]
      %v945 = vld [vmem:[%s941 + $0x18] sm:$0xf]
      %v946 = vld [vmem:[%s941 + $0x20] sm:$0xf]
      %v947 = vld [vmem:[%s941 + $0x28] sm:$0xf]
      %v948 = vld [vmem:[%s941 + $0x30] sm:$0xf]
      %v949 = vld [vmem:[%s941 + $0x38] sm:$0xf]
      %s950 = scalar_lea.vmem %s1, 192
      %v951 = vld [vmem:[%s950] sm:$0xf]
      %v952 = vld [vmem:[%s950 + $0x4] sm:$0xf]
      %v953 = vld [vmem:[%s950 + $0x8] sm:$0xf]
      %v954 = vld [vmem:[%s950 + $0xc] sm:$0xf]
      %v955 = vld [vmem:[%s950 + $0x10] sm:$0xf]
      %v956 = vld [vmem:[%s950 + $0x14] sm:$0xf]
      %v957 = vld [vmem:[%s950 + $0x18] sm:$0xf]
      %v958 = vld [vmem:[%s950 + $0x1c] sm:$0xf]
      %v959 = vld [vmem:[%s950 + $0x20] sm:$0xf]
      %v960 = vld [vmem:[%s950 + $0x24] sm:$0xf]
      %v961 = vld [vmem:[%s950 + $0x28] sm:$0xf]
      %v962 = vld [vmem:[%s950 + $0x2c] sm:$0xf]
      %v963 = vld [vmem:[%s950 + $0x30] sm:$0xf]
      %v964 = vld [vmem:[%s950 + $0x34] sm:$0xf]
      %v965 = vld [vmem:[%s950 + $0x38] sm:$0xf]
      %v966 = vld [vmem:[%s950 + $0x3c] sm:$0xf]
      %v975 = vunpack.c.l.b16 %v942
      %v976 = vunpack.c.l.b16 %v943
      %v977 = vunpack.c.l.b16 %v944
      %v978 = vunpack.c.l.b16 %v945
      %v979 = vunpack.c.l.b16 %v946
      %v980 = vunpack.c.l.b16 %v947
      %v981 = vunpack.c.l.b16 %v948
      %v982 = vunpack.c.l.b16 %v949
      %v983 = vpack.c.b16 %v976, %v975
      %v984 = vpack.c.b16 %v978, %v977
      %v985 = vpack.c.b16 %v980, %v979
      %v986 = vpack.c.b16 %v982, %v981
      %v1007 = vunpack.c.l.b16 %v951
      %v1008 = vunpack.c.l.b16 %v952
      %v1009 = vunpack.c.l.b16 %v953
      %v1010 = vunpack.c.l.b16 %v954
      %v1011 = vunpack.c.l.b16 %v955
      %v1012 = vunpack.c.l.b16 %v956
      %v1013 = vunpack.c.l.b16 %v957
      %v1014 = vunpack.c.l.b16 %v958
      %v1015 = vunpack.c.l.b16 %v959
      %v1016 = vunpack.c.l.b16 %v960
      %v1017 = vunpack.c.l.b16 %v961
      %v1018 = vunpack.c.l.b16 %v962
      %v1019 = vunpack.c.l.b16 %v963
      %v1020 = vunpack.c.l.b16 %v964
      %v1021 = vunpack.c.l.b16 %v965
      %v1022 = vunpack.c.l.b16 %v966
      %v1023 = vpack.c.b16 %v1008, %v1007
      %v1024 = vpack.c.b16 %v1010, %v1009
      %v1025 = vpack.c.b16 %v1012, %v1011
      %v1026 = vpack.c.b16 %v1014, %v1013
      %v1027 = vpack.c.b16 %v1016, %v1015
      %v1028 = vpack.c.b16 %v1018, %v1017
      %v1029 = vpack.c.b16 %v1020, %v1019
      %v1030 = vpack.c.b16 %v1022, %v1021
      %1039 = vmatprep.subr.bf16.mxu0 0
      %1040 = vmatpush1.bf16.msra.mxu0 %v1030
      %1041 = vmatprep.subr.bf16.mxu0 0
      %1042 = vmatpush1.bf16.msra.mxu0 %v1029
      %1043 = vmatprep.subr.bf16.mxu0 0
      %1044 = vmatpush1.bf16.msra.mxu0 %v1028
      %1045 = vmatprep.subr.bf16.mxu0 0
      %1046 = vmatpush1.bf16.msra.mxu0 %v1027
      %1047 = vmatprep.subr.bf16.mxu0 0
      %1048 = vmatpush1.bf16.msra.mxu0 %v1026
      %1049 = vmatprep.subr.bf16.mxu0 0
      %1050 = vmatpush1.bf16.msra.mxu0 %v1025
      %1051 = vmatprep.subr.bf16.mxu0 0
      %1052 = vmatpush1.bf16.msra.mxu0 %v1024
      %1053 = vmatprep.subr.bf16.mxu0 0
      %1054 = vmatpush1.bf16.msra.mxu0 %v1023
      %1055 = vmatprep.subr.bf16.mxu0 0
      %1056 = vmatpush2.bf16.msra.mxu0 0
      %1057 = vmatprep.subr.bf16.mxu0 0
      %1058 = vmatpush2.bf16.msra.mxu0 0
      %1059 = vmatprep.subr.bf16.mxu0 0
      %1060 = vmatpush2.bf16.msra.mxu0 0
      %1061 = vmatprep.subr.bf16.mxu0 0
      %1062 = vmatpush2.bf16.msra.mxu0 0
      %1063 = vmatprep.subr.bf16.mxu0 0
      %1064 = vmatpush2.bf16.msra.mxu0 0
      %1065 = vmatprep.subr.bf16.mxu0 0
      %1066 = vmatpush2.bf16.msra.mxu0 0
      %1067 = vmatprep.subr.bf16.mxu0 0
      %1068 = vmatpush2.bf16.msra.mxu0 0
      %1069 = vmatprep.subr.bf16.mxu0 0
      %1070 = vmatpush2.bf16.msra.mxu0 0
      %1071 = vmatprep.mubr.bf16.mxu0 0
      %1072 = vmatmul.mubr.bf16.gmra.mxu0 %v983
      %v1073 = vpop.f32.mrf.mxu0
      %v1074 = vadd.f32 0.0, %v1073
      %v1075 = vpop.f32.mrf.mxu0
      %v1076 = vpop.f32.mrf.mxu0
      %v1077 = vadd.f32 0.0, %v1076
      %v1078 = vpop.f32.mrf.mxu0
      %1079 = vmatprep.mubr.bf16.mxu0 0
      %1080 = vmatmul.mubr.bf16.gmra.mxu0 %v984
      %v1081 = vpop.f32.mrf.mxu0
      %v1082 = vadd.f32 0.0, %v1081
      %v1083 = vpop.f32.mrf.mxu0
      %v1084 = vpop.f32.mrf.mxu0
      %v1085 = vadd.f32 0.0, %v1084
      %v1086 = vpop.f32.mrf.mxu0
      %1087 = vmatprep.mubr.bf16.mxu0 0
      %1088 = vmatmul.mubr.bf16.gmra.mxu0 %v985
      %v1089 = vpop.f32.mrf.mxu0
      %v1090 = vadd.f32 0.0, %v1089
      %v1091 = vpop.f32.mrf.mxu0
      %v1092 = vpop.f32.mrf.mxu0
      %v1093 = vadd.f32 0.0, %v1092
      %v1094 = vpop.f32.mrf.mxu0
      %1095 = vmatprep.mubr.bf16.mxu0 0
      %1096 = vmatmul.mubr.bf16.gmra.mxu0 %v986
      %v1097 = vpop.f32.mrf.mxu0
      %v1098 = vadd.f32 0.0, %v1097
      %v1099 = vpop.f32.mrf.mxu0
      %v1100 = vpop.f32.mrf.mxu0
      %v1101 = vadd.f32 0.0, %v1100
      %v1102 = vpop.f32.mrf.mxu0
      %1103 = vdwg.mxu0
      %v1104 = vadd.f32 %v933, %v1074
      %v1105 = vadd.f32 %v934, %v1077
      %v1106 = vadd.f32 %v935, %v1082
      %v1107 = vadd.f32 %v936, %v1085
      %v1108 = vadd.f32 %v937, %v1090
      %v1109 = vadd.f32 %v938, %v1093
      %v1110 = vadd.f32 %v939, %v1098
      %v1111 = vadd.f32 %v940, %v1101
      %s1112 = scalar_lea.vmem %s319, 216
      %v1113 = vld [vmem:[%s1112] sm:$0xf]
      %v1114 = vld [vmem:[%s1112 + $0x8] sm:$0xf]
      %v1115 = vld [vmem:[%s1112 + $0x10] sm:$0xf]
      %v1116 = vld [vmem:[%s1112 + $0x18] sm:$0xf]
      %v1117 = vld [vmem:[%s1112 + $0x20] sm:$0xf]
      %v1118 = vld [vmem:[%s1112 + $0x28] sm:$0xf]
      %v1119 = vld [vmem:[%s1112 + $0x30] sm:$0xf]
      %v1120 = vld [vmem:[%s1112 + $0x38] sm:$0xf]
      %s1121 = scalar_lea.vmem %s1, 256
      %v1122 = vld [vmem:[%s1121] sm:$0xf]
      %v1123 = vld [vmem:[%s1121 + $0x4] sm:$0xf]
      %v1124 = vld [vmem:[%s1121 + $0x8] sm:$0xf]
      %v1125 = vld [vmem:[%s1121 + $0xc] sm:$0xf]
      %v1126 = vld [vmem:[%s1121 + $0x10] sm:$0xf]
      %v1127 = vld [vmem:[%s1121 + $0x14] sm:$0xf]
      %v1128 = vld [vmem:[%s1121 + $0x18] sm:$0xf]
      %v1129 = vld [vmem:[%s1121 + $0x1c] sm:$0xf]
      %v1130 = vld [vmem:[%s1121 + $0x20] sm:$0xf]
      %v1131 = vld [vmem:[%s1121 + $0x24] sm:$0xf]
      %v1132 = vld [vmem:[%s1121 + $0x28] sm:$0xf]
      %v1133 = vld [vmem:[%s1121 + $0x2c] sm:$0xf]
      %v1134 = vld [vmem:[%s1121 + $0x30] sm:$0xf]
      %v1135 = vld [vmem:[%s1121 + $0x34] sm:$0xf]
      %v1136 = vld [vmem:[%s1121 + $0x38] sm:$0xf]
      %v1137 = vld [vmem:[%s1121 + $0x3c] sm:$0xf]
      %v1146 = vunpack.c.l.b16 %v1113
      %v1147 = vunpack.c.l.b16 %v1114
      %v1148 = vunpack.c.l.b16 %v1115
      %v1149 = vunpack.c.l.b16 %v1116
      %v1150 = vunpack.c.l.b16 %v1117
      %v1151 = vunpack.c.l.b16 %v1118
      %v1152 = vunpack.c.l.b16 %v1119
      %v1153 = vunpack.c.l.b16 %v1120
      %v1154 = vpack.c.b16 %v1147, %v1146
      %v1155 = vpack.c.b16 %v1149, %v1148
      %v1156 = vpack.c.b16 %v1151, %v1150
      %v1157 = vpack.c.b16 %v1153, %v1152
      %v1178 = vunpack.c.l.b16 %v1122
      %v1179 = vunpack.c.l.b16 %v1123
      %v1180 = vunpack.c.l.b16 %v1124
      %v1181 = vunpack.c.l.b16 %v1125
      %v1182 = vunpack.c.l.b16 %v1126
      %v1183 = vunpack.c.l.b16 %v1127
      %v1184 = vunpack.c.l.b16 %v1128
      %v1185 = vunpack.c.l.b16 %v1129
      %v1186 = vunpack.c.l.b16 %v1130
      %v1187 = vunpack.c.l.b16 %v1131
      %v1188 = vunpack.c.l.b16 %v1132
      %v1189 = vunpack.c.l.b16 %v1133
      %v1190 = vunpack.c.l.b16 %v1134
      %v1191 = vunpack.c.l.b16 %v1135
      %v1192 = vunpack.c.l.b16 %v1136
      %v1193 = vunpack.c.l.b16 %v1137
      %v1194 = vpack.c.b16 %v1179, %v1178
      %v1195 = vpack.c.b16 %v1181, %v1180
      %v1196 = vpack.c.b16 %v1183, %v1182
      %v1197 = vpack.c.b16 %v1185, %v1184
      %v1198 = vpack.c.b16 %v1187, %v1186
      %v1199 = vpack.c.b16 %v1189, %v1188
      %v1200 = vpack.c.b16 %v1191, %v1190
      %v1201 = vpack.c.b16 %v1193, %v1192
      %1210 = vmatprep.subr.bf16.mxu0 0
      %1211 = vmatpush1.bf16.msra.mxu0 %v1201
      %1212 = vmatprep.subr.bf16.mxu0 0
      %1213 = vmatpush1.bf16.msra.mxu0 %v1200
      %1214 = vmatprep.subr.bf16.mxu0 0
      %1215 = vmatpush1.bf16.msra.mxu0 %v1199
      %1216 = vmatprep.subr.bf16.mxu0 0
      %1217 = vmatpush1.bf16.msra.mxu0 %v1198
      %1218 = vmatprep.subr.bf16.mxu0 0
      %1219 = vmatpush1.bf16.msra.mxu0 %v1197
      %1220 = vmatprep.subr.bf16.mxu0 0
      %1221 = vmatpush1.bf16.msra.mxu0 %v1196
      %1222 = vmatprep.subr.bf16.mxu0 0
      %1223 = vmatpush1.bf16.msra.mxu0 %v1195
      %1224 = vmatprep.subr.bf16.mxu0 0
      %1225 = vmatpush1.bf16.msra.mxu0 %v1194
      %1226 = vmatprep.subr.bf16.mxu0 0
      %1227 = vmatpush2.bf16.msra.mxu0 0
      %1228 = vmatprep.subr.bf16.mxu0 0
      %1229 = vmatpush2.bf16.msra.mxu0 0
      %1230 = vmatprep.subr.bf16.mxu0 0
      %1231 = vmatpush2.bf16.msra.mxu0 0
      %1232 = vmatprep.subr.bf16.mxu0 0
      %1233 = vmatpush2.bf16.msra.mxu0 0
      %1234 = vmatprep.subr.bf16.mxu0 0
      %1235 = vmatpush2.bf16.msra.mxu0 0
      %1236 = vmatprep.subr.bf16.mxu0 0
      %1237 = vmatpush2.bf16.msra.mxu0 0
      %1238 = vmatprep.subr.bf16.mxu0 0
      %1239 = vmatpush2.bf16.msra.mxu0 0
      %1240 = vmatprep.subr.bf16.mxu0 0
      %1241 = vmatpush2.bf16.msra.mxu0 0
      %1242 = vmatprep.mubr.bf16.mxu0 0
      %1243 = vmatmul.mubr.bf16.gmra.mxu0 %v1154
      %v1244 = vpop.f32.mrf.mxu0
      %v1245 = vadd.f32 0.0, %v1244
      %v1246 = vpop.f32.mrf.mxu0
      %v1247 = vpop.f32.mrf.mxu0
      %v1248 = vadd.f32 0.0, %v1247
      %v1249 = vpop.f32.mrf.mxu0
      %1250 = vmatprep.mubr.bf16.mxu0 0
      %1251 = vmatmul.mubr.bf16.gmra.mxu0 %v1155
      %v1252 = vpop.f32.mrf.mxu0
      %v1253 = vadd.f32 0.0, %v1252
      %v1254 = vpop.f32.mrf.mxu0
      %v1255 = vpop.f32.mrf.mxu0
      %v1256 = vadd.f32 0.0, %v1255
      %v1257 = vpop.f32.mrf.mxu0
      %1258 = vmatprep.mubr.bf16.mxu0 0
      %1259 = vmatmul.mubr.bf16.gmra.mxu0 %v1156
      %v1260 = vpop.f32.mrf.mxu0
      %v1261 = vadd.f32 0.0, %v1260
      %v1262 = vpop.f32.mrf.mxu0
      %v1263 = vpop.f32.mrf.mxu0
      %v1264 = vadd.f32 0.0, %v1263
      %v1265 = vpop.f32.mrf.mxu0
      %1266 = vmatprep.mubr.bf16.mxu0 0
      %1267 = vmatmul.mubr.bf16.gmra.mxu0 %v1157
      %v1268 = vpop.f32.mrf.mxu0
      %v1269 = vadd.f32 0.0, %v1268
      %v1270 = vpop.f32.mrf.mxu0
      %v1271 = vpop.f32.mrf.mxu0
      %v1272 = vadd.f32 0.0, %v1271
      %v1273 = vpop.f32.mrf.mxu0
      %1274 = vdwg.mxu0
      %v1275 = vadd.f32 %v1104, %v1245
      %v1276 = vadd.f32 %v1105, %v1248
      %v1277 = vadd.f32 %v1106, %v1253
      %v1278 = vadd.f32 %v1107, %v1256
      %v1279 = vadd.f32 %v1108, %v1261
      %v1280 = vadd.f32 %v1109, %v1264
      %v1281 = vadd.f32 %v1110, %v1269
      %v1282 = vadd.f32 %v1111, %v1272
      %v1283 = vld [vmem:[%s941] sm:$0xf]
      %v1284 = vld [vmem:[%s941 + $0x4] sm:$0x1]
      %v1285 = vld [vmem:[%s941 + $0x8] sm:$0xf]
      %v1286 = vld [vmem:[%s941 + $0xc] sm:$0x1]
      %v1287 = vld [vmem:[%s941 + $0x10] sm:$0xf]
      %v1288 = vld [vmem:[%s941 + $0x14] sm:$0x1]
      %v1289 = vld [vmem:[%s941 + $0x18] sm:$0xf]
      %v1290 = vld [vmem:[%s941 + $0x1c] sm:$0x1]
      %v1291 = vld [vmem:[%s941 + $0x20] sm:$0xf]
      %v1292 = vld [vmem:[%s941 + $0x24] sm:$0x1]
      %v1293 = vld [vmem:[%s941 + $0x28] sm:$0xf]
      %v1294 = vld [vmem:[%s941 + $0x2c] sm:$0x1]
      %v1295 = vld [vmem:[%s941 + $0x30] sm:$0xf]
      %v1296 = vld [vmem:[%s941 + $0x34] sm:$0x1]
      %v1297 = vld [vmem:[%s941 + $0x38] sm:$0xf]
      %v1298 = vld [vmem:[%s941 + $0x3c] sm:$0x1]
      %v1300 = vshrl.u32 %v1283, 16
      %v1302 = vrot.slane %v1300, 4
      %v1303 = vshll.u32 %v1283, 16
      %v1305 = vrot.slane %v1303, 5
      %v1306 = vor.u32 %v1302, %v1305
      %v1307 = vrot.slane %v1306, 4
      %v1309 = vshll.u32 %v1284, 16
      %v1311 = vrot.slane %v1309, 5
      %v1312 = vsel %vm674, %v1307, %v1311
      %v1314 = vshrl.u32 %v1285, 16
      %v1316 = vrot.slane %v1314, 4
      %v1317 = vshll.u32 %v1285, 16
      %v1319 = vrot.slane %v1317, 5
      %v1320 = vor.u32 %v1316, %v1319
      %v1321 = vrot.slane %v1320, 4
      %v1323 = vshll.u32 %v1286, 16
      %v1325 = vrot.slane %v1323, 5
      %v1326 = vsel %vm674, %v1321, %v1325
      %v1328 = vshrl.u32 %v1287, 16
      %v1330 = vrot.slane %v1328, 4
      %v1331 = vshll.u32 %v1287, 16
      %v1333 = vrot.slane %v1331, 5
      %v1334 = vor.u32 %v1330, %v1333
      %v1335 = vrot.slane %v1334, 4
      %v1337 = vshll.u32 %v1288, 16
      %v1339 = vrot.slane %v1337, 5
      %v1340 = vsel %vm674, %v1335, %v1339
      %v1342 = vshrl.u32 %v1289, 16
      %v1344 = vrot.slane %v1342, 4
      %v1345 = vshll.u32 %v1289, 16
      %v1347 = vrot.slane %v1345, 5
      %v1348 = vor.u32 %v1344, %v1347
      %v1349 = vrot.slane %v1348, 4
      %v1351 = vshll.u32 %v1290, 16
      %v1353 = vrot.slane %v1351, 5
      %v1354 = vsel %vm674, %v1349, %v1353
      %v1356 = vshrl.u32 %v1291, 16
      %v1358 = vrot.slane %v1356, 4
      %v1359 = vshll.u32 %v1291, 16
      %v1361 = vrot.slane %v1359, 5
      %v1362 = vor.u32 %v1358, %v1361
      %v1363 = vrot.slane %v1362, 4
      %v1365 = vshll.u32 %v1292, 16
      %v1367 = vrot.slane %v1365, 5
      %v1368 = vsel %vm674, %v1363, %v1367
      %v1370 = vshrl.u32 %v1293, 16
      %v1372 = vrot.slane %v1370, 4
      %v1373 = vshll.u32 %v1293, 16
      %v1375 = vrot.slane %v1373, 5
      %v1376 = vor.u32 %v1372, %v1375
      %v1377 = vrot.slane %v1376, 4
      %v1379 = vshll.u32 %v1294, 16
      %v1381 = vrot.slane %v1379, 5
      %v1382 = vsel %vm674, %v1377, %v1381
      %v1384 = vshrl.u32 %v1295, 16
      %v1386 = vrot.slane %v1384, 4
      %v1387 = vshll.u32 %v1295, 16
      %v1389 = vrot.slane %v1387, 5
      %v1390 = vor.u32 %v1386, %v1389
      %v1391 = vrot.slane %v1390, 4
      %v1393 = vshll.u32 %v1296, 16
      %v1395 = vrot.slane %v1393, 5
      %v1396 = vsel %vm674, %v1391, %v1395
      %v1398 = vshrl.u32 %v1297, 16
      %v1400 = vrot.slane %v1398, 4
      %v1401 = vshll.u32 %v1297, 16
      %v1403 = vrot.slane %v1401, 5
      %v1404 = vor.u32 %v1400, %v1403
      %v1405 = vrot.slane %v1404, 4
      %v1407 = vshll.u32 %v1298, 16
      %v1409 = vrot.slane %v1407, 5
      %v1410 = vsel %vm674, %v1405, %v1409
      %s1411 = scalar_lea.vmem %s1, 320
      %v1412 = vld [vmem:[%s1411] sm:$0xf]
      %v1413 = vld [vmem:[%s1411 + $0x4] sm:$0xf]
      %v1414 = vld [vmem:[%s1411 + $0x8] sm:$0xf]
      %v1415 = vld [vmem:[%s1411 + $0xc] sm:$0xf]
      %v1416 = vld [vmem:[%s1411 + $0x10] sm:$0xf]
      %v1417 = vld [vmem:[%s1411 + $0x14] sm:$0xf]
      %v1418 = vld [vmem:[%s1411 + $0x18] sm:$0xf]
      %v1419 = vld [vmem:[%s1411 + $0x1c] sm:$0xf]
      %v1420 = vld [vmem:[%s1411 + $0x20] sm:$0xf]
      %v1421 = vld [vmem:[%s1411 + $0x24] sm:$0xf]
      %v1422 = vld [vmem:[%s1411 + $0x28] sm:$0xf]
      %v1423 = vld [vmem:[%s1411 + $0x2c] sm:$0xf]
      %v1424 = vld [vmem:[%s1411 + $0x30] sm:$0xf]
      %v1425 = vld [vmem:[%s1411 + $0x34] sm:$0xf]
      %v1426 = vld [vmem:[%s1411 + $0x38] sm:$0xf]
      %v1427 = vld [vmem:[%s1411 + $0x3c] sm:$0xf]
      %v1428 = vunpack.c.l.b16 %v1312
      %v1429 = vunpack.c.l.b16 %v1326
      %v1430 = vunpack.c.l.b16 %v1340
      %v1431 = vunpack.c.l.b16 %v1354
      %v1432 = vunpack.c.l.b16 %v1368
      %v1433 = vunpack.c.l.b16 %v1382
      %v1434 = vunpack.c.l.b16 %v1396
      %v1435 = vunpack.c.l.b16 %v1410
      %v1436 = vpack.c.b16 %v1429, %v1428
      %v1437 = vpack.c.b16 %v1431, %v1430
      %v1438 = vpack.c.b16 %v1433, %v1432
      %v1439 = vpack.c.b16 %v1435, %v1434
      %v1460 = vunpack.c.l.b16 %v1412
      %v1461 = vunpack.c.l.b16 %v1413
      %v1462 = vunpack.c.l.b16 %v1414
      %v1463 = vunpack.c.l.b16 %v1415
      %v1464 = vunpack.c.l.b16 %v1416
      %v1465 = vunpack.c.l.b16 %v1417
      %v1466 = vunpack.c.l.b16 %v1418
      %v1467 = vunpack.c.l.b16 %v1419
      %v1468 = vunpack.c.l.b16 %v1420
      %v1469 = vunpack.c.l.b16 %v1421
      %v1470 = vunpack.c.l.b16 %v1422
      %v1471 = vunpack.c.l.b16 %v1423
      %v1472 = vunpack.c.l.b16 %v1424
      %v1473 = vunpack.c.l.b16 %v1425
      %v1474 = vunpack.c.l.b16 %v1426
      %v1475 = vunpack.c.l.b16 %v1427
      %v1476 = vpack.c.b16 %v1461, %v1460
      %v1477 = vpack.c.b16 %v1463, %v1462
      %v1478 = vpack.c.b16 %v1465, %v1464
      %v1479 = vpack.c.b16 %v1467, %v1466
      %v1480 = vpack.c.b16 %v1469, %v1468
      %v1481 = vpack.c.b16 %v1471, %v1470
      %v1482 = vpack.c.b16 %v1473, %v1472
      %v1483 = vpack.c.b16 %v1475, %v1474
      %1492 = vmatprep.subr.bf16.mxu0 0
      %1493 = vmatpush1.bf16.msra.mxu0 %v1483
      %1494 = vmatprep.subr.bf16.mxu0 0
      %1495 = vmatpush1.bf16.msra.mxu0 %v1482
      %1496 = vmatprep.subr.bf16.mxu0 0
      %1497 = vmatpush1.bf16.msra.mxu0 %v1481
      %1498 = vmatprep.subr.bf16.mxu0 0
      %1499 = vmatpush1.bf16.msra.mxu0 %v1480
      %1500 = vmatprep.subr.bf16.mxu0 0
      %1501 = vmatpush1.bf16.msra.mxu0 %v1479
      %1502 = vmatprep.subr.bf16.mxu0 0
      %1503 = vmatpush1.bf16.msra.mxu0 %v1478
      %1504 = vmatprep.subr.bf16.mxu0 0
      %1505 = vmatpush1.bf16.msra.mxu0 %v1477
      %1506 = vmatprep.subr.bf16.mxu0 0
      %1507 = vmatpush1.bf16.msra.mxu0 %v1476
      %1508 = vmatprep.subr.bf16.mxu0 0
      %1509 = vmatpush2.bf16.msra.mxu0 0
      %1510 = vmatprep.subr.bf16.mxu0 0
      %1511 = vmatpush2.bf16.msra.mxu0 0
      %1512 = vmatprep.subr.bf16.mxu0 0
      %1513 = vmatpush2.bf16.msra.mxu0 0
      %1514 = vmatprep.subr.bf16.mxu0 0
      %1515 = vmatpush2.bf16.msra.mxu0 0
      %1516 = vmatprep.subr.bf16.mxu0 0
      %1517 = vmatpush2.bf16.msra.mxu0 0
      %1518 = vmatprep.subr.bf16.mxu0 0
      %1519 = vmatpush2.bf16.msra.mxu0 0
      %1520 = vmatprep.subr.bf16.mxu0 0
      %1521 = vmatpush2.bf16.msra.mxu0 0
      %1522 = vmatprep.subr.bf16.mxu0 0
      %1523 = vmatpush2.bf16.msra.mxu0 0
      %1524 = vmatprep.mubr.bf16.mxu0 0
      %1525 = vmatmul.mubr.bf16.gmra.mxu0 %v1436
      %v1526 = vpop.f32.mrf.mxu0
      %v1527 = vadd.f32 0.0, %v1526
      %v1528 = vpop.f32.mrf.mxu0
      %v1529 = vpop.f32.mrf.mxu0
      %v1530 = vadd.f32 0.0, %v1529
      %v1531 = vpop.f32.mrf.mxu0
      %1532 = vmatprep.mubr.bf16.mxu0 0
      %1533 = vmatmul.mubr.bf16.gmra.mxu0 %v1437
      %v1534 = vpop.f32.mrf.mxu0
      %v1535 = vadd.f32 0.0, %v1534
      %v1536 = vpop.f32.mrf.mxu0
      %v1537 = vpop.f32.mrf.mxu0
      %v1538 = vadd.f32 0.0, %v1537
      %v1539 = vpop.f32.mrf.mxu0
      %1540 = vmatprep.mubr.bf16.mxu0 0
      %1541 = vmatmul.mubr.bf16.gmra.mxu0 %v1438
      %v1542 = vpop.f32.mrf.mxu0
      %v1543 = vadd.f32 0.0, %v1542
      %v1544 = vpop.f32.mrf.mxu0
      %v1545 = vpop.f32.mrf.mxu0
      %v1546 = vadd.f32 0.0, %v1545
      %v1547 = vpop.f32.mrf.mxu0
      %1548 = vmatprep.mubr.bf16.mxu0 0
      %1549 = vmatmul.mubr.bf16.gmra.mxu0 %v1439
      %v1550 = vpop.f32.mrf.mxu0
      %v1551 = vadd.f32 0.0, %v1550
      %v1552 = vpop.f32.mrf.mxu0
      %v1553 = vpop.f32.mrf.mxu0
      %v1554 = vadd.f32 0.0, %v1553
      %v1555 = vpop.f32.mrf.mxu0
      %1556 = vdwg.mxu0
      %v1557 = vadd.f32 %v1275, %v1527
      %v1558 = vadd.f32 %v1276, %v1530
      %v1559 = vadd.f32 %v1277, %v1535
      %v1560 = vadd.f32 %v1278, %v1538
      %v1561 = vadd.f32 %v1279, %v1543
      %v1562 = vadd.f32 %v1280, %v1546
      %v1563 = vadd.f32 %v1281, %v1551
      %v1564 = vadd.f32 %v1282, %v1554
      %s1565 = scalar_lea.vmem %s319, 8
      %v1566 = vld [vmem:[%s1565] sm:$0xf]
      %v1567 = vld [vmem:[%s1565 + $0x8] sm:$0xf]
      %v1568 = vld [vmem:[%s1565 + $0x10] sm:$0xf]
      %v1569 = vld [vmem:[%s1565 + $0x18] sm:$0xf]
      %v1570 = vld [vmem:[%s1565 + $0x20] sm:$0xf]
      %v1571 = vld [vmem:[%s1565 + $0x28] sm:$0xf]
      %v1572 = vld [vmem:[%s1565 + $0x30] sm:$0xf]
      %v1573 = vld [vmem:[%s1565 + $0x38] sm:$0xf]
      %s1574 = scalar_lea.vmem %s1, 384
      %v1575 = vld [vmem:[%s1574] sm:$0xf]
      %v1576 = vld [vmem:[%s1574 + $0x4] sm:$0xf]
      %v1577 = vld [vmem:[%s1574 + $0x8] sm:$0xf]
      %v1578 = vld [vmem:[%s1574 + $0xc] sm:$0xf]
      %v1579 = vld [vmem:[%s1574 + $0x10] sm:$0xf]
      %v1580 = vld [vmem:[%s1574 + $0x14] sm:$0xf]
      %v1581 = vld [vmem:[%s1574 + $0x18] sm:$0xf]
      %v1582 = vld [vmem:[%s1574 + $0x1c] sm:$0xf]
      %v1583 = vld [vmem:[%s1574 + $0x20] sm:$0xf]
      %v1584 = vld [vmem:[%s1574 + $0x24] sm:$0xf]
      %v1585 = vld [vmem:[%s1574 + $0x28] sm:$0xf]
      %v1586 = vld [vmem:[%s1574 + $0x2c] sm:$0xf]
      %v1587 = vld [vmem:[%s1574 + $0x30] sm:$0xf]
      %v1588 = vld [vmem:[%s1574 + $0x34] sm:$0xf]
      %v1589 = vld [vmem:[%s1574 + $0x38] sm:$0xf]
      %v1590 = vld [vmem:[%s1574 + $0x3c] sm:$0xf]
      %v1599 = vunpack.c.l.b16 %v1566
      %v1600 = vunpack.c.l.b16 %v1567
      %v1601 = vunpack.c.l.b16 %v1568
      %v1602 = vunpack.c.l.b16 %v1569
      %v1603 = vunpack.c.l.b16 %v1570
      %v1604 = vunpack.c.l.b16 %v1571
      %v1605 = vunpack.c.l.b16 %v1572
      %v1606 = vunpack.c.l.b16 %v1573
      %v1607 = vpack.c.b16 %v1600, %v1599
      %v1608 = vpack.c.b16 %v1602, %v1601
      %v1609 = vpack.c.b16 %v1604, %v1603
      %v1610 = vpack.c.b16 %v1606, %v1605
      %v1631 = vunpack.c.l.b16 %v1575
      %v1632 = vunpack.c.l.b16 %v1576
      %v1633 = vunpack.c.l.b16 %v1577
      %v1634 = vunpack.c.l.b16 %v1578
      %v1635 = vunpack.c.l.b16 %v1579
      %v1636 = vunpack.c.l.b16 %v1580
      %v1637 = vunpack.c.l.b16 %v1581
      %v1638 = vunpack.c.l.b16 %v1582
      %v1639 = vunpack.c.l.b16 %v1583
      %v1640 = vunpack.c.l.b16 %v1584
      %v1641 = vunpack.c.l.b16 %v1585
      %v1642 = vunpack.c.l.b16 %v1586
      %v1643 = vunpack.c.l.b16 %v1587
      %v1644 = vunpack.c.l.b16 %v1588
      %v1645 = vunpack.c.l.b16 %v1589
      %v1646 = vunpack.c.l.b16 %v1590
      %v1647 = vpack.c.b16 %v1632, %v1631
      %v1648 = vpack.c.b16 %v1634, %v1633
      %v1649 = vpack.c.b16 %v1636, %v1635
      %v1650 = vpack.c.b16 %v1638, %v1637
      %v1651 = vpack.c.b16 %v1640, %v1639
      %v1652 = vpack.c.b16 %v1642, %v1641
      %v1653 = vpack.c.b16 %v1644, %v1643
      %v1654 = vpack.c.b16 %v1646, %v1645
      %1663 = vmatprep.subr.bf16.mxu0 0
      %1664 = vmatpush1.bf16.msra.mxu0 %v1654
      %1665 = vmatprep.subr.bf16.mxu0 0
      %1666 = vmatpush1.bf16.msra.mxu0 %v1653
      %1667 = vmatprep.subr.bf16.mxu0 0
      %1668 = vmatpush1.bf16.msra.mxu0 %v1652
      %1669 = vmatprep.subr.bf16.mxu0 0
      %1670 = vmatpush1.bf16.msra.mxu0 %v1651
      %1671 = vmatprep.subr.bf16.mxu0 0
      %1672 = vmatpush1.bf16.msra.mxu0 %v1650
      %1673 = vmatprep.subr.bf16.mxu0 0
      %1674 = vmatpush1.bf16.msra.mxu0 %v1649
      %1675 = vmatprep.subr.bf16.mxu0 0
      %1676 = vmatpush1.bf16.msra.mxu0 %v1648
      %1677 = vmatprep.subr.bf16.mxu0 0
      %1678 = vmatpush1.bf16.msra.mxu0 %v1647
      %1679 = vmatprep.subr.bf16.mxu0 0
      %1680 = vmatpush2.bf16.msra.mxu0 0
      %1681 = vmatprep.subr.bf16.mxu0 0
      %1682 = vmatpush2.bf16.msra.mxu0 0
      %1683 = vmatprep.subr.bf16.mxu0 0
      %1684 = vmatpush2.bf16.msra.mxu0 0
      %1685 = vmatprep.subr.bf16.mxu0 0
      %1686 = vmatpush2.bf16.msra.mxu0 0
      %1687 = vmatprep.subr.bf16.mxu0 0
      %1688 = vmatpush2.bf16.msra.mxu0 0
      %1689 = vmatprep.subr.bf16.mxu0 0
      %1690 = vmatpush2.bf16.msra.mxu0 0
      %1691 = vmatprep.subr.bf16.mxu0 0
      %1692 = vmatpush2.bf16.msra.mxu0 0
      %1693 = vmatprep.subr.bf16.mxu0 0
      %1694 = vmatpush2.bf16.msra.mxu0 0
      %1695 = vmatprep.mubr.bf16.mxu0 0
      %1696 = vmatmul.mubr.bf16.gmra.mxu0 %v1607
      %v1697 = vpop.f32.mrf.mxu0
      %v1698 = vadd.f32 0.0, %v1697
      %v1699 = vpop.f32.mrf.mxu0
      %v1700 = vpop.f32.mrf.mxu0
      %v1701 = vadd.f32 0.0, %v1700
      %v1702 = vpop.f32.mrf.mxu0
      %1703 = vmatprep.mubr.bf16.mxu0 0
      %1704 = vmatmul.mubr.bf16.gmra.mxu0 %v1608
      %v1705 = vpop.f32.mrf.mxu0
      %v1706 = vadd.f32 0.0, %v1705
      %v1707 = vpop.f32.mrf.mxu0
      %v1708 = vpop.f32.mrf.mxu0
      %v1709 = vadd.f32 0.0, %v1708
      %v1710 = vpop.f32.mrf.mxu0
      %1711 = vmatprep.mubr.bf16.mxu0 0
      %1712 = vmatmul.mubr.bf16.gmra.mxu0 %v1609
      %v1713 = vpop.f32.mrf.mxu0
      %v1714 = vadd.f32 0.0, %v1713
      %v1715 = vpop.f32.mrf.mxu0
      %v1716 = vpop.f32.mrf.mxu0
      %v1717 = vadd.f32 0.0, %v1716
      %v1718 = vpop.f32.mrf.mxu0
      %1719 = vmatprep.mubr.bf16.mxu0 0
      %1720 = vmatmul.mubr.bf16.gmra.mxu0 %v1610
      %v1721 = vpop.f32.mrf.mxu0
      %v1722 = vadd.f32 0.0, %v1721
      %v1723 = vpop.f32.mrf.mxu0
      %v1724 = vpop.f32.mrf.mxu0
      %v1725 = vadd.f32 0.0, %v1724
      %v1726 = vpop.f32.mrf.mxu0
      %1727 = vdwg.mxu0
      %v1728 = vadd.f32 %v1557, %v1698
      %v1729 = vadd.f32 %v1558, %v1701
      %v1730 = vadd.f32 %v1559, %v1706
      %v1731 = vadd.f32 %v1560, %v1709
      %v1732 = vadd.f32 %v1561, %v1714
      %v1733 = vadd.f32 %v1562, %v1717
      %v1734 = vadd.f32 %v1563, %v1722
      %v1735 = vadd.f32 %v1564, %v1725
      %s1736 = scalar_lea.vmem %s319, 80
      %v1737 = vld [vmem:[%s1736] sm:$0xf]
      %v1738 = vld [vmem:[%s1736 + $0x8] sm:$0xf]
      %v1739 = vld [vmem:[%s1736 + $0x10] sm:$0xf]
      %v1740 = vld [vmem:[%s1736 + $0x18] sm:$0xf]
      %v1741 = vld [vmem:[%s1736 + $0x20] sm:$0xf]
      %v1742 = vld [vmem:[%s1736 + $0x28] sm:$0xf]
      %v1743 = vld [vmem:[%s1736 + $0x30] sm:$0xf]
      %v1744 = vld [vmem:[%s1736 + $0x38] sm:$0xf]
      %s1745 = scalar_lea.vmem %s1, 448
      %v1746 = vld [vmem:[%s1745] sm:$0xf]
      %v1747 = vld [vmem:[%s1745 + $0x4] sm:$0xf]
      %v1748 = vld [vmem:[%s1745 + $0x8] sm:$0xf]
      %v1749 = vld [vmem:[%s1745 + $0xc] sm:$0xf]
      %v1750 = vld [vmem:[%s1745 + $0x10] sm:$0xf]
      %v1751 = vld [vmem:[%s1745 + $0x14] sm:$0xf]
      %v1752 = vld [vmem:[%s1745 + $0x18] sm:$0xf]
      %v1753 = vld [vmem:[%s1745 + $0x1c] sm:$0xf]
      %v1754 = vld [vmem:[%s1745 + $0x20] sm:$0xf]
      %v1755 = vld [vmem:[%s1745 + $0x24] sm:$0xf]
      %v1756 = vld [vmem:[%s1745 + $0x28] sm:$0xf]
      %v1757 = vld [vmem:[%s1745 + $0x2c] sm:$0xf]
      %v1758 = vld [vmem:[%s1745 + $0x30] sm:$0xf]
      %v1759 = vld [vmem:[%s1745 + $0x34] sm:$0xf]
      %v1760 = vld [vmem:[%s1745 + $0x38] sm:$0xf]
      %v1761 = vld [vmem:[%s1745 + $0x3c] sm:$0xf]
      %v1770 = vunpack.c.l.b16 %v1737
      %v1771 = vunpack.c.l.b16 %v1738
      %v1772 = vunpack.c.l.b16 %v1739
      %v1773 = vunpack.c.l.b16 %v1740
      %v1774 = vunpack.c.l.b16 %v1741
      %v1775 = vunpack.c.l.b16 %v1742
      %v1776 = vunpack.c.l.b16 %v1743
      %v1777 = vunpack.c.l.b16 %v1744
      %v1778 = vpack.c.b16 %v1771, %v1770
      %v1779 = vpack.c.b16 %v1773, %v1772
      %v1780 = vpack.c.b16 %v1775, %v1774
      %v1781 = vpack.c.b16 %v1777, %v1776
      %v1802 = vunpack.c.l.b16 %v1746
      %v1803 = vunpack.c.l.b16 %v1747
      %v1804 = vunpack.c.l.b16 %v1748
      %v1805 = vunpack.c.l.b16 %v1749
      %v1806 = vunpack.c.l.b16 %v1750
      %v1807 = vunpack.c.l.b16 %v1751
      %v1808 = vunpack.c.l.b16 %v1752
      %v1809 = vunpack.c.l.b16 %v1753
      %v1810 = vunpack.c.l.b16 %v1754
      %v1811 = vunpack.c.l.b16 %v1755
      %v1812 = vunpack.c.l.b16 %v1756
      %v1813 = vunpack.c.l.b16 %v1757
      %v1814 = vunpack.c.l.b16 %v1758
      %v1815 = vunpack.c.l.b16 %v1759
      %v1816 = vunpack.c.l.b16 %v1760
      %v1817 = vunpack.c.l.b16 %v1761
      %v1818 = vpack.c.b16 %v1803, %v1802
      %v1819 = vpack.c.b16 %v1805, %v1804
      %v1820 = vpack.c.b16 %v1807, %v1806
      %v1821 = vpack.c.b16 %v1809, %v1808
      %v1822 = vpack.c.b16 %v1811, %v1810
      %v1823 = vpack.c.b16 %v1813, %v1812
      %v1824 = vpack.c.b16 %v1815, %v1814
      %v1825 = vpack.c.b16 %v1817, %v1816
      %1834 = vmatprep.subr.bf16.mxu0 0
      %1835 = vmatpush1.bf16.msra.mxu0 %v1825
      %1836 = vmatprep.subr.bf16.mxu0 0
      %1837 = vmatpush1.bf16.msra.mxu0 %v1824
      %1838 = vmatprep.subr.bf16.mxu0 0
      %1839 = vmatpush1.bf16.msra.mxu0 %v1823
      %1840 = vmatprep.subr.bf16.mxu0 0
      %1841 = vmatpush1.bf16.msra.mxu0 %v1822
      %1842 = vmatprep.subr.bf16.mxu0 0
      %1843 = vmatpush1.bf16.msra.mxu0 %v1821
      %1844 = vmatprep.subr.bf16.mxu0 0
      %1845 = vmatpush1.bf16.msra.mxu0 %v1820
      %1846 = vmatprep.subr.bf16.mxu0 0
      %1847 = vmatpush1.bf16.msra.mxu0 %v1819
      %1848 = vmatprep.subr.bf16.mxu0 0
      %1849 = vmatpush1.bf16.msra.mxu0 %v1818
      %1850 = vmatprep.subr.bf16.mxu0 0
      %1851 = vmatpush2.bf16.msra.mxu0 0
      %1852 = vmatprep.subr.bf16.mxu0 0
      %1853 = vmatpush2.bf16.msra.mxu0 0
      %1854 = vmatprep.subr.bf16.mxu0 0
      %1855 = vmatpush2.bf16.msra.mxu0 0
      %1856 = vmatprep.subr.bf16.mxu0 0
      %1857 = vmatpush2.bf16.msra.mxu0 0
      %1858 = vmatprep.subr.bf16.mxu0 0
      %1859 = vmatpush2.bf16.msra.mxu0 0
      %1860 = vmatprep.subr.bf16.mxu0 0
      %1861 = vmatpush2.bf16.msra.mxu0 0
      %1862 = vmatprep.subr.bf16.mxu0 0
      %1863 = vmatpush2.bf16.msra.mxu0 0
      %1864 = vmatprep.subr.bf16.mxu0 0
      %1865 = vmatpush2.bf16.msra.mxu0 0
      %1866 = vmatprep.mubr.bf16.mxu0 0
      %1867 = vmatmul.mubr.bf16.gmra.mxu0 %v1778
      %v1868 = vpop.f32.mrf.mxu0
      %v1869 = vadd.f32 0.0, %v1868
      %v1870 = vpop.f32.mrf.mxu0
      %v1871 = vpop.f32.mrf.mxu0
      %v1872 = vadd.f32 0.0, %v1871
      %v1873 = vpop.f32.mrf.mxu0
      %1874 = vmatprep.mubr.bf16.mxu0 0
      %1875 = vmatmul.mubr.bf16.gmra.mxu0 %v1779
      %v1876 = vpop.f32.mrf.mxu0
      %v1877 = vadd.f32 0.0, %v1876
      %v1878 = vpop.f32.mrf.mxu0
      %v1879 = vpop.f32.mrf.mxu0
      %v1880 = vadd.f32 0.0, %v1879
      %v1881 = vpop.f32.mrf.mxu0
      %1882 = vmatprep.mubr.bf16.mxu0 0
      %1883 = vmatmul.mubr.bf16.gmra.mxu0 %v1780
      %v1884 = vpop.f32.mrf.mxu0
      %v1885 = vadd.f32 0.0, %v1884
      %v1886 = vpop.f32.mrf.mxu0
      %v1887 = vpop.f32.mrf.mxu0
      %v1888 = vadd.f32 0.0, %v1887
      %v1889 = vpop.f32.mrf.mxu0
      %1890 = vmatprep.mubr.bf16.mxu0 0
      %1891 = vmatmul.mubr.bf16.gmra.mxu0 %v1781
      %v1892 = vpop.f32.mrf.mxu0
      %v1893 = vadd.f32 0.0, %v1892
      %v1894 = vpop.f32.mrf.mxu0
      %v1895 = vpop.f32.mrf.mxu0
      %v1896 = vadd.f32 0.0, %v1895
      %v1897 = vpop.f32.mrf.mxu0
      %1898 = vdwg.mxu0
      %v1899 = vadd.f32 %v1728, %v1869
      %v1900 = vadd.f32 %v1729, %v1872
      %v1901 = vadd.f32 %v1730, %v1877
      %v1902 = vadd.f32 %v1731, %v1880
      %v1903 = vadd.f32 %v1732, %v1885
      %v1904 = vadd.f32 %v1733, %v1888
      %v1905 = vadd.f32 %v1734, %v1893
      %v1906 = vadd.f32 %v1735, %v1896
      %v1907 = vld [vmem:[%s1565] sm:$0xf]
      %v1908 = vld [vmem:[%s1565 + $0x4] sm:$0x1]
      %v1909 = vld [vmem:[%s1565 + $0x8] sm:$0xf]
      %v1910 = vld [vmem:[%s1565 + $0xc] sm:$0x1]
      %v1911 = vld [vmem:[%s1565 + $0x10] sm:$0xf]
      %v1912 = vld [vmem:[%s1565 + $0x14] sm:$0x1]
      %v1913 = vld [vmem:[%s1565 + $0x18] sm:$0xf]
      %v1914 = vld [vmem:[%s1565 + $0x1c] sm:$0x1]
      %v1915 = vld [vmem:[%s1565 + $0x20] sm:$0xf]
      %v1916 = vld [vmem:[%s1565 + $0x24] sm:$0x1]
      %v1917 = vld [vmem:[%s1565 + $0x28] sm:$0xf]
      %v1918 = vld [vmem:[%s1565 + $0x2c] sm:$0x1]
      %v1919 = vld [vmem:[%s1565 + $0x30] sm:$0xf]
      %v1920 = vld [vmem:[%s1565 + $0x34] sm:$0x1]
      %v1921 = vld [vmem:[%s1565 + $0x38] sm:$0xf]
      %v1922 = vld [vmem:[%s1565 + $0x3c] sm:$0x1]
      %v1924 = vshrl.u32 %v1907, 16
      %v1926 = vrot.slane %v1924, 4
      %v1927 = vshll.u32 %v1907, 16
      %v1929 = vrot.slane %v1927, 5
      %v1930 = vor.u32 %v1926, %v1929
      %v1931 = vrot.slane %v1930, 4
      %v1933 = vshll.u32 %v1908, 16
      %v1935 = vrot.slane %v1933, 5
      %v1936 = vsel %vm674, %v1931, %v1935
      %v1938 = vshrl.u32 %v1909, 16
      %v1940 = vrot.slane %v1938, 4
      %v1941 = vshll.u32 %v1909, 16
      %v1943 = vrot.slane %v1941, 5
      %v1944 = vor.u32 %v1940, %v1943
      %v1945 = vrot.slane %v1944, 4
      %v1947 = vshll.u32 %v1910, 16
      %v1949 = vrot.slane %v1947, 5
      %v1950 = vsel %vm674, %v1945, %v1949
      %v1952 = vshrl.u32 %v1911, 16
      %v1954 = vrot.slane %v1952, 4
      %v1955 = vshll.u32 %v1911, 16
      %v1957 = vrot.slane %v1955, 5
      %v1958 = vor.u32 %v1954, %v1957
      %v1959 = vrot.slane %v1958, 4
      %v1961 = vshll.u32 %v1912, 16
      %v1963 = vrot.slane %v1961, 5
      %v1964 = vsel %vm674, %v1959, %v1963
      %v1966 = vshrl.u32 %v1913, 16
      %v1968 = vrot.slane %v1966, 4
      %v1969 = vshll.u32 %v1913, 16
      %v1971 = vrot.slane %v1969, 5
      %v1972 = vor.u32 %v1968, %v1971
      %v1973 = vrot.slane %v1972, 4
      %v1975 = vshll.u32 %v1914, 16
      %v1977 = vrot.slane %v1975, 5
      %v1978 = vsel %vm674, %v1973, %v1977
      %v1980 = vshrl.u32 %v1915, 16
      %v1982 = vrot.slane %v1980, 4
      %v1983 = vshll.u32 %v1915, 16
      %v1985 = vrot.slane %v1983, 5
      %v1986 = vor.u32 %v1982, %v1985
      %v1987 = vrot.slane %v1986, 4
      %v1989 = vshll.u32 %v1916, 16
      %v1991 = vrot.slane %v1989, 5
      %v1992 = vsel %vm674, %v1987, %v1991
      %v1994 = vshrl.u32 %v1917, 16
      %v1996 = vrot.slane %v1994, 4
      %v1997 = vshll.u32 %v1917, 16
      %v1999 = vrot.slane %v1997, 5
      %v2000 = vor.u32 %v1996, %v1999
      %v2001 = vrot.slane %v2000, 4
      %v2003 = vshll.u32 %v1918, 16
      %v2005 = vrot.slane %v2003, 5
      %v2006 = vsel %vm674, %v2001, %v2005
      %v2008 = vshrl.u32 %v1919, 16
      %v2010 = vrot.slane %v2008, 4
      %v2011 = vshll.u32 %v1919, 16
      %v2013 = vrot.slane %v2011, 5
      %v2014 = vor.u32 %v2010, %v2013
      %v2015 = vrot.slane %v2014, 4
      %v2017 = vshll.u32 %v1920, 16
      %v2019 = vrot.slane %v2017, 5
      %v2020 = vsel %vm674, %v2015, %v2019
      %v2022 = vshrl.u32 %v1921, 16
      %v2024 = vrot.slane %v2022, 4
      %v2025 = vshll.u32 %v1921, 16
      %v2027 = vrot.slane %v2025, 5
      %v2028 = vor.u32 %v2024, %v2027
      %v2029 = vrot.slane %v2028, 4
      %v2031 = vshll.u32 %v1922, 16
      %v2033 = vrot.slane %v2031, 5
      %v2034 = vsel %vm674, %v2029, %v2033
      %s2035 = scalar_lea.vmem %s1, 512
      %v2036 = vld [vmem:[%s2035] sm:$0xf]
      %v2037 = vld [vmem:[%s2035 + $0x4] sm:$0xf]
      %v2038 = vld [vmem:[%s2035 + $0x8] sm:$0xf]
      %v2039 = vld [vmem:[%s2035 + $0xc] sm:$0xf]
      %v2040 = vld [vmem:[%s2035 + $0x10] sm:$0xf]
      %v2041 = vld [vmem:[%s2035 + $0x14] sm:$0xf]
      %v2042 = vld [vmem:[%s2035 + $0x18] sm:$0xf]
      %v2043 = vld [vmem:[%s2035 + $0x1c] sm:$0xf]
      %v2044 = vld [vmem:[%s2035 + $0x20] sm:$0xf]
      %v2045 = vld [vmem:[%s2035 + $0x24] sm:$0xf]
      %v2046 = vld [vmem:[%s2035 + $0x28] sm:$0xf]
      %v2047 = vld [vmem:[%s2035 + $0x2c] sm:$0xf]
      %v2048 = vld [vmem:[%s2035 + $0x30] sm:$0xf]
      %v2049 = vld [vmem:[%s2035 + $0x34] sm:$0xf]
      %v2050 = vld [vmem:[%s2035 + $0x38] sm:$0xf]
      %v2051 = vld [vmem:[%s2035 + $0x3c] sm:$0xf]
      %v2052 = vunpack.c.l.b16 %v1936
      %v2053 = vunpack.c.l.b16 %v1950
      %v2054 = vunpack.c.l.b16 %v1964
      %v2055 = vunpack.c.l.b16 %v1978
      %v2056 = vunpack.c.l.b16 %v1992
      %v2057 = vunpack.c.l.b16 %v2006
      %v2058 = vunpack.c.l.b16 %v2020
      %v2059 = vunpack.c.l.b16 %v2034
      %v2060 = vpack.c.b16 %v2053, %v2052
      %v2061 = vpack.c.b16 %v2055, %v2054
      %v2062 = vpack.c.b16 %v2057, %v2056
      %v2063 = vpack.c.b16 %v2059, %v2058
      %v2084 = vunpack.c.l.b16 %v2036
      %v2085 = vunpack.c.l.b16 %v2037
      %v2086 = vunpack.c.l.b16 %v2038
      %v2087 = vunpack.c.l.b16 %v2039
      %v2088 = vunpack.c.l.b16 %v2040
      %v2089 = vunpack.c.l.b16 %v2041
      %v2090 = vunpack.c.l.b16 %v2042
      %v2091 = vunpack.c.l.b16 %v2043
      %v2092 = vunpack.c.l.b16 %v2044
      %v2093 = vunpack.c.l.b16 %v2045
      %v2094 = vunpack.c.l.b16 %v2046
      %v2095 = vunpack.c.l.b16 %v2047
      %v2096 = vunpack.c.l.b16 %v2048
      %v2097 = vunpack.c.l.b16 %v2049
      %v2098 = vunpack.c.l.b16 %v2050
      %v2099 = vunpack.c.l.b16 %v2051
      %v2100 = vpack.c.b16 %v2085, %v2084
      %v2101 = vpack.c.b16 %v2087, %v2086
      %v2102 = vpack.c.b16 %v2089, %v2088
      %v2103 = vpack.c.b16 %v2091, %v2090
      %v2104 = vpack.c.b16 %v2093, %v2092
      %v2105 = vpack.c.b16 %v2095, %v2094
      %v2106 = vpack.c.b16 %v2097, %v2096
      %v2107 = vpack.c.b16 %v2099, %v2098
      %2116 = vmatprep.subr.bf16.mxu0 0
      %2117 = vmatpush1.bf16.msra.mxu0 %v2107
      %2118 = vmatprep.subr.bf16.mxu0 0
      %2119 = vmatpush1.bf16.msra.mxu0 %v2106
      %2120 = vmatprep.subr.bf16.mxu0 0
      %2121 = vmatpush1.bf16.msra.mxu0 %v2105
      %2122 = vmatprep.subr.bf16.mxu0 0
      %2123 = vmatpush1.bf16.msra.mxu0 %v2104
      %2124 = vmatprep.subr.bf16.mxu0 0
      %2125 = vmatpush1.bf16.msra.mxu0 %v2103
      %2126 = vmatprep.subr.bf16.mxu0 0
      %2127 = vmatpush1.bf16.msra.mxu0 %v2102
      %2128 = vmatprep.subr.bf16.mxu0 0
      %2129 = vmatpush1.bf16.msra.mxu0 %v2101
      %2130 = vmatprep.subr.bf16.mxu0 0
      %2131 = vmatpush1.bf16.msra.mxu0 %v2100
      %2132 = vmatprep.subr.bf16.mxu0 0
      %2133 = vmatpush2.bf16.msra.mxu0 0
      %2134 = vmatprep.subr.bf16.mxu0 0
      %2135 = vmatpush2.bf16.msra.mxu0 0
      %2136 = vmatprep.subr.bf16.mxu0 0
      %2137 = vmatpush2.bf16.msra.mxu0 0
      %2138 = vmatprep.subr.bf16.mxu0 0
      %2139 = vmatpush2.bf16.msra.mxu0 0
      %2140 = vmatprep.subr.bf16.mxu0 0
      %2141 = vmatpush2.bf16.msra.mxu0 0
      %2142 = vmatprep.subr.bf16.mxu0 0
      %2143 = vmatpush2.bf16.msra.mxu0 0
      %2144 = vmatprep.subr.bf16.mxu0 0
      %2145 = vmatpush2.bf16.msra.mxu0 0
      %2146 = vmatprep.subr.bf16.mxu0 0
      %2147 = vmatpush2.bf16.msra.mxu0 0
      %2148 = vmatprep.mubr.bf16.mxu0 0
      %2149 = vmatmul.mubr.bf16.gmra.mxu0 %v2060
      %v2150 = vpop.f32.mrf.mxu0
      %v2151 = vadd.f32 0.0, %v2150
      %v2152 = vpop.f32.mrf.mxu0
      %v2153 = vpop.f32.mrf.mxu0
      %v2154 = vadd.f32 0.0, %v2153
      %v2155 = vpop.f32.mrf.mxu0
      %2156 = vmatprep.mubr.bf16.mxu0 0
      %2157 = vmatmul.mubr.bf16.gmra.mxu0 %v2061
      %v2158 = vpop.f32.mrf.mxu0
      %v2159 = vadd.f32 0.0, %v2158
      %v2160 = vpop.f32.mrf.mxu0
      %v2161 = vpop.f32.mrf.mxu0
      %v2162 = vadd.f32 0.0, %v2161
      %v2163 = vpop.f32.mrf.mxu0
      %2164 = vmatprep.mubr.bf16.mxu0 0
      %2165 = vmatmul.mubr.bf16.gmra.mxu0 %v2062
      %v2166 = vpop.f32.mrf.mxu0
      %v2167 = vadd.f32 0.0, %v2166
      %v2168 = vpop.f32.mrf.mxu0
      %v2169 = vpop.f32.mrf.mxu0
      %v2170 = vadd.f32 0.0, %v2169
      %v2171 = vpop.f32.mrf.mxu0
      %2172 = vmatprep.mubr.bf16.mxu0 0
      %2173 = vmatmul.mubr.bf16.gmra.mxu0 %v2063
      %v2174 = vpop.f32.mrf.mxu0
      %v2175 = vadd.f32 0.0, %v2174
      %v2176 = vpop.f32.mrf.mxu0
      %v2177 = vpop.f32.mrf.mxu0
      %v2178 = vadd.f32 0.0, %v2177
      %v2179 = vpop.f32.mrf.mxu0
      %2180 = vdwg.mxu0
      %v2181 = vadd.f32 %v1899, %v2151
      %v2182 = vadd.f32 %v1900, %v2154
      %v2183 = vadd.f32 %v1901, %v2159
      %v2184 = vadd.f32 %v1902, %v2162
      %v2185 = vadd.f32 %v1903, %v2167
      %v2186 = vadd.f32 %v1904, %v2170
      %v2187 = vadd.f32 %v1905, %v2175
      %v2188 = vadd.f32 %v1906, %v2178
      %v2189 = vld [vmem:[%s2] sm:$0x1]
      %v2191 = vlaneseq
      %v2192 = vshrl.u32 %v2191, 7
      %v2193 = vsub.s32 0, %v2192
      %v2194 = vrot.slane %v2189, %v2193
      %v2196 = vadd.f32 %v2181, %v2194
      %v2197 = vadd.f32 %v2182, %v2194
      %v2198 = vadd.f32 %v2183, %v2194
      %v2199 = vadd.f32 %v2184, %v2194
      %v2200 = vadd.f32 %v2185, %v2194
      %v2201 = vadd.f32 %v2186, %v2194
      %v2202 = vadd.f32 %v2187, %v2194
      %v2203 = vadd.f32 %v2188, %v2194
      %v2204 = vmax.f32 %v2196, 0.0
      %v2205 = vmax.f32 %v2197, 0.0
      %v2206 = vmax.f32 %v2198, 0.0
      %v2207 = vmax.f32 %v2199, 0.0
      %v2208 = vmax.f32 %v2200, 0.0
      %v2209 = vmax.f32 %v2201, 0.0
      %v2210 = vmax.f32 %v2202, 0.0
      %v2211 = vmax.f32 %v2203, 0.0
      %2212 = vst [vmem:[#allocation2] sm:$0xf] 0
      %2213 = vst [vmem:[#allocation2 + $0x4] sm:$0x1] 0
      %2214 = vst [vmem:[#allocation2 + $0x8] sm:$0xf] 0
      %2215 = vst [vmem:[#allocation2 + $0xc] sm:$0x1] 0
      %2216 = vst [vmem:[#allocation2 + $0x10] sm:$0xf] 0
      %2217 = vst [vmem:[#allocation2 + $0x14] sm:$0x1] 0
      %2218 = vst [vmem:[#allocation2 + $0x18] sm:$0xf] 0
      %2219 = vst [vmem:[#allocation2 + $0x1c] sm:$0x1] 0
      %2220 = vst [vmem:[#allocation2 + $0x20] sm:$0xf] 0
      %2221 = vst [vmem:[#allocation2 + $0x24] sm:$0x1] 0
      %2222 = vst [vmem:[#allocation2 + $0x28] sm:$0xf] 0
      %2223 = vst [vmem:[#allocation2 + $0x2c] sm:$0x1] 0
      %2224 = vst [vmem:[#allocation2 + $0x30] sm:$0xf] 0
      %2225 = vst [vmem:[#allocation2 + $0x34] sm:$0x1] 0
      %2226 = vst [vmem:[#allocation2 + $0x38] sm:$0xf] 0
      %2227 = vst [vmem:[#allocation2 + $0x3c] sm:$0x1] 0
      %2228 = vst [vmem:[#allocation2 + $0x40] sm:$0xf] 0
      %2229 = vst [vmem:[#allocation2 + $0x44] sm:$0x1] 0
      %2230 = vst [vmem:[#allocation2 + $0x48] sm:$0xf] 0
      %2231 = vst [vmem:[#allocation2 + $0x4c] sm:$0x1] 0
      %v2232 = vpack.c.bf16 %v2204, %v2204
      %v2233 = vpack.c.bf16 %v2205, %v2205
      %v2234 = vpack.c.bf16 %v2206, %v2206
      %v2235 = vpack.c.bf16 %v2207, %v2207
      %v2236 = vpack.c.bf16 %v2208, %v2208
      %v2237 = vpack.c.bf16 %v2209, %v2209
      %v2238 = vpack.c.bf16 %v2210, %v2210
      %v2239 = vpack.c.bf16 %v2211, %v2211
      %v2248 = vunpack.c.l.b16 %v2232
      %v2249 = vunpack.c.l.b16 %v2233
      %v2250 = vunpack.c.l.b16 %v2234
      %v2251 = vunpack.c.l.b16 %v2235
      %v2252 = vunpack.c.l.b16 %v2236
      %v2253 = vunpack.c.l.b16 %v2237
      %v2254 = vunpack.c.l.b16 %v2238
      %v2255 = vunpack.c.l.b16 %v2239
      %v2256 = vpack.c.b16 %v2248, %v2248
      %v2257 = vpack.c.b16 %v2249, %v2249
      %v2258 = vpack.c.b16 %v2250, %v2250
      %v2259 = vpack.c.b16 %v2251, %v2251
      %v2260 = vpack.c.b16 %v2252, %v2252
      %v2261 = vpack.c.b16 %v2253, %v2253
      %v2262 = vpack.c.b16 %v2254, %v2254
      %v2263 = vpack.c.b16 %v2255, %v2255
      %v2265 = vshrl.u32 %v2256, 16
      %v2267 = vrot.slane %v2265, 7
      %v2268 = vshll.u32 %v2256, 16
      %v2270 = vor.u32 %v2267, %v2268
      %v2271 = vrot.slane %v2267, 4
      %v2273 = vshrl.u32 %v2257, 16
      %v2275 = vrot.slane %v2273, 7
      %v2276 = vshll.u32 %v2257, 16
      %v2278 = vor.u32 %v2275, %v2276
      %v2279 = vrot.slane %v2275, 4
      %v2281 = vshrl.u32 %v2258, 16
      %v2283 = vrot.slane %v2281, 7
      %v2284 = vshll.u32 %v2258, 16
      %v2286 = vor.u32 %v2283, %v2284
      %v2287 = vrot.slane %v2283, 4
      %v2289 = vshrl.u32 %v2259, 16
      %v2291 = vrot.slane %v2289, 7
      %v2292 = vshll.u32 %v2259, 16
      %v2294 = vor.u32 %v2291, %v2292
      %v2295 = vrot.slane %v2291, 4
      %v2297 = vshrl.u32 %v2260, 16
      %v2299 = vrot.slane %v2297, 7
      %v2300 = vshll.u32 %v2260, 16
      %v2302 = vor.u32 %v2299, %v2300
      %v2303 = vrot.slane %v2299, 4
      %v2305 = vshrl.u32 %v2261, 16
      %v2307 = vrot.slane %v2305, 7
      %v2308 = vshll.u32 %v2261, 16
      %v2310 = vor.u32 %v2307, %v2308
      %v2311 = vrot.slane %v2307, 4
      %v2313 = vshrl.u32 %v2262, 16
      %v2315 = vrot.slane %v2313, 7
      %v2316 = vshll.u32 %v2262, 16
      %v2318 = vor.u32 %v2315, %v2316
      %v2319 = vrot.slane %v2315, 4
      %v2321 = vshrl.u32 %v2263, 16
      %v2323 = vrot.slane %v2321, 7
      %v2324 = vshll.u32 %v2263, 16
      %v2326 = vor.u32 %v2323, %v2324
      %v2327 = vrot.slane %v2323, 4
      %s2344 = scalar_lea.vmem [#allocation2], 8
      %vm2345 = vcmask 1043456
      %vm2346 = vsmask.f32 7938
      %vm2347 = vmand %vm2345, %vm2346
      %v2348 = vld [vmem:[%s2344] sm:$0xf]
      %v2349 = vsel %vm2347, %v2270, %v2348
      %2350 = vst [vmem:[%s2344] sm:$0xf] %v2349
      %vm2351 = vcmask 1040384
      %vm2352 = vsmask.f32 256
      %vm2353 = vmand %vm2351, %vm2352
      %v2354 = vld [vmem:[%s2344 + $0x4] sm:$0x1]
      %v2355 = vsel %vm2353, %v2271, %v2354
      %2356 = vst [vmem:[%s2344 + $0x4] sm:$0x1] %v2355
      %v2357 = vld [vmem:[%s2344 + $0x8] sm:$0xf]
      %v2358 = vsel %vm2347, %v2278, %v2357
      %2359 = vst [vmem:[%s2344 + $0x8] sm:$0xf] %v2358
      %v2360 = vld [vmem:[%s2344 + $0xc] sm:$0x1]
      %v2361 = vsel %vm2353, %v2279, %v2360
      %2362 = vst [vmem:[%s2344 + $0xc] sm:$0x1] %v2361
      %v2363 = vld [vmem:[%s2344 + $0x10] sm:$0xf]
      %v2364 = vsel %vm2347, %v2286, %v2363
      %2365 = vst [vmem:[%s2344 + $0x10] sm:$0xf] %v2364
      %v2366 = vld [vmem:[%s2344 + $0x14] sm:$0x1]
      %v2367 = vsel %vm2353, %v2287, %v2366
      %2368 = vst [vmem:[%s2344 + $0x14] sm:$0x1] %v2367
      %v2369 = vld [vmem:[%s2344 + $0x18] sm:$0xf]
      %v2370 = vsel %vm2347, %v2294, %v2369
      %2371 = vst [vmem:[%s2344 + $0x18] sm:$0xf] %v2370
      %v2372 = vld [vmem:[%s2344 + $0x1c] sm:$0x1]
      %v2373 = vsel %vm2353, %v2295, %v2372
      %2374 = vst [vmem:[%s2344 + $0x1c] sm:$0x1] %v2373
      %v2375 = vld [vmem:[%s2344 + $0x20] sm:$0xf]
      %v2376 = vsel %vm2347, %v2302, %v2375
      %2377 = vst [vmem:[%s2344 + $0x20] sm:$0xf] %v2376
      %v2378 = vld [vmem:[%s2344 + $0x24] sm:$0x1]
      %v2379 = vsel %vm2353, %v2303, %v2378
      %2380 = vst [vmem:[%s2344 + $0x24] sm:$0x1] %v2379
      %v2381 = vld [vmem:[%s2344 + $0x28] sm:$0xf]
      %v2382 = vsel %vm2347, %v2310, %v2381
      %2383 = vst [vmem:[%s2344 + $0x28] sm:$0xf] %v2382
      %v2384 = vld [vmem:[%s2344 + $0x2c] sm:$0x1]
      %v2385 = vsel %vm2353, %v2311, %v2384
      %2386 = vst [vmem:[%s2344 + $0x2c] sm:$0x1] %v2385
      %v2387 = vld [vmem:[%s2344 + $0x30] sm:$0xf]
      %v2388 = vsel %vm2347, %v2318, %v2387
      %2389 = vst [vmem:[%s2344 + $0x30] sm:$0xf] %v2388
      %v2390 = vld [vmem:[%s2344 + $0x34] sm:$0x1]
      %v2391 = vsel %vm2353, %v2319, %v2390
      %2392 = vst [vmem:[%s2344 + $0x34] sm:$0x1] %v2391
      %v2393 = vld [vmem:[%s2344 + $0x38] sm:$0xf]
      %v2394 = vsel %vm2347, %v2326, %v2393
      %2395 = vst [vmem:[%s2344 + $0x38] sm:$0xf] %v2394
      %v2396 = vld [vmem:[%s2344 + $0x3c] sm:$0x1]
      %v2397 = vsel %vm2353, %v2327, %v2396
      %2398 = vst [vmem:[%s2344 + $0x3c] sm:$0x1] %v2397
      %v2399 = vld [vmem:[#allocation2] sm:$0xf]
      %v2400 = vld [vmem:[#allocation2 + $0x8] sm:$0xf]
      %v2401 = vld [vmem:[#allocation2 + $0x10] sm:$0xf]
      %v2402 = vld [vmem:[#allocation2 + $0x18] sm:$0xf]
      %v2403 = vld [vmem:[#allocation2 + $0x20] sm:$0xf]
      %v2404 = vld [vmem:[#allocation2 + $0x28] sm:$0xf]
      %v2405 = vld [vmem:[#allocation2 + $0x30] sm:$0xf]
      %v2406 = vld [vmem:[#allocation2 + $0x38] sm:$0xf]
      %v2407 = vld [vmem:[%s3] sm:$0xf]
      %v2408 = vld [vmem:[%s3 + $0x4] sm:$0xf]
      %v2409 = vld [vmem:[%s3 + $0x8] sm:$0xf]
      %v2410 = vld [vmem:[%s3 + $0xc] sm:$0xf]
      %v2411 = vld [vmem:[%s3 + $0x10] sm:$0xf]
      %v2412 = vld [vmem:[%s3 + $0x14] sm:$0xf]
      %v2413 = vld [vmem:[%s3 + $0x18] sm:$0xf]
      %v2414 = vld [vmem:[%s3 + $0x1c] sm:$0xf]
      %v2415 = vld [vmem:[%s3 + $0x20] sm:$0xf]
      %v2416 = vld [vmem:[%s3 + $0x24] sm:$0xf]
      %v2417 = vld [vmem:[%s3 + $0x28] sm:$0xf]
      %v2418 = vld [vmem:[%s3 + $0x2c] sm:$0xf]
      %v2419 = vld [vmem:[%s3 + $0x30] sm:$0xf]
      %v2420 = vld [vmem:[%s3 + $0x34] sm:$0xf]
      %v2421 = vld [vmem:[%s3 + $0x38] sm:$0xf]
      %v2422 = vld [vmem:[%s3 + $0x3c] sm:$0xf]
      %v2423 = vld [vmem:[#allocation2 + $0x4] sm:$0x1]
      %v2424 = vld [vmem:[#allocation2 + $0xc] sm:$0x1]
      %v2425 = vld [vmem:[#allocation2 + $0x14] sm:$0x1]
      %v2426 = vld [vmem:[#allocation2 + $0x1c] sm:$0x1]
      %v2427 = vld [vmem:[#allocation2 + $0x24] sm:$0x1]
      %v2428 = vld [vmem:[#allocation2 + $0x2c] sm:$0x1]
      %v2429 = vld [vmem:[#allocation2 + $0x34] sm:$0x1]
      %v2430 = vld [vmem:[#allocation2 + $0x3c] sm:$0x1]
      %v2432 = vshrl.u32 %v2399, 16
      %v2434 = vrot.slane %v2432, 4
      %v2435 = vshll.u32 %v2399, 16
      %v2437 = vrot.slane %v2435, 5
      %v2438 = vor.u32 %v2434, %v2437
      %v2439 = vrot.slane %v2438, 4
      %v2441 = vshll.u32 %v2423, 16
      %v2443 = vrot.slane %v2441, 5
      %v2444 = vsel %vm674, %v2439, %v2443
      %v2446 = vshrl.u32 %v2400, 16
      %v2448 = vrot.slane %v2446, 4
      %v2449 = vshll.u32 %v2400, 16
      %v2451 = vrot.slane %v2449, 5
      %v2452 = vor.u32 %v2448, %v2451
      %v2453 = vrot.slane %v2452, 4
      %v2455 = vshll.u32 %v2424, 16
      %v2457 = vrot.slane %v2455, 5
      %v2458 = vsel %vm674, %v2453, %v2457
      %v2460 = vshrl.u32 %v2401, 16
      %v2462 = vrot.slane %v2460, 4
      %v2463 = vshll.u32 %v2401, 16
      %v2465 = vrot.slane %v2463, 5
      %v2466 = vor.u32 %v2462, %v2465
      %v2467 = vrot.slane %v2466, 4
      %v2469 = vshll.u32 %v2425, 16
      %v2471 = vrot.slane %v2469, 5
      %v2472 = vsel %vm674, %v2467, %v2471
      %v2474 = vshrl.u32 %v2402, 16
      %v2476 = vrot.slane %v2474, 4
      %v2477 = vshll.u32 %v2402, 16
      %v2479 = vrot.slane %v2477, 5
      %v2480 = vor.u32 %v2476, %v2479
      %v2481 = vrot.slane %v2480, 4
      %v2483 = vshll.u32 %v2426, 16
      %v2485 = vrot.slane %v2483, 5
      %v2486 = vsel %vm674, %v2481, %v2485
      %v2488 = vshrl.u32 %v2403, 16
      %v2490 = vrot.slane %v2488, 4
      %v2491 = vshll.u32 %v2403, 16
      %v2493 = vrot.slane %v2491, 5
      %v2494 = vor.u32 %v2490, %v2493
      %v2495 = vrot.slane %v2494, 4
      %v2497 = vshll.u32 %v2427, 16
      %v2499 = vrot.slane %v2497, 5
      %v2500 = vsel %vm674, %v2495, %v2499
      %v2502 = vshrl.u32 %v2404, 16
      %v2504 = vrot.slane %v2502, 4
      %v2505 = vshll.u32 %v2404, 16
      %v2507 = vrot.slane %v2505, 5
      %v2508 = vor.u32 %v2504, %v2507
      %v2509 = vrot.slane %v2508, 4
      %v2511 = vshll.u32 %v2428, 16
      %v2513 = vrot.slane %v2511, 5
      %v2514 = vsel %vm674, %v2509, %v2513
      %v2516 = vshrl.u32 %v2405, 16
      %v2518 = vrot.slane %v2516, 4
      %v2519 = vshll.u32 %v2405, 16
      %v2521 = vrot.slane %v2519, 5
      %v2522 = vor.u32 %v2518, %v2521
      %v2523 = vrot.slane %v2522, 4
      %v2525 = vshll.u32 %v2429, 16
      %v2527 = vrot.slane %v2525, 5
      %v2528 = vsel %vm674, %v2523, %v2527
      %v2530 = vshrl.u32 %v2406, 16
      %v2532 = vrot.slane %v2530, 4
      %v2533 = vshll.u32 %v2406, 16
      %v2535 = vrot.slane %v2533, 5
      %v2536 = vor.u32 %v2532, %v2535
      %v2537 = vrot.slane %v2536, 4
      %v2539 = vshll.u32 %v2430, 16
      %v2541 = vrot.slane %v2539, 5
      %v2542 = vsel %vm674, %v2537, %v2541
      %s2543 = scalar_lea.vmem %s3, 64
      %v2544 = vld [vmem:[%s2543] sm:$0xf]
      %v2545 = vld [vmem:[%s2543 + $0x4] sm:$0xf]
      %v2546 = vld [vmem:[%s2543 + $0x8] sm:$0xf]
      %v2547 = vld [vmem:[%s2543 + $0xc] sm:$0xf]
      %v2548 = vld [vmem:[%s2543 + $0x10] sm:$0xf]
      %v2549 = vld [vmem:[%s2543 + $0x14] sm:$0xf]
      %v2550 = vld [vmem:[%s2543 + $0x18] sm:$0xf]
      %v2551 = vld [vmem:[%s2543 + $0x1c] sm:$0xf]
      %v2552 = vld [vmem:[%s2543 + $0x20] sm:$0xf]
      %v2553 = vld [vmem:[%s2543 + $0x24] sm:$0xf]
      %v2554 = vld [vmem:[%s2543 + $0x28] sm:$0xf]
      %v2555 = vld [vmem:[%s2543 + $0x2c] sm:$0xf]
      %v2556 = vld [vmem:[%s2543 + $0x30] sm:$0xf]
      %v2557 = vld [vmem:[%s2543 + $0x34] sm:$0xf]
      %v2558 = vld [vmem:[%s2543 + $0x38] sm:$0xf]
      %v2559 = vld [vmem:[%s2543 + $0x3c] sm:$0xf]
      %v2560 = vunpack.c.l.b16 %v2444
      %v2561 = vunpack.c.l.b16 %v2458
      %v2562 = vunpack.c.l.b16 %v2472
      %v2563 = vunpack.c.l.b16 %v2486
      %v2564 = vunpack.c.l.b16 %v2500
      %v2565 = vunpack.c.l.b16 %v2514
      %v2566 = vunpack.c.l.b16 %v2528
      %v2567 = vunpack.c.l.b16 %v2542
      %v2568 = vpack.c.b16 %v2561, %v2560
      %v2569 = vpack.c.b16 %v2563, %v2562
      %v2570 = vpack.c.b16 %v2565, %v2564
      %v2571 = vpack.c.b16 %v2567, %v2566
      %v2592 = vunpack.c.l.b16 %v2544
      %v2593 = vunpack.c.l.b16 %v2545
      %v2594 = vunpack.c.l.b16 %v2546
      %v2595 = vunpack.c.l.b16 %v2547
      %v2596 = vunpack.c.l.b16 %v2548
      %v2597 = vunpack.c.l.b16 %v2549
      %v2598 = vunpack.c.l.b16 %v2550
      %v2599 = vunpack.c.l.b16 %v2551
      %v2600 = vunpack.c.l.b16 %v2552
      %v2601 = vunpack.c.l.b16 %v2553
      %v2602 = vunpack.c.l.b16 %v2554
      %v2603 = vunpack.c.l.b16 %v2555
      %v2604 = vunpack.c.l.b16 %v2556
      %v2605 = vunpack.c.l.b16 %v2557
      %v2606 = vunpack.c.l.b16 %v2558
      %v2607 = vunpack.c.l.b16 %v2559
      %v2608 = vpack.c.b16 %v2593, %v2592
      %v2609 = vpack.c.b16 %v2595, %v2594
      %v2610 = vpack.c.b16 %v2597, %v2596
      %v2611 = vpack.c.b16 %v2599, %v2598
      %v2612 = vpack.c.b16 %v2601, %v2600
      %v2613 = vpack.c.b16 %v2603, %v2602
      %v2614 = vpack.c.b16 %v2605, %v2604
      %v2615 = vpack.c.b16 %v2607, %v2606
      %2624 = vmatprep.subr.bf16.mxu0 0
      %2625 = vmatpush1.bf16.msra.mxu0 %v2615
      %2626 = vmatprep.subr.bf16.mxu0 0
      %2627 = vmatpush1.bf16.msra.mxu0 %v2614
      %2628 = vmatprep.subr.bf16.mxu0 0
      %2629 = vmatpush1.bf16.msra.mxu0 %v2613
      %2630 = vmatprep.subr.bf16.mxu0 0
      %2631 = vmatpush1.bf16.msra.mxu0 %v2612
      %2632 = vmatprep.subr.bf16.mxu0 0
      %2633 = vmatpush1.bf16.msra.mxu0 %v2611
      %2634 = vmatprep.subr.bf16.mxu0 0
      %2635 = vmatpush1.bf16.msra.mxu0 %v2610
      %2636 = vmatprep.subr.bf16.mxu0 0
      %2637 = vmatpush1.bf16.msra.mxu0 %v2609
      %2638 = vmatprep.subr.bf16.mxu0 0
      %2639 = vmatpush1.bf16.msra.mxu0 %v2608
      %2640 = vmatprep.subr.bf16.mxu0 0
      %2641 = vmatpush2.bf16.msra.mxu0 0
      %2642 = vmatprep.subr.bf16.mxu0 0
      %2643 = vmatpush2.bf16.msra.mxu0 0
      %2644 = vmatprep.subr.bf16.mxu0 0
      %2645 = vmatpush2.bf16.msra.mxu0 0
      %2646 = vmatprep.subr.bf16.mxu0 0
      %2647 = vmatpush2.bf16.msra.mxu0 0
      %2648 = vmatprep.subr.bf16.mxu0 0
      %2649 = vmatpush2.bf16.msra.mxu0 0
      %2650 = vmatprep.subr.bf16.mxu0 0
      %2651 = vmatpush2.bf16.msra.mxu0 0
      %2652 = vmatprep.subr.bf16.mxu0 0
      %2653 = vmatpush2.bf16.msra.mxu0 0
      %2654 = vmatprep.subr.bf16.mxu0 0
      %2655 = vmatpush2.bf16.msra.mxu0 0
      %2656 = vmatprep.mubr.bf16.mxu0 0
      %2657 = vmatmul.mubr.bf16.gmra.mxu0 %v2568
      %v2658 = vpop.f32.mrf.mxu0
      %v2659 = vadd.f32 0.0, %v2658
      %v2660 = vpop.f32.mrf.mxu0
      %v2661 = vpop.f32.mrf.mxu0
      %v2662 = vadd.f32 0.0, %v2661
      %v2663 = vpop.f32.mrf.mxu0
      %2664 = vmatprep.mubr.bf16.mxu0 0
      %2665 = vmatmul.mubr.bf16.gmra.mxu0 %v2569
      %v2666 = vpop.f32.mrf.mxu0
      %v2667 = vadd.f32 0.0, %v2666
      %v2668 = vpop.f32.mrf.mxu0
      %v2669 = vpop.f32.mrf.mxu0
      %v2670 = vadd.f32 0.0, %v2669
      %v2671 = vpop.f32.mrf.mxu0
      %2672 = vmatprep.mubr.bf16.mxu0 0
      %2673 = vmatmul.mubr.bf16.gmra.mxu0 %v2570
      %v2674 = vpop.f32.mrf.mxu0
      %v2675 = vadd.f32 0.0, %v2674
      %v2676 = vpop.f32.mrf.mxu0
      %v2677 = vpop.f32.mrf.mxu0
      %v2678 = vadd.f32 0.0, %v2677
      %v2679 = vpop.f32.mrf.mxu0
      %2680 = vmatprep.mubr.bf16.mxu0 0
      %2681 = vmatmul.mubr.bf16.gmra.mxu0 %v2571
      %v2682 = vpop.f32.mrf.mxu0
      %v2683 = vadd.f32 0.0, %v2682
      %v2684 = vpop.f32.mrf.mxu0
      %v2685 = vpop.f32.mrf.mxu0
      %v2686 = vadd.f32 0.0, %v2685
      %v2687 = vpop.f32.mrf.mxu0
      %2688 = vdwg.mxu0
      %v2697 = vunpack.c.l.b16 %v2399
      %v2698 = vunpack.c.l.b16 %v2400
      %v2699 = vunpack.c.l.b16 %v2401
      %v2700 = vunpack.c.l.b16 %v2402
      %v2701 = vunpack.c.l.b16 %v2403
      %v2702 = vunpack.c.l.b16 %v2404
      %v2703 = vunpack.c.l.b16 %v2405
      %v2704 = vunpack.c.l.b16 %v2406
      %v2705 = vpack.c.b16 %v2698, %v2697
      %v2706 = vpack.c.b16 %v2700, %v2699
      %v2707 = vpack.c.b16 %v2702, %v2701
      %v2708 = vpack.c.b16 %v2704, %v2703
      %v2729 = vunpack.c.l.b16 %v2407
      %v2730 = vunpack.c.l.b16 %v2408
      %v2731 = vunpack.c.l.b16 %v2409
      %v2732 = vunpack.c.l.b16 %v2410
      %v2733 = vunpack.c.l.b16 %v2411
      %v2734 = vunpack.c.l.b16 %v2412
      %v2735 = vunpack.c.l.b16 %v2413
      %v2736 = vunpack.c.l.b16 %v2414
      %v2737 = vunpack.c.l.b16 %v2415
      %v2738 = vunpack.c.l.b16 %v2416
      %v2739 = vunpack.c.l.b16 %v2417
      %v2740 = vunpack.c.l.b16 %v2418
      %v2741 = vunpack.c.l.b16 %v2419
      %v2742 = vunpack.c.l.b16 %v2420
      %v2743 = vunpack.c.l.b16 %v2421
      %v2744 = vunpack.c.l.b16 %v2422
      %v2745 = vpack.c.b16 %v2730, %v2729
      %v2746 = vpack.c.b16 %v2732, %v2731
      %v2747 = vpack.c.b16 %v2734, %v2733
      %v2748 = vpack.c.b16 %v2736, %v2735
      %v2749 = vpack.c.b16 %v2738, %v2737
      %v2750 = vpack.c.b16 %v2740, %v2739
      %v2751 = vpack.c.b16 %v2742, %v2741
      %v2752 = vpack.c.b16 %v2744, %v2743
      %2761 = vmatprep.subr.bf16.mxu0 0
      %2762 = vmatpush1.bf16.msra.mxu0 %v2752
      %2763 = vmatprep.subr.bf16.mxu0 0
      %2764 = vmatpush1.bf16.msra.mxu0 %v2751
      %2765 = vmatprep.subr.bf16.mxu0 0
      %2766 = vmatpush1.bf16.msra.mxu0 %v2750
      %2767 = vmatprep.subr.bf16.mxu0 0
      %2768 = vmatpush1.bf16.msra.mxu0 %v2749
      %2769 = vmatprep.subr.bf16.mxu0 0
      %2770 = vmatpush1.bf16.msra.mxu0 %v2748
      %2771 = vmatprep.subr.bf16.mxu0 0
      %2772 = vmatpush1.bf16.msra.mxu0 %v2747
      %2773 = vmatprep.subr.bf16.mxu0 0
      %2774 = vmatpush1.bf16.msra.mxu0 %v2746
      %2775 = vmatprep.subr.bf16.mxu0 0
      %2776 = vmatpush1.bf16.msra.mxu0 %v2745
      %2777 = vmatprep.subr.bf16.mxu0 0
      %2778 = vmatpush2.bf16.msra.mxu0 0
      %2779 = vmatprep.subr.bf16.mxu0 0
      %2780 = vmatpush2.bf16.msra.mxu0 0
      %2781 = vmatprep.subr.bf16.mxu0 0
      %2782 = vmatpush2.bf16.msra.mxu0 0
      %2783 = vmatprep.subr.bf16.mxu0 0
      %2784 = vmatpush2.bf16.msra.mxu0 0
      %2785 = vmatprep.subr.bf16.mxu0 0
      %2786 = vmatpush2.bf16.msra.mxu0 0
      %2787 = vmatprep.subr.bf16.mxu0 0
      %2788 = vmatpush2.bf16.msra.mxu0 0
      %2789 = vmatprep.subr.bf16.mxu0 0
      %2790 = vmatpush2.bf16.msra.mxu0 0
      %2791 = vmatprep.subr.bf16.mxu0 0
      %2792 = vmatpush2.bf16.msra.mxu0 0
      %2793 = vmatprep.mubr.bf16.mxu0 0
      %2794 = vmatmul.mubr.bf16.gmra.mxu0 %v2705
      %v2795 = vpop.f32.mrf.mxu0
      %v2796 = vadd.f32 %v2659, %v2795
      %v2797 = vpop.f32.mrf.mxu0
      %v2798 = vpop.f32.mrf.mxu0
      %v2799 = vadd.f32 %v2662, %v2798
      %v2800 = vpop.f32.mrf.mxu0
      %2801 = vmatprep.mubr.bf16.mxu0 0
      %2802 = vmatmul.mubr.bf16.gmra.mxu0 %v2706
      %v2803 = vpop.f32.mrf.mxu0
      %v2804 = vadd.f32 %v2667, %v2803
      %v2805 = vpop.f32.mrf.mxu0
      %v2806 = vpop.f32.mrf.mxu0
      %v2807 = vadd.f32 %v2670, %v2806
      %v2808 = vpop.f32.mrf.mxu0
      %2809 = vmatprep.mubr.bf16.mxu0 0
      %2810 = vmatmul.mubr.bf16.gmra.mxu0 %v2707
      %v2811 = vpop.f32.mrf.mxu0
      %v2812 = vadd.f32 %v2675, %v2811
      %v2813 = vpop.f32.mrf.mxu0
      %v2814 = vpop.f32.mrf.mxu0
      %v2815 = vadd.f32 %v2678, %v2814
      %v2816 = vpop.f32.mrf.mxu0
      %2817 = vmatprep.mubr.bf16.mxu0 0
      %2818 = vmatmul.mubr.bf16.gmra.mxu0 %v2708
      %v2819 = vpop.f32.mrf.mxu0
      %v2820 = vadd.f32 %v2683, %v2819
      %v2821 = vpop.f32.mrf.mxu0
      %v2822 = vpop.f32.mrf.mxu0
      %v2823 = vadd.f32 %v2686, %v2822
      %v2824 = vpop.f32.mrf.mxu0
      %2825 = vdwg.mxu0
      %v2826 = vld [vmem:[#allocation2] sm:$0xe]
      %v2827 = vld [vmem:[#allocation2 + $0x8] sm:$0xe]
      %v2828 = vld [vmem:[#allocation2 + $0x10] sm:$0xe]
      %v2829 = vld [vmem:[#allocation2 + $0x18] sm:$0xe]
      %v2830 = vld [vmem:[#allocation2 + $0x20] sm:$0xe]
      %v2831 = vld [vmem:[#allocation2 + $0x28] sm:$0xe]
      %v2832 = vld [vmem:[#allocation2 + $0x30] sm:$0xe]
      %v2833 = vld [vmem:[#allocation2 + $0x38] sm:$0xe]
      %vm2850 = vcmask 1042432
      %vm2851 = vcmask 1046532
      %vm2852 = vmor %vm2850, %vm2851
      %v2853 = vrot.slane %v2826, 5
      %v2854 = vrot.slane %v2853, 4
      %v2855 = vrot.slane %v2423, 5
      %v2856 = vsel %vm2852, %v2854, %v2855
      %v2857 = vrot.slane %v2827, 5
      %v2858 = vrot.slane %v2857, 4
      %v2859 = vrot.slane %v2424, 5
      %v2860 = vsel %vm2852, %v2858, %v2859
      %v2861 = vrot.slane %v2828, 5
      %v2862 = vrot.slane %v2861, 4
      %v2863 = vrot.slane %v2425, 5
      %v2864 = vsel %vm2852, %v2862, %v2863
      %v2865 = vrot.slane %v2829, 5
      %v2866 = vrot.slane %v2865, 4
      %v2867 = vrot.slane %v2426, 5
      %v2868 = vsel %vm2852, %v2866, %v2867
      %v2869 = vrot.slane %v2830, 5
      %v2870 = vrot.slane %v2869, 4
      %v2871 = vrot.slane %v2427, 5
      %v2872 = vsel %vm2852, %v2870, %v2871
      %v2873 = vrot.slane %v2831, 5
      %v2874 = vrot.slane %v2873, 4
      %v2875 = vrot.slane %v2428, 5
      %v2876 = vsel %vm2852, %v2874, %v2875
      %v2877 = vrot.slane %v2832, 5
      %v2878 = vrot.slane %v2877, 4
      %v2879 = vrot.slane %v2429, 5
      %v2880 = vsel %vm2852, %v2878, %v2879
      %v2881 = vrot.slane %v2833, 5
      %v2882 = vrot.slane %v2881, 4
      %v2883 = vrot.slane %v2430, 5
      %v2884 = vsel %vm2852, %v2882, %v2883
      %s2885 = scalar_lea.vmem %s3, 128
      %v2886 = vld [vmem:[%s2885] sm:$0xf]
      %v2887 = vld [vmem:[%s2885 + $0x4] sm:$0xf]
      %v2888 = vld [vmem:[%s2885 + $0x8] sm:$0xf]
      %v2889 = vld [vmem:[%s2885 + $0xc] sm:$0xf]
      %v2890 = vld [vmem:[%s2885 + $0x10] sm:$0xf]
      %v2891 = vld [vmem:[%s2885 + $0x14] sm:$0xf]
      %v2892 = vld [vmem:[%s2885 + $0x18] sm:$0xf]
      %v2893 = vld [vmem:[%s2885 + $0x1c] sm:$0xf]
      %v2894 = vld [vmem:[%s2885 + $0x20] sm:$0xf]
      %v2895 = vld [vmem:[%s2885 + $0x24] sm:$0xf]
      %v2896 = vld [vmem:[%s2885 + $0x28] sm:$0xf]
      %v2897 = vld [vmem:[%s2885 + $0x2c] sm:$0xf]
      %v2898 = vld [vmem:[%s2885 + $0x30] sm:$0xf]
      %v2899 = vld [vmem:[%s2885 + $0x34] sm:$0xf]
      %v2900 = vld [vmem:[%s2885 + $0x38] sm:$0xf]
      %v2901 = vld [vmem:[%s2885 + $0x3c] sm:$0xf]
      %v2902 = vunpack.c.l.b16 %v2856
      %v2903 = vunpack.c.l.b16 %v2860
      %v2904 = vunpack.c.l.b16 %v2864
      %v2905 = vunpack.c.l.b16 %v2868
      %v2906 = vunpack.c.l.b16 %v2872
      %v2907 = vunpack.c.l.b16 %v2876
      %v2908 = vunpack.c.l.b16 %v2880
      %v2909 = vunpack.c.l.b16 %v2884
      %v2910 = vpack.c.b16 %v2903, %v2902
      %v2911 = vpack.c.b16 %v2905, %v2904
      %v2912 = vpack.c.b16 %v2907, %v2906
      %v2913 = vpack.c.b16 %v2909, %v2908
      %v2934 = vunpack.c.l.b16 %v2886
      %v2935 = vunpack.c.l.b16 %v2887
      %v2936 = vunpack.c.l.b16 %v2888
      %v2937 = vunpack.c.l.b16 %v2889
      %v2938 = vunpack.c.l.b16 %v2890
      %v2939 = vunpack.c.l.b16 %v2891
      %v2940 = vunpack.c.l.b16 %v2892
      %v2941 = vunpack.c.l.b16 %v2893
      %v2942 = vunpack.c.l.b16 %v2894
      %v2943 = vunpack.c.l.b16 %v2895
      %v2944 = vunpack.c.l.b16 %v2896
      %v2945 = vunpack.c.l.b16 %v2897
      %v2946 = vunpack.c.l.b16 %v2898
      %v2947 = vunpack.c.l.b16 %v2899
      %v2948 = vunpack.c.l.b16 %v2900
      %v2949 = vunpack.c.l.b16 %v2901
      %v2950 = vpack.c.b16 %v2935, %v2934
      %v2951 = vpack.c.b16 %v2937, %v2936
      %v2952 = vpack.c.b16 %v2939, %v2938
      %v2953 = vpack.c.b16 %v2941, %v2940
      %v2954 = vpack.c.b16 %v2943, %v2942
      %v2955 = vpack.c.b16 %v2945, %v2944
      %v2956 = vpack.c.b16 %v2947, %v2946
      %v2957 = vpack.c.b16 %v2949, %v2948
      %2966 = vmatprep.subr.bf16.mxu0 0
      %2967 = vmatpush1.bf16.msra.mxu0 %v2957
      %2968 = vmatprep.subr.bf16.mxu0 0
      %2969 = vmatpush1.bf16.msra.mxu0 %v2956
      %2970 = vmatprep.subr.bf16.mxu0 0
      %2971 = vmatpush1.bf16.msra.mxu0 %v2955
      %2972 = vmatprep.subr.bf16.mxu0 0
      %2973 = vmatpush1.bf16.msra.mxu0 %v2954
      %2974 = vmatprep.subr.bf16.mxu0 0
      %2975 = vmatpush1.bf16.msra.mxu0 %v2953
      %2976 = vmatprep.subr.bf16.mxu0 0
      %2977 = vmatpush1.bf16.msra.mxu0 %v2952
      %2978 = vmatprep.subr.bf16.mxu0 0
      %2979 = vmatpush1.bf16.msra.mxu0 %v2951
      %2980 = vmatprep.subr.bf16.mxu0 0
      %2981 = vmatpush1.bf16.msra.mxu0 %v2950
      %2982 = vmatprep.subr.bf16.mxu0 0
      %2983 = vmatpush2.bf16.msra.mxu0 0
      %2984 = vmatprep.subr.bf16.mxu0 0
      %2985 = vmatpush2.bf16.msra.mxu0 0
      %2986 = vmatprep.subr.bf16.mxu0 0
      %2987 = vmatpush2.bf16.msra.mxu0 0
      %2988 = vmatprep.subr.bf16.mxu0 0
      %2989 = vmatpush2.bf16.msra.mxu0 0
      %2990 = vmatprep.subr.bf16.mxu0 0
      %2991 = vmatpush2.bf16.msra.mxu0 0
      %2992 = vmatprep.subr.bf16.mxu0 0
      %2993 = vmatpush2.bf16.msra.mxu0 0
      %2994 = vmatprep.subr.bf16.mxu0 0
      %2995 = vmatpush2.bf16.msra.mxu0 0
      %2996 = vmatprep.subr.bf16.mxu0 0
      %2997 = vmatpush2.bf16.msra.mxu0 0
      %2998 = vmatprep.mubr.bf16.mxu0 0
      %2999 = vmatmul.mubr.bf16.gmra.mxu0 %v2910
      %v3000 = vpop.f32.mrf.mxu0
      %v3001 = vadd.f32 0.0, %v3000
      %v3002 = vpop.f32.mrf.mxu0
      %v3003 = vpop.f32.mrf.mxu0
      %v3004 = vadd.f32 0.0, %v3003
      %v3005 = vpop.f32.mrf.mxu0
      %3006 = vmatprep.mubr.bf16.mxu0 0
      %3007 = vmatmul.mubr.bf16.gmra.mxu0 %v2911
      %v3008 = vpop.f32.mrf.mxu0
      %v3009 = vadd.f32 0.0, %v3008
      %v3010 = vpop.f32.mrf.mxu0
      %v3011 = vpop.f32.mrf.mxu0
      %v3012 = vadd.f32 0.0, %v3011
      %v3013 = vpop.f32.mrf.mxu0
      %3014 = vmatprep.mubr.bf16.mxu0 0
      %3015 = vmatmul.mubr.bf16.gmra.mxu0 %v2912
      %v3016 = vpop.f32.mrf.mxu0
      %v3017 = vadd.f32 0.0, %v3016
      %v3018 = vpop.f32.mrf.mxu0
      %v3019 = vpop.f32.mrf.mxu0
      %v3020 = vadd.f32 0.0, %v3019
      %v3021 = vpop.f32.mrf.mxu0
      %3022 = vmatprep.mubr.bf16.mxu0 0
      %3023 = vmatmul.mubr.bf16.gmra.mxu0 %v2913
      %v3024 = vpop.f32.mrf.mxu0
      %v3025 = vadd.f32 0.0, %v3024
      %v3026 = vpop.f32.mrf.mxu0
      %v3027 = vpop.f32.mrf.mxu0
      %v3028 = vadd.f32 0.0, %v3027
      %v3029 = vpop.f32.mrf.mxu0
      %3030 = vdwg.mxu0
      %v3031 = vadd.f32 %v2796, %v3001
      %v3032 = vadd.f32 %v2799, %v3004
      %v3033 = vadd.f32 %v2804, %v3009
      %v3034 = vadd.f32 %v2807, %v3012
      %v3035 = vadd.f32 %v2812, %v3017
      %v3036 = vadd.f32 %v2815, %v3020
      %v3037 = vadd.f32 %v2820, %v3025
      %v3038 = vadd.f32 %v2823, %v3028
      %v3039 = vld [vmem:[%s2344] sm:$0xf]
      %v3040 = vld [vmem:[%s2344 + $0x8] sm:$0xf]
      %v3041 = vld [vmem:[%s2344 + $0x10] sm:$0xf]
      %v3042 = vld [vmem:[%s2344 + $0x18] sm:$0xf]
      %v3043 = vld [vmem:[%s2344 + $0x20] sm:$0xf]
      %v3044 = vld [vmem:[%s2344 + $0x28] sm:$0xf]
      %v3045 = vld [vmem:[%s2344 + $0x30] sm:$0xf]
      %v3046 = vld [vmem:[%s2344 + $0x38] sm:$0xf]
      %s3047 = scalar_lea.vmem %s3, 192
      %v3048 = vld [vmem:[%s3047] sm:$0xf]
      %v3049 = vld [vmem:[%s3047 + $0x4] sm:$0xf]
      %v3050 = vld [vmem:[%s3047 + $0x8] sm:$0xf]
      %v3051 = vld [vmem:[%s3047 + $0xc] sm:$0xf]
      %v3052 = vld [vmem:[%s3047 + $0x10] sm:$0xf]
      %v3053 = vld [vmem:[%s3047 + $0x14] sm:$0xf]
      %v3054 = vld [vmem:[%s3047 + $0x18] sm:$0xf]
      %v3055 = vld [vmem:[%s3047 + $0x1c] sm:$0xf]
      %v3056 = vld [vmem:[%s3047 + $0x20] sm:$0xf]
      %v3057 = vld [vmem:[%s3047 + $0x24] sm:$0xf]
      %v3058 = vld [vmem:[%s3047 + $0x28] sm:$0xf]
      %v3059 = vld [vmem:[%s3047 + $0x2c] sm:$0xf]
      %v3060 = vld [vmem:[%s3047 + $0x30] sm:$0xf]
      %v3061 = vld [vmem:[%s3047 + $0x34] sm:$0xf]
      %v3062 = vld [vmem:[%s3047 + $0x38] sm:$0xf]
      %v3063 = vld [vmem:[%s3047 + $0x3c] sm:$0xf]
      %v3072 = vunpack.c.l.b16 %v3039
      %v3073 = vunpack.c.l.b16 %v3040
      %v3074 = vunpack.c.l.b16 %v3041
      %v3075 = vunpack.c.l.b16 %v3042
      %v3076 = vunpack.c.l.b16 %v3043
      %v3077 = vunpack.c.l.b16 %v3044
      %v3078 = vunpack.c.l.b16 %v3045
      %v3079 = vunpack.c.l.b16 %v3046
      %v3080 = vpack.c.b16 %v3073, %v3072
      %v3081 = vpack.c.b16 %v3075, %v3074
      %v3082 = vpack.c.b16 %v3077, %v3076
      %v3083 = vpack.c.b16 %v3079, %v3078
      %v3104 = vunpack.c.l.b16 %v3048
      %v3105 = vunpack.c.l.b16 %v3049
      %v3106 = vunpack.c.l.b16 %v3050
      %v3107 = vunpack.c.l.b16 %v3051
      %v3108 = vunpack.c.l.b16 %v3052
      %v3109 = vunpack.c.l.b16 %v3053
      %v3110 = vunpack.c.l.b16 %v3054
      %v3111 = vunpack.c.l.b16 %v3055
      %v3112 = vunpack.c.l.b16 %v3056
      %v3113 = vunpack.c.l.b16 %v3057
      %v3114 = vunpack.c.l.b16 %v3058
      %v3115 = vunpack.c.l.b16 %v3059
      %v3116 = vunpack.c.l.b16 %v3060
      %v3117 = vunpack.c.l.b16 %v3061
      %v3118 = vunpack.c.l.b16 %v3062
      %v3119 = vunpack.c.l.b16 %v3063
      %v3120 = vpack.c.b16 %v3105, %v3104
      %v3121 = vpack.c.b16 %v3107, %v3106
      %v3122 = vpack.c.b16 %v3109, %v3108
      %v3123 = vpack.c.b16 %v3111, %v3110
      %v3124 = vpack.c.b16 %v3113, %v3112
      %v3125 = vpack.c.b16 %v3115, %v3114
      %v3126 = vpack.c.b16 %v3117, %v3116
      %v3127 = vpack.c.b16 %v3119, %v3118
      %3136 = vmatprep.subr.bf16.mxu0 0
      %3137 = vmatpush1.bf16.msra.mxu0 %v3127
      %3138 = vmatprep.subr.bf16.mxu0 0
      %3139 = vmatpush1.bf16.msra.mxu0 %v3126
      %3140 = vmatprep.subr.bf16.mxu0 0
      %3141 = vmatpush1.bf16.msra.mxu0 %v3125
      %3142 = vmatprep.subr.bf16.mxu0 0
      %3143 = vmatpush1.bf16.msra.mxu0 %v3124
      %3144 = vmatprep.subr.bf16.mxu0 0
      %3145 = vmatpush1.bf16.msra.mxu0 %v3123
      %3146 = vmatprep.subr.bf16.mxu0 0
      %3147 = vmatpush1.bf16.msra.mxu0 %v3122
      %3148 = vmatprep.subr.bf16.mxu0 0
      %3149 = vmatpush1.bf16.msra.mxu0 %v3121
      %3150 = vmatprep.subr.bf16.mxu0 0
      %3151 = vmatpush1.bf16.msra.mxu0 %v3120
      %3152 = vmatprep.subr.bf16.mxu0 0
      %3153 = vmatpush2.bf16.msra.mxu0 0
      %3154 = vmatprep.subr.bf16.mxu0 0
      %3155 = vmatpush2.bf16.msra.mxu0 0
      %3156 = vmatprep.subr.bf16.mxu0 0
      %3157 = vmatpush2.bf16.msra.mxu0 0
      %3158 = vmatprep.subr.bf16.mxu0 0
      %3159 = vmatpush2.bf16.msra.mxu0 0
      %3160 = vmatprep.subr.bf16.mxu0 0
      %3161 = vmatpush2.bf16.msra.mxu0 0
      %3162 = vmatprep.subr.bf16.mxu0 0
      %3163 = vmatpush2.bf16.msra.mxu0 0
      %3164 = vmatprep.subr.bf16.mxu0 0
      %3165 = vmatpush2.bf16.msra.mxu0 0
      %3166 = vmatprep.subr.bf16.mxu0 0
      %3167 = vmatpush2.bf16.msra.mxu0 0
      %3168 = vmatprep.mubr.bf16.mxu0 0
      %3169 = vmatmul.mubr.bf16.gmra.mxu0 %v3080
      %v3170 = vpop.f32.mrf.mxu0
      %v3171 = vadd.f32 0.0, %v3170
      %v3172 = vpop.f32.mrf.mxu0
      %v3173 = vpop.f32.mrf.mxu0
      %v3174 = vadd.f32 0.0, %v3173
      %v3175 = vpop.f32.mrf.mxu0
      %3176 = vmatprep.mubr.bf16.mxu0 0
      %3177 = vmatmul.mubr.bf16.gmra.mxu0 %v3081
      %v3178 = vpop.f32.mrf.mxu0
      %v3179 = vadd.f32 0.0, %v3178
      %v3180 = vpop.f32.mrf.mxu0
      %v3181 = vpop.f32.mrf.mxu0
      %v3182 = vadd.f32 0.0, %v3181
      %v3183 = vpop.f32.mrf.mxu0
      %3184 = vmatprep.mubr.bf16.mxu0 0
      %3185 = vmatmul.mubr.bf16.gmra.mxu0 %v3082
      %v3186 = vpop.f32.mrf.mxu0
      %v3187 = vadd.f32 0.0, %v3186
      %v3188 = vpop.f32.mrf.mxu0
      %v3189 = vpop.f32.mrf.mxu0
      %v3190 = vadd.f32 0.0, %v3189
      %v3191 = vpop.f32.mrf.mxu0
      %3192 = vmatprep.mubr.bf16.mxu0 0
      %3193 = vmatmul.mubr.bf16.gmra.mxu0 %v3083
      %v3194 = vpop.f32.mrf.mxu0
      %v3195 = vadd.f32 0.0, %v3194
      %v3196 = vpop.f32.mrf.mxu0
      %v3197 = vpop.f32.mrf.mxu0
      %v3198 = vadd.f32 0.0, %v3197
      %v3199 = vpop.f32.mrf.mxu0
      %3200 = vdwg.mxu0
      %v3201 = vadd.f32 %v3031, %v3171
      %v3202 = vadd.f32 %v3032, %v3174
      %v3203 = vadd.f32 %v3033, %v3179
      %v3204 = vadd.f32 %v3034, %v3182
      %v3205 = vadd.f32 %v3035, %v3187
      %v3206 = vadd.f32 %v3036, %v3190
      %v3207 = vadd.f32 %v3037, %v3195
      %v3208 = vadd.f32 %v3038, %v3198
      %v3209 = vld [vmem:[%s2344] sm:$0xf]
      %v3210 = vld [vmem:[%s2344 + $0x4] sm:$0x1]
      %v3211 = vld [vmem:[%s2344 + $0x8] sm:$0xf]
      %v3212 = vld [vmem:[%s2344 + $0xc] sm:$0x1]
      %v3213 = vld [vmem:[%s2344 + $0x10] sm:$0xf]
      %v3214 = vld [vmem:[%s2344 + $0x14] sm:$0x1]
      %v3215 = vld [vmem:[%s2344 + $0x18] sm:$0xf]
      %v3216 = vld [vmem:[%s2344 + $0x1c] sm:$0x1]
      %v3217 = vld [vmem:[%s2344 + $0x20] sm:$0xf]
      %v3218 = vld [vmem:[%s2344 + $0x24] sm:$0x1]
      %v3219 = vld [vmem:[%s2344 + $0x28] sm:$0xf]
      %v3220 = vld [vmem:[%s2344 + $0x2c] sm:$0x1]
      %v3221 = vld [vmem:[%s2344 + $0x30] sm:$0xf]
      %v3222 = vld [vmem:[%s2344 + $0x34] sm:$0x1]
      %v3223 = vld [vmem:[%s2344 + $0x38] sm:$0xf]
      %v3224 = vld [vmem:[%s2344 + $0x3c] sm:$0x1]
      %v3226 = vshrl.u32 %v3209, 16
      %v3228 = vrot.slane %v3226, 4
      %v3229 = vshll.u32 %v3209, 16
      %v3231 = vrot.slane %v3229, 5
      %v3232 = vor.u32 %v3228, %v3231
      %v3233 = vrot.slane %v3232, 4
      %v3235 = vshll.u32 %v3210, 16
      %v3237 = vrot.slane %v3235, 5
      %v3238 = vsel %vm674, %v3233, %v3237
      %v3240 = vshrl.u32 %v3211, 16
      %v3242 = vrot.slane %v3240, 4
      %v3243 = vshll.u32 %v3211, 16
      %v3245 = vrot.slane %v3243, 5
      %v3246 = vor.u32 %v3242, %v3245
      %v3247 = vrot.slane %v3246, 4
      %v3249 = vshll.u32 %v3212, 16
      %v3251 = vrot.slane %v3249, 5
      %v3252 = vsel %vm674, %v3247, %v3251
      %v3254 = vshrl.u32 %v3213, 16
      %v3256 = vrot.slane %v3254, 4
      %v3257 = vshll.u32 %v3213, 16
      %v3259 = vrot.slane %v3257, 5
      %v3260 = vor.u32 %v3256, %v3259
      %v3261 = vrot.slane %v3260, 4
      %v3263 = vshll.u32 %v3214, 16
      %v3265 = vrot.slane %v3263, 5
      %v3266 = vsel %vm674, %v3261, %v3265
      %v3268 = vshrl.u32 %v3215, 16
      %v3270 = vrot.slane %v3268, 4
      %v3271 = vshll.u32 %v3215, 16
      %v3273 = vrot.slane %v3271, 5
      %v3274 = vor.u32 %v3270, %v3273
      %v3275 = vrot.slane %v3274, 4
      %v3277 = vshll.u32 %v3216, 16
      %v3279 = vrot.slane %v3277, 5
      %v3280 = vsel %vm674, %v3275, %v3279
      %v3282 = vshrl.u32 %v3217, 16
      %v3284 = vrot.slane %v3282, 4
      %v3285 = vshll.u32 %v3217, 16
      %v3287 = vrot.slane %v3285, 5
      %v3288 = vor.u32 %v3284, %v3287
      %v3289 = vrot.slane %v3288, 4
      %v3291 = vshll.u32 %v3218, 16
      %v3293 = vrot.slane %v3291, 5
      %v3294 = vsel %vm674, %v3289, %v3293
      %v3296 = vshrl.u32 %v3219, 16
      %v3298 = vrot.slane %v3296, 4
      %v3299 = vshll.u32 %v3219, 16
      %v3301 = vrot.slane %v3299, 5
      %v3302 = vor.u32 %v3298, %v3301
      %v3303 = vrot.slane %v3302, 4
      %v3305 = vshll.u32 %v3220, 16
      %v3307 = vrot.slane %v3305, 5
      %v3308 = vsel %vm674, %v3303, %v3307
      %v3310 = vshrl.u32 %v3221, 16
      %v3312 = vrot.slane %v3310, 4
      %v3313 = vshll.u32 %v3221, 16
      %v3315 = vrot.slane %v3313, 5
      %v3316 = vor.u32 %v3312, %v3315
      %v3317 = vrot.slane %v3316, 4
      %v3319 = vshll.u32 %v3222, 16
      %v3321 = vrot.slane %v3319, 5
      %v3322 = vsel %vm674, %v3317, %v3321
      %v3324 = vshrl.u32 %v3223, 16
      %v3326 = vrot.slane %v3324, 4
      %v3327 = vshll.u32 %v3223, 16
      %v3329 = vrot.slane %v3327, 5
      %v3330 = vor.u32 %v3326, %v3329
      %v3331 = vrot.slane %v3330, 4
      %v3333 = vshll.u32 %v3224, 16
      %v3335 = vrot.slane %v3333, 5
      %v3336 = vsel %vm674, %v3331, %v3335
      %s3337 = scalar_lea.vmem %s3, 256
      %v3338 = vld [vmem:[%s3337] sm:$0xf]
      %v3339 = vld [vmem:[%s3337 + $0x4] sm:$0xf]
      %v3340 = vld [vmem:[%s3337 + $0x8] sm:$0xf]
      %v3341 = vld [vmem:[%s3337 + $0xc] sm:$0xf]
      %v3342 = vld [vmem:[%s3337 + $0x10] sm:$0xf]
      %v3343 = vld [vmem:[%s3337 + $0x14] sm:$0xf]
      %v3344 = vld [vmem:[%s3337 + $0x18] sm:$0xf]
      %v3345 = vld [vmem:[%s3337 + $0x1c] sm:$0xf]
      %v3346 = vld [vmem:[%s3337 + $0x20] sm:$0xf]
      %v3347 = vld [vmem:[%s3337 + $0x24] sm:$0xf]
      %v3348 = vld [vmem:[%s3337 + $0x28] sm:$0xf]
      %v3349 = vld [vmem:[%s3337 + $0x2c] sm:$0xf]
      %v3350 = vld [vmem:[%s3337 + $0x30] sm:$0xf]
      %v3351 = vld [vmem:[%s3337 + $0x34] sm:$0xf]
      %v3352 = vld [vmem:[%s3337 + $0x38] sm:$0xf]
      %v3353 = vld [vmem:[%s3337 + $0x3c] sm:$0xf]
      %v3354 = vunpack.c.l.b16 %v3238
      %v3355 = vunpack.c.l.b16 %v3252
      %v3356 = vunpack.c.l.b16 %v3266
      %v3357 = vunpack.c.l.b16 %v3280
      %v3358 = vunpack.c.l.b16 %v3294
      %v3359 = vunpack.c.l.b16 %v3308
      %v3360 = vunpack.c.l.b16 %v3322
      %v3361 = vunpack.c.l.b16 %v3336
      %v3362 = vpack.c.b16 %v3355, %v3354
      %v3363 = vpack.c.b16 %v3357, %v3356
      %v3364 = vpack.c.b16 %v3359, %v3358
      %v3365 = vpack.c.b16 %v3361, %v3360
      %v3386 = vunpack.c.l.b16 %v3338
      %v3387 = vunpack.c.l.b16 %v3339
      %v3388 = vunpack.c.l.b16 %v3340
      %v3389 = vunpack.c.l.b16 %v3341
      %v3390 = vunpack.c.l.b16 %v3342
      %v3391 = vunpack.c.l.b16 %v3343
      %v3392 = vunpack.c.l.b16 %v3344
      %v3393 = vunpack.c.l.b16 %v3345
      %v3394 = vunpack.c.l.b16 %v3346
      %v3395 = vunpack.c.l.b16 %v3347
      %v3396 = vunpack.c.l.b16 %v3348
      %v3397 = vunpack.c.l.b16 %v3349
      %v3398 = vunpack.c.l.b16 %v3350
      %v3399 = vunpack.c.l.b16 %v3351
      %v3400 = vunpack.c.l.b16 %v3352
      %v3401 = vunpack.c.l.b16 %v3353
      %v3402 = vpack.c.b16 %v3387, %v3386
      %v3403 = vpack.c.b16 %v3389, %v3388
      %v3404 = vpack.c.b16 %v3391, %v3390
      %v3405 = vpack.c.b16 %v3393, %v3392
      %v3406 = vpack.c.b16 %v3395, %v3394
      %v3407 = vpack.c.b16 %v3397, %v3396
      %v3408 = vpack.c.b16 %v3399, %v3398
      %v3409 = vpack.c.b16 %v3401, %v3400
      %3418 = vmatprep.subr.bf16.mxu0 0
      %3419 = vmatpush1.bf16.msra.mxu0 %v3409
      %3420 = vmatprep.subr.bf16.mxu0 0
      %3421 = vmatpush1.bf16.msra.mxu0 %v3408
      %3422 = vmatprep.subr.bf16.mxu0 0
      %3423 = vmatpush1.bf16.msra.mxu0 %v3407
      %3424 = vmatprep.subr.bf16.mxu0 0
      %3425 = vmatpush1.bf16.msra.mxu0 %v3406
      %3426 = vmatprep.subr.bf16.mxu0 0
      %3427 = vmatpush1.bf16.msra.mxu0 %v3405
      %3428 = vmatprep.subr.bf16.mxu0 0
      %3429 = vmatpush1.bf16.msra.mxu0 %v3404
      %3430 = vmatprep.subr.bf16.mxu0 0
      %3431 = vmatpush1.bf16.msra.mxu0 %v3403
      %3432 = vmatprep.subr.bf16.mxu0 0
      %3433 = vmatpush1.bf16.msra.mxu0 %v3402
      %3434 = vmatprep.subr.bf16.mxu0 0
      %3435 = vmatpush2.bf16.msra.mxu0 0
      %3436 = vmatprep.subr.bf16.mxu0 0
      %3437 = vmatpush2.bf16.msra.mxu0 0
      %3438 = vmatprep.subr.bf16.mxu0 0
      %3439 = vmatpush2.bf16.msra.mxu0 0
      %3440 = vmatprep.subr.bf16.mxu0 0
      %3441 = vmatpush2.bf16.msra.mxu0 0
      %3442 = vmatprep.subr.bf16.mxu0 0
      %3443 = vmatpush2.bf16.msra.mxu0 0
      %3444 = vmatprep.subr.bf16.mxu0 0
      %3445 = vmatpush2.bf16.msra.mxu0 0
      %3446 = vmatprep.subr.bf16.mxu0 0
      %3447 = vmatpush2.bf16.msra.mxu0 0
      %3448 = vmatprep.subr.bf16.mxu0 0
      %3449 = vmatpush2.bf16.msra.mxu0 0
      %3450 = vmatprep.mubr.bf16.mxu0 0
      %3451 = vmatmul.mubr.bf16.gmra.mxu0 %v3362
      %v3452 = vpop.f32.mrf.mxu0
      %v3453 = vadd.f32 0.0, %v3452
      %v3454 = vpop.f32.mrf.mxu0
      %v3455 = vpop.f32.mrf.mxu0
      %v3456 = vadd.f32 0.0, %v3455
      %v3457 = vpop.f32.mrf.mxu0
      %3458 = vmatprep.mubr.bf16.mxu0 0
      %3459 = vmatmul.mubr.bf16.gmra.mxu0 %v3363
      %v3460 = vpop.f32.mrf.mxu0
      %v3461 = vadd.f32 0.0, %v3460
      %v3462 = vpop.f32.mrf.mxu0
      %v3463 = vpop.f32.mrf.mxu0
      %v3464 = vadd.f32 0.0, %v3463
      %v3465 = vpop.f32.mrf.mxu0
      %3466 = vmatprep.mubr.bf16.mxu0 0
      %3467 = vmatmul.mubr.bf16.gmra.mxu0 %v3364
      %v3468 = vpop.f32.mrf.mxu0
      %v3469 = vadd.f32 0.0, %v3468
      %v3470 = vpop.f32.mrf.mxu0
      %v3471 = vpop.f32.mrf.mxu0
      %v3472 = vadd.f32 0.0, %v3471
      %v3473 = vpop.f32.mrf.mxu0
      %3474 = vmatprep.mubr.bf16.mxu0 0
      %3475 = vmatmul.mubr.bf16.gmra.mxu0 %v3365
      %v3476 = vpop.f32.mrf.mxu0
      %v3477 = vadd.f32 0.0, %v3476
      %v3478 = vpop.f32.mrf.mxu0
      %v3479 = vpop.f32.mrf.mxu0
      %v3480 = vadd.f32 0.0, %v3479
      %v3481 = vpop.f32.mrf.mxu0
      %3482 = vdwg.mxu0
      %v3483 = vadd.f32 %v3201, %v3453
      %v3484 = vadd.f32 %v3202, %v3456
      %v3485 = vadd.f32 %v3203, %v3461
      %v3486 = vadd.f32 %v3204, %v3464
      %v3487 = vadd.f32 %v3205, %v3469
      %v3488 = vadd.f32 %v3206, %v3472
      %v3489 = vadd.f32 %v3207, %v3477
      %v3490 = vadd.f32 %v3208, %v3480
      %v3491 = vld [vmem:[%s2344] sm:$0xe]
      %v3492 = vld [vmem:[%s2344 + $0x8] sm:$0xe]
      %v3493 = vld [vmem:[%s2344 + $0x10] sm:$0xe]
      %v3494 = vld [vmem:[%s2344 + $0x18] sm:$0xe]
      %v3495 = vld [vmem:[%s2344 + $0x20] sm:$0xe]
      %v3496 = vld [vmem:[%s2344 + $0x28] sm:$0xe]
      %v3497 = vld [vmem:[%s2344 + $0x30] sm:$0xe]
      %v3498 = vld [vmem:[%s2344 + $0x38] sm:$0xe]
      %v3515 = vrot.slane %v3491, 5
      %v3516 = vrot.slane %v3515, 4
      %v3517 = vrot.slane %v3210, 5
      %v3518 = vsel %vm2852, %v3516, %v3517
      %v3519 = vrot.slane %v3492, 5
      %v3520 = vrot.slane %v3519, 4
      %v3521 = vrot.slane %v3212, 5
      %v3522 = vsel %vm2852, %v3520, %v3521
      %v3523 = vrot.slane %v3493, 5
      %v3524 = vrot.slane %v3523, 4
      %v3525 = vrot.slane %v3214, 5
      %v3526 = vsel %vm2852, %v3524, %v3525
      %v3527 = vrot.slane %v3494, 5
      %v3528 = vrot.slane %v3527, 4
      %v3529 = vrot.slane %v3216, 5
      %v3530 = vsel %vm2852, %v3528, %v3529
      %v3531 = vrot.slane %v3495, 5
      %v3532 = vrot.slane %v3531, 4
      %v3533 = vrot.slane %v3218, 5
      %v3534 = vsel %vm2852, %v3532, %v3533
      %v3535 = vrot.slane %v3496, 5
      %v3536 = vrot.slane %v3535, 4
      %v3537 = vrot.slane %v3220, 5
      %v3538 = vsel %vm2852, %v3536, %v3537
      %v3539 = vrot.slane %v3497, 5
      %v3540 = vrot.slane %v3539, 4
      %v3541 = vrot.slane %v3222, 5
      %v3542 = vsel %vm2852, %v3540, %v3541
      %v3543 = vrot.slane %v3498, 5
      %v3544 = vrot.slane %v3543, 4
      %v3545 = vrot.slane %v3224, 5
      %v3546 = vsel %vm2852, %v3544, %v3545
      %s3547 = scalar_lea.vmem %s3, 320
      %v3548 = vld [vmem:[%s3547] sm:$0xf]
      %v3549 = vld [vmem:[%s3547 + $0x4] sm:$0xf]
      %v3550 = vld [vmem:[%s3547 + $0x8] sm:$0xf]
      %v3551 = vld [vmem:[%s3547 + $0xc] sm:$0xf]
      %v3552 = vld [vmem:[%s3547 + $0x10] sm:$0xf]
      %v3553 = vld [vmem:[%s3547 + $0x14] sm:$0xf]
      %v3554 = vld [vmem:[%s3547 + $0x18] sm:$0xf]
      %v3555 = vld [vmem:[%s3547 + $0x1c] sm:$0xf]
      %v3556 = vld [vmem:[%s3547 + $0x20] sm:$0xf]
      %v3557 = vld [vmem:[%s3547 + $0x24] sm:$0xf]
      %v3558 = vld [vmem:[%s3547 + $0x28] sm:$0xf]
      %v3559 = vld [vmem:[%s3547 + $0x2c] sm:$0xf]
      %v3560 = vld [vmem:[%s3547 + $0x30] sm:$0xf]
      %v3561 = vld [vmem:[%s3547 + $0x34] sm:$0xf]
      %v3562 = vld [vmem:[%s3547 + $0x38] sm:$0xf]
      %v3563 = vld [vmem:[%s3547 + $0x3c] sm:$0xf]
      %v3564 = vunpack.c.l.b16 %v3518
      %v3565 = vunpack.c.l.b16 %v3522
      %v3566 = vunpack.c.l.b16 %v3526
      %v3567 = vunpack.c.l.b16 %v3530
      %v3568 = vunpack.c.l.b16 %v3534
      %v3569 = vunpack.c.l.b16 %v3538
      %v3570 = vunpack.c.l.b16 %v3542
      %v3571 = vunpack.c.l.b16 %v3546
      %v3572 = vpack.c.b16 %v3565, %v3564
      %v3573 = vpack.c.b16 %v3567, %v3566
      %v3574 = vpack.c.b16 %v3569, %v3568
      %v3575 = vpack.c.b16 %v3571, %v3570
      %v3596 = vunpack.c.l.b16 %v3548
      %v3597 = vunpack.c.l.b16 %v3549
      %v3598 = vunpack.c.l.b16 %v3550
      %v3599 = vunpack.c.l.b16 %v3551
      %v3600 = vunpack.c.l.b16 %v3552
      %v3601 = vunpack.c.l.b16 %v3553
      %v3602 = vunpack.c.l.b16 %v3554
      %v3603 = vunpack.c.l.b16 %v3555
      %v3604 = vunpack.c.l.b16 %v3556
      %v3605 = vunpack.c.l.b16 %v3557
      %v3606 = vunpack.c.l.b16 %v3558
      %v3607 = vunpack.c.l.b16 %v3559
      %v3608 = vunpack.c.l.b16 %v3560
      %v3609 = vunpack.c.l.b16 %v3561
      %v3610 = vunpack.c.l.b16 %v3562
      %v3611 = vunpack.c.l.b16 %v3563
      %v3612 = vpack.c.b16 %v3597, %v3596
      %v3613 = vpack.c.b16 %v3599, %v3598
      %v3614 = vpack.c.b16 %v3601, %v3600
      %v3615 = vpack.c.b16 %v3603, %v3602
      %v3616 = vpack.c.b16 %v3605, %v3604
      %v3617 = vpack.c.b16 %v3607, %v3606
      %v3618 = vpack.c.b16 %v3609, %v3608
      %v3619 = vpack.c.b16 %v3611, %v3610
      %3628 = vmatprep.subr.bf16.mxu0 0
      %3629 = vmatpush1.bf16.msra.mxu0 %v3619
      %3630 = vmatprep.subr.bf16.mxu0 0
      %3631 = vmatpush1.bf16.msra.mxu0 %v3618
      %3632 = vmatprep.subr.bf16.mxu0 0
      %3633 = vmatpush1.bf16.msra.mxu0 %v3617
      %3634 = vmatprep.subr.bf16.mxu0 0
      %3635 = vmatpush1.bf16.msra.mxu0 %v3616
      %3636 = vmatprep.subr.bf16.mxu0 0
      %3637 = vmatpush1.bf16.msra.mxu0 %v3615
      %3638 = vmatprep.subr.bf16.mxu0 0
      %3639 = vmatpush1.bf16.msra.mxu0 %v3614
      %3640 = vmatprep.subr.bf16.mxu0 0
      %3641 = vmatpush1.bf16.msra.mxu0 %v3613
      %3642 = vmatprep.subr.bf16.mxu0 0
      %3643 = vmatpush1.bf16.msra.mxu0 %v3612
      %3644 = vmatprep.subr.bf16.mxu0 0
      %3645 = vmatpush2.bf16.msra.mxu0 0
      %3646 = vmatprep.subr.bf16.mxu0 0
      %3647 = vmatpush2.bf16.msra.mxu0 0
      %3648 = vmatprep.subr.bf16.mxu0 0
      %3649 = vmatpush2.bf16.msra.mxu0 0
      %3650 = vmatprep.subr.bf16.mxu0 0
      %3651 = vmatpush2.bf16.msra.mxu0 0
      %3652 = vmatprep.subr.bf16.mxu0 0
      %3653 = vmatpush2.bf16.msra.mxu0 0
      %3654 = vmatprep.subr.bf16.mxu0 0
      %3655 = vmatpush2.bf16.msra.mxu0 0
      %3656 = vmatprep.subr.bf16.mxu0 0
      %3657 = vmatpush2.bf16.msra.mxu0 0
      %3658 = vmatprep.subr.bf16.mxu0 0
      %3659 = vmatpush2.bf16.msra.mxu0 0
      %3660 = vmatprep.mubr.bf16.mxu0 0
      %3661 = vmatmul.mubr.bf16.gmra.mxu0 %v3572
      %v3662 = vpop.f32.mrf.mxu0
      %v3663 = vadd.f32 0.0, %v3662
      %v3664 = vpop.f32.mrf.mxu0
      %v3665 = vpop.f32.mrf.mxu0
      %v3666 = vadd.f32 0.0, %v3665
      %v3667 = vpop.f32.mrf.mxu0
      %3668 = vmatprep.mubr.bf16.mxu0 0
      %3669 = vmatmul.mubr.bf16.gmra.mxu0 %v3573
      %v3670 = vpop.f32.mrf.mxu0
      %v3671 = vadd.f32 0.0, %v3670
      %v3672 = vpop.f32.mrf.mxu0
      %v3673 = vpop.f32.mrf.mxu0
      %v3674 = vadd.f32 0.0, %v3673
      %v3675 = vpop.f32.mrf.mxu0
      %3676 = vmatprep.mubr.bf16.mxu0 0
      %3677 = vmatmul.mubr.bf16.gmra.mxu0 %v3574
      %v3678 = vpop.f32.mrf.mxu0
      %v3679 = vadd.f32 0.0, %v3678
      %v3680 = vpop.f32.mrf.mxu0
      %v3681 = vpop.f32.mrf.mxu0
      %v3682 = vadd.f32 0.0, %v3681
      %v3683 = vpop.f32.mrf.mxu0
      %3684 = vmatprep.mubr.bf16.mxu0 0
      %3685 = vmatmul.mubr.bf16.gmra.mxu0 %v3575
      %v3686 = vpop.f32.mrf.mxu0
      %v3687 = vadd.f32 0.0, %v3686
      %v3688 = vpop.f32.mrf.mxu0
      %v3689 = vpop.f32.mrf.mxu0
      %v3690 = vadd.f32 0.0, %v3689
      %v3691 = vpop.f32.mrf.mxu0
      %3692 = vdwg.mxu0
      %v3693 = vadd.f32 %v3483, %v3663
      %v3694 = vadd.f32 %v3484, %v3666
      %v3695 = vadd.f32 %v3485, %v3671
      %v3696 = vadd.f32 %v3486, %v3674
      %v3697 = vadd.f32 %v3487, %v3679
      %v3698 = vadd.f32 %v3488, %v3682
      %v3699 = vadd.f32 %v3489, %v3687
      %v3700 = vadd.f32 %v3490, %v3690
      %s3701 = scalar_lea.vmem [#allocation2], 16
      %v3702 = vld [vmem:[%s3701] sm:$0xf]
      %v3703 = vld [vmem:[%s3701 + $0x8] sm:$0xf]
      %v3704 = vld [vmem:[%s3701 + $0x10] sm:$0xf]
      %v3705 = vld [vmem:[%s3701 + $0x18] sm:$0xf]
      %v3706 = vld [vmem:[%s3701 + $0x20] sm:$0xf]
      %v3707 = vld [vmem:[%s3701 + $0x28] sm:$0xf]
      %v3708 = vld [vmem:[%s3701 + $0x30] sm:$0xf]
      %v3709 = vld [vmem:[%s3701 + $0x38] sm:$0xf]
      %s3710 = scalar_lea.vmem %s3, 384
      %v3711 = vld [vmem:[%s3710] sm:$0xf]
      %v3712 = vld [vmem:[%s3710 + $0x4] sm:$0xf]
      %v3713 = vld [vmem:[%s3710 + $0x8] sm:$0xf]
      %v3714 = vld [vmem:[%s3710 + $0xc] sm:$0xf]
      %v3715 = vld [vmem:[%s3710 + $0x10] sm:$0xf]
      %v3716 = vld [vmem:[%s3710 + $0x14] sm:$0xf]
      %v3717 = vld [vmem:[%s3710 + $0x18] sm:$0xf]
      %v3718 = vld [vmem:[%s3710 + $0x1c] sm:$0xf]
      %v3719 = vld [vmem:[%s3710 + $0x20] sm:$0xf]
      %v3720 = vld [vmem:[%s3710 + $0x24] sm:$0xf]
      %v3721 = vld [vmem:[%s3710 + $0x28] sm:$0xf]
      %v3722 = vld [vmem:[%s3710 + $0x2c] sm:$0xf]
      %v3723 = vld [vmem:[%s3710 + $0x30] sm:$0xf]
      %v3724 = vld [vmem:[%s3710 + $0x34] sm:$0xf]
      %v3725 = vld [vmem:[%s3710 + $0x38] sm:$0xf]
      %v3726 = vld [vmem:[%s3710 + $0x3c] sm:$0xf]
      %v3735 = vunpack.c.l.b16 %v3702
      %v3736 = vunpack.c.l.b16 %v3703
      %v3737 = vunpack.c.l.b16 %v3704
      %v3738 = vunpack.c.l.b16 %v3705
      %v3739 = vunpack.c.l.b16 %v3706
      %v3740 = vunpack.c.l.b16 %v3707
      %v3741 = vunpack.c.l.b16 %v3708
      %v3742 = vunpack.c.l.b16 %v3709
      %v3743 = vpack.c.b16 %v3736, %v3735
      %v3744 = vpack.c.b16 %v3738, %v3737
      %v3745 = vpack.c.b16 %v3740, %v3739
      %v3746 = vpack.c.b16 %v3742, %v3741
      %v3767 = vunpack.c.l.b16 %v3711
      %v3768 = vunpack.c.l.b16 %v3712
      %v3769 = vunpack.c.l.b16 %v3713
      %v3770 = vunpack.c.l.b16 %v3714
      %v3771 = vunpack.c.l.b16 %v3715
      %v3772 = vunpack.c.l.b16 %v3716
      %v3773 = vunpack.c.l.b16 %v3717
      %v3774 = vunpack.c.l.b16 %v3718
      %v3775 = vunpack.c.l.b16 %v3719
      %v3776 = vunpack.c.l.b16 %v3720
      %v3777 = vunpack.c.l.b16 %v3721
      %v3778 = vunpack.c.l.b16 %v3722
      %v3779 = vunpack.c.l.b16 %v3723
      %v3780 = vunpack.c.l.b16 %v3724
      %v3781 = vunpack.c.l.b16 %v3725
      %v3782 = vunpack.c.l.b16 %v3726
      %v3783 = vpack.c.b16 %v3768, %v3767
      %v3784 = vpack.c.b16 %v3770, %v3769
      %v3785 = vpack.c.b16 %v3772, %v3771
      %v3786 = vpack.c.b16 %v3774, %v3773
      %v3787 = vpack.c.b16 %v3776, %v3775
      %v3788 = vpack.c.b16 %v3778, %v3777
      %v3789 = vpack.c.b16 %v3780, %v3779
      %v3790 = vpack.c.b16 %v3782, %v3781
      %3799 = vmatprep.subr.bf16.mxu0 0
      %3800 = vmatpush1.bf16.msra.mxu0 %v3790
      %3801 = vmatprep.subr.bf16.mxu0 0
      %3802 = vmatpush1.bf16.msra.mxu0 %v3789
      %3803 = vmatprep.subr.bf16.mxu0 0
      %3804 = vmatpush1.bf16.msra.mxu0 %v3788
      %3805 = vmatprep.subr.bf16.mxu0 0
      %3806 = vmatpush1.bf16.msra.mxu0 %v3787
      %3807 = vmatprep.subr.bf16.mxu0 0
      %3808 = vmatpush1.bf16.msra.mxu0 %v3786
      %3809 = vmatprep.subr.bf16.mxu0 0
      %3810 = vmatpush1.bf16.msra.mxu0 %v3785
      %3811 = vmatprep.subr.bf16.mxu0 0
      %3812 = vmatpush1.bf16.msra.mxu0 %v3784
      %3813 = vmatprep.subr.bf16.mxu0 0
      %3814 = vmatpush1.bf16.msra.mxu0 %v3783
      %3815 = vmatprep.subr.bf16.mxu0 0
      %3816 = vmatpush2.bf16.msra.mxu0 0
      %3817 = vmatprep.subr.bf16.mxu0 0
      %3818 = vmatpush2.bf16.msra.mxu0 0
      %3819 = vmatprep.subr.bf16.mxu0 0
      %3820 = vmatpush2.bf16.msra.mxu0 0
      %3821 = vmatprep.subr.bf16.mxu0 0
      %3822 = vmatpush2.bf16.msra.mxu0 0
      %3823 = vmatprep.subr.bf16.mxu0 0
      %3824 = vmatpush2.bf16.msra.mxu0 0
      %3825 = vmatprep.subr.bf16.mxu0 0
      %3826 = vmatpush2.bf16.msra.mxu0 0
      %3827 = vmatprep.subr.bf16.mxu0 0
      %3828 = vmatpush2.bf16.msra.mxu0 0
      %3829 = vmatprep.subr.bf16.mxu0 0
      %3830 = vmatpush2.bf16.msra.mxu0 0
      %3831 = vmatprep.mubr.bf16.mxu0 0
      %3832 = vmatmul.mubr.bf16.gmra.mxu0 %v3743
      %v3833 = vpop.f32.mrf.mxu0
      %v3834 = vadd.f32 0.0, %v3833
      %v3835 = vpop.f32.mrf.mxu0
      %v3836 = vpop.f32.mrf.mxu0
      %v3837 = vadd.f32 0.0, %v3836
      %v3838 = vpop.f32.mrf.mxu0
      %3839 = vmatprep.mubr.bf16.mxu0 0
      %3840 = vmatmul.mubr.bf16.gmra.mxu0 %v3744
      %v3841 = vpop.f32.mrf.mxu0
      %v3842 = vadd.f32 0.0, %v3841
      %v3843 = vpop.f32.mrf.mxu0
      %v3844 = vpop.f32.mrf.mxu0
      %v3845 = vadd.f32 0.0, %v3844
      %v3846 = vpop.f32.mrf.mxu0
      %3847 = vmatprep.mubr.bf16.mxu0 0
      %3848 = vmatmul.mubr.bf16.gmra.mxu0 %v3745
      %v3849 = vpop.f32.mrf.mxu0
      %v3850 = vadd.f32 0.0, %v3849
      %v3851 = vpop.f32.mrf.mxu0
      %v3852 = vpop.f32.mrf.mxu0
      %v3853 = vadd.f32 0.0, %v3852
      %v3854 = vpop.f32.mrf.mxu0
      %3855 = vmatprep.mubr.bf16.mxu0 0
      %3856 = vmatmul.mubr.bf16.gmra.mxu0 %v3746
      %v3857 = vpop.f32.mrf.mxu0
      %v3858 = vadd.f32 0.0, %v3857
      %v3859 = vpop.f32.mrf.mxu0
      %v3860 = vpop.f32.mrf.mxu0
      %v3861 = vadd.f32 0.0, %v3860
      %v3862 = vpop.f32.mrf.mxu0
      %3863 = vdwg.mxu0
      %v3864 = vadd.f32 %v3693, %v3834
      %v3865 = vadd.f32 %v3694, %v3837
      %v3866 = vadd.f32 %v3695, %v3842
      %v3867 = vadd.f32 %v3696, %v3845
      %v3868 = vadd.f32 %v3697, %v3850
      %v3869 = vadd.f32 %v3698, %v3853
      %v3870 = vadd.f32 %v3699, %v3858
      %v3871 = vadd.f32 %v3700, %v3861
      %v3872 = vld [vmem:[%s3701] sm:$0xf]
      %v3873 = vld [vmem:[%s3701 + $0x4] sm:$0x1]
      %v3874 = vld [vmem:[%s3701 + $0x8] sm:$0xf]
      %v3875 = vld [vmem:[%s3701 + $0xc] sm:$0x1]
      %v3876 = vld [vmem:[%s3701 + $0x10] sm:$0xf]
      %v3877 = vld [vmem:[%s3701 + $0x14] sm:$0x1]
      %v3878 = vld [vmem:[%s3701 + $0x18] sm:$0xf]
      %v3879 = vld [vmem:[%s3701 + $0x1c] sm:$0x1]
      %v3880 = vld [vmem:[%s3701 + $0x20] sm:$0xf]
      %v3881 = vld [vmem:[%s3701 + $0x24] sm:$0x1]
      %v3882 = vld [vmem:[%s3701 + $0x28] sm:$0xf]
      %v3883 = vld [vmem:[%s3701 + $0x2c] sm:$0x1]
      %v3884 = vld [vmem:[%s3701 + $0x30] sm:$0xf]
      %v3885 = vld [vmem:[%s3701 + $0x34] sm:$0x1]
      %v3886 = vld [vmem:[%s3701 + $0x38] sm:$0xf]
      %v3887 = vld [vmem:[%s3701 + $0x3c] sm:$0x1]
      %v3889 = vshrl.u32 %v3872, 16
      %v3891 = vrot.slane %v3889, 4
      %v3892 = vshll.u32 %v3872, 16
      %v3894 = vrot.slane %v3892, 5
      %v3895 = vor.u32 %v3891, %v3894
      %v3896 = vrot.slane %v3895, 4
      %v3898 = vshll.u32 %v3873, 16
      %v3900 = vrot.slane %v3898, 5
      %v3901 = vsel %vm674, %v3896, %v3900
      %v3903 = vshrl.u32 %v3874, 16
      %v3905 = vrot.slane %v3903, 4
      %v3906 = vshll.u32 %v3874, 16
      %v3908 = vrot.slane %v3906, 5
      %v3909 = vor.u32 %v3905, %v3908
      %v3910 = vrot.slane %v3909, 4
      %v3912 = vshll.u32 %v3875, 16
      %v3914 = vrot.slane %v3912, 5
      %v3915 = vsel %vm674, %v3910, %v3914
      %v3917 = vshrl.u32 %v3876, 16
      %v3919 = vrot.slane %v3917, 4
      %v3920 = vshll.u32 %v3876, 16
      %v3922 = vrot.slane %v3920, 5
      %v3923 = vor.u32 %v3919, %v3922
      %v3924 = vrot.slane %v3923, 4
      %v3926 = vshll.u32 %v3877, 16
      %v3928 = vrot.slane %v3926, 5
      %v3929 = vsel %vm674, %v3924, %v3928
      %v3931 = vshrl.u32 %v3878, 16
      %v3933 = vrot.slane %v3931, 4
      %v3934 = vshll.u32 %v3878, 16
      %v3936 = vrot.slane %v3934, 5
      %v3937 = vor.u32 %v3933, %v3936
      %v3938 = vrot.slane %v3937, 4
      %v3940 = vshll.u32 %v3879, 16
      %v3942 = vrot.slane %v3940, 5
      %v3943 = vsel %vm674, %v3938, %v3942
      %v3945 = vshrl.u32 %v3880, 16
      %v3947 = vrot.slane %v3945, 4
      %v3948 = vshll.u32 %v3880, 16
      %v3950 = vrot.slane %v3948, 5
      %v3951 = vor.u32 %v3947, %v3950
      %v3952 = vrot.slane %v3951, 4
      %v3954 = vshll.u32 %v3881, 16
      %v3956 = vrot.slane %v3954, 5
      %v3957 = vsel %vm674, %v3952, %v3956
      %v3959 = vshrl.u32 %v3882, 16
      %v3961 = vrot.slane %v3959, 4
      %v3962 = vshll.u32 %v3882, 16
      %v3964 = vrot.slane %v3962, 5
      %v3965 = vor.u32 %v3961, %v3964
      %v3966 = vrot.slane %v3965, 4
      %v3968 = vshll.u32 %v3883, 16
      %v3970 = vrot.slane %v3968, 5
      %v3971 = vsel %vm674, %v3966, %v3970
      %v3973 = vshrl.u32 %v3884, 16
      %v3975 = vrot.slane %v3973, 4
      %v3976 = vshll.u32 %v3884, 16
      %v3978 = vrot.slane %v3976, 5
      %v3979 = vor.u32 %v3975, %v3978
      %v3980 = vrot.slane %v3979, 4
      %v3982 = vshll.u32 %v3885, 16
      %v3984 = vrot.slane %v3982, 5
      %v3985 = vsel %vm674, %v3980, %v3984
      %v3987 = vshrl.u32 %v3886, 16
      %v3989 = vrot.slane %v3987, 4
      %v3990 = vshll.u32 %v3886, 16
      %v3992 = vrot.slane %v3990, 5
      %v3993 = vor.u32 %v3989, %v3992
      %v3994 = vrot.slane %v3993, 4
      %v3996 = vshll.u32 %v3887, 16
      %v3998 = vrot.slane %v3996, 5
      %v3999 = vsel %vm674, %v3994, %v3998
      %s4000 = scalar_lea.vmem %s3, 448
      %v4001 = vld [vmem:[%s4000] sm:$0xf]
      %v4002 = vld [vmem:[%s4000 + $0x4] sm:$0xf]
      %v4003 = vld [vmem:[%s4000 + $0x8] sm:$0xf]
      %v4004 = vld [vmem:[%s4000 + $0xc] sm:$0xf]
      %v4005 = vld [vmem:[%s4000 + $0x10] sm:$0xf]
      %v4006 = vld [vmem:[%s4000 + $0x14] sm:$0xf]
      %v4007 = vld [vmem:[%s4000 + $0x18] sm:$0xf]
      %v4008 = vld [vmem:[%s4000 + $0x1c] sm:$0xf]
      %v4009 = vld [vmem:[%s4000 + $0x20] sm:$0xf]
      %v4010 = vld [vmem:[%s4000 + $0x24] sm:$0xf]
      %v4011 = vld [vmem:[%s4000 + $0x28] sm:$0xf]
      %v4012 = vld [vmem:[%s4000 + $0x2c] sm:$0xf]
      %v4013 = vld [vmem:[%s4000 + $0x30] sm:$0xf]
      %v4014 = vld [vmem:[%s4000 + $0x34] sm:$0xf]
      %v4015 = vld [vmem:[%s4000 + $0x38] sm:$0xf]
      %v4016 = vld [vmem:[%s4000 + $0x3c] sm:$0xf]
      %v4017 = vunpack.c.l.b16 %v3901
      %v4018 = vunpack.c.l.b16 %v3915
      %v4019 = vunpack.c.l.b16 %v3929
      %v4020 = vunpack.c.l.b16 %v3943
      %v4021 = vunpack.c.l.b16 %v3957
      %v4022 = vunpack.c.l.b16 %v3971
      %v4023 = vunpack.c.l.b16 %v3985
      %v4024 = vunpack.c.l.b16 %v3999
      %v4025 = vpack.c.b16 %v4018, %v4017
      %v4026 = vpack.c.b16 %v4020, %v4019
      %v4027 = vpack.c.b16 %v4022, %v4021
      %v4028 = vpack.c.b16 %v4024, %v4023
      %v4049 = vunpack.c.l.b16 %v4001
      %v4050 = vunpack.c.l.b16 %v4002
      %v4051 = vunpack.c.l.b16 %v4003
      %v4052 = vunpack.c.l.b16 %v4004
      %v4053 = vunpack.c.l.b16 %v4005
      %v4054 = vunpack.c.l.b16 %v4006
      %v4055 = vunpack.c.l.b16 %v4007
      %v4056 = vunpack.c.l.b16 %v4008
      %v4057 = vunpack.c.l.b16 %v4009
      %v4058 = vunpack.c.l.b16 %v4010
      %v4059 = vunpack.c.l.b16 %v4011
      %v4060 = vunpack.c.l.b16 %v4012
      %v4061 = vunpack.c.l.b16 %v4013
      %v4062 = vunpack.c.l.b16 %v4014
      %v4063 = vunpack.c.l.b16 %v4015
      %v4064 = vunpack.c.l.b16 %v4016
      %v4065 = vpack.c.b16 %v4050, %v4049
      %v4066 = vpack.c.b16 %v4052, %v4051
      %v4067 = vpack.c.b16 %v4054, %v4053
      %v4068 = vpack.c.b16 %v4056, %v4055
      %v4069 = vpack.c.b16 %v4058, %v4057
      %v4070 = vpack.c.b16 %v4060, %v4059
      %v4071 = vpack.c.b16 %v4062, %v4061
      %v4072 = vpack.c.b16 %v4064, %v4063
      %4081 = vmatprep.subr.bf16.mxu0 0
      %4082 = vmatpush1.bf16.msra.mxu0 %v4072
      %4083 = vmatprep.subr.bf16.mxu0 0
      %4084 = vmatpush1.bf16.msra.mxu0 %v4071
      %4085 = vmatprep.subr.bf16.mxu0 0
      %4086 = vmatpush1.bf16.msra.mxu0 %v4070
      %4087 = vmatprep.subr.bf16.mxu0 0
      %4088 = vmatpush1.bf16.msra.mxu0 %v4069
      %4089 = vmatprep.subr.bf16.mxu0 0
      %4090 = vmatpush1.bf16.msra.mxu0 %v4068
      %4091 = vmatprep.subr.bf16.mxu0 0
      %4092 = vmatpush1.bf16.msra.mxu0 %v4067
      %4093 = vmatprep.subr.bf16.mxu0 0
      %4094 = vmatpush1.bf16.msra.mxu0 %v4066
      %4095 = vmatprep.subr.bf16.mxu0 0
      %4096 = vmatpush1.bf16.msra.mxu0 %v4065
      %4097 = vmatprep.subr.bf16.mxu0 0
      %4098 = vmatpush2.bf16.msra.mxu0 0
      %4099 = vmatprep.subr.bf16.mxu0 0
      %4100 = vmatpush2.bf16.msra.mxu0 0
      %4101 = vmatprep.subr.bf16.mxu0 0
      %4102 = vmatpush2.bf16.msra.mxu0 0
      %4103 = vmatprep.subr.bf16.mxu0 0
      %4104 = vmatpush2.bf16.msra.mxu0 0
      %4105 = vmatprep.subr.bf16.mxu0 0
      %4106 = vmatpush2.bf16.msra.mxu0 0
      %4107 = vmatprep.subr.bf16.mxu0 0
      %4108 = vmatpush2.bf16.msra.mxu0 0
      %4109 = vmatprep.subr.bf16.mxu0 0
      %4110 = vmatpush2.bf16.msra.mxu0 0
      %4111 = vmatprep.subr.bf16.mxu0 0
      %4112 = vmatpush2.bf16.msra.mxu0 0
      %4113 = vmatprep.mubr.bf16.mxu0 0
      %4114 = vmatmul.mubr.bf16.gmra.mxu0 %v4025
      %v4115 = vpop.f32.mrf.mxu0
      %v4116 = vadd.f32 0.0, %v4115
      %v4117 = vpop.f32.mrf.mxu0
      %v4118 = vpop.f32.mrf.mxu0
      %v4119 = vadd.f32 0.0, %v4118
      %v4120 = vpop.f32.mrf.mxu0
      %4121 = vmatprep.mubr.bf16.mxu0 0
      %4122 = vmatmul.mubr.bf16.gmra.mxu0 %v4026
      %v4123 = vpop.f32.mrf.mxu0
      %v4124 = vadd.f32 0.0, %v4123
      %v4125 = vpop.f32.mrf.mxu0
      %v4126 = vpop.f32.mrf.mxu0
      %v4127 = vadd.f32 0.0, %v4126
      %v4128 = vpop.f32.mrf.mxu0
      %4129 = vmatprep.mubr.bf16.mxu0 0
      %4130 = vmatmul.mubr.bf16.gmra.mxu0 %v4027
      %v4131 = vpop.f32.mrf.mxu0
      %v4132 = vadd.f32 0.0, %v4131
      %v4133 = vpop.f32.mrf.mxu0
      %v4134 = vpop.f32.mrf.mxu0
      %v4135 = vadd.f32 0.0, %v4134
      %v4136 = vpop.f32.mrf.mxu0
      %4137 = vmatprep.mubr.bf16.mxu0 0
      %4138 = vmatmul.mubr.bf16.gmra.mxu0 %v4028
      %v4139 = vpop.f32.mrf.mxu0
      %v4140 = vadd.f32 0.0, %v4139
      %v4141 = vpop.f32.mrf.mxu0
      %v4142 = vpop.f32.mrf.mxu0
      %v4143 = vadd.f32 0.0, %v4142
      %v4144 = vpop.f32.mrf.mxu0
      %4145 = vdwg.mxu0
      %v4146 = vadd.f32 %v3864, %v4116
      %v4147 = vadd.f32 %v3865, %v4119
      %v4148 = vadd.f32 %v3866, %v4124
      %v4149 = vadd.f32 %v3867, %v4127
      %v4150 = vadd.f32 %v3868, %v4132
      %v4151 = vadd.f32 %v3869, %v4135
      %v4152 = vadd.f32 %v3870, %v4140
      %v4153 = vadd.f32 %v3871, %v4143
      %v4154 = vld [vmem:[%s3701] sm:$0xe]
      %v4155 = vld [vmem:[%s3701 + $0x8] sm:$0xe]
      %v4156 = vld [vmem:[%s3701 + $0x10] sm:$0xe]
      %v4157 = vld [vmem:[%s3701 + $0x18] sm:$0xe]
      %v4158 = vld [vmem:[%s3701 + $0x20] sm:$0xe]
      %v4159 = vld [vmem:[%s3701 + $0x28] sm:$0xe]
      %v4160 = vld [vmem:[%s3701 + $0x30] sm:$0xe]
      %v4161 = vld [vmem:[%s3701 + $0x38] sm:$0xe]
      %v4178 = vrot.slane %v4154, 5
      %v4179 = vrot.slane %v4178, 4
      %v4180 = vrot.slane %v3873, 5
      %v4181 = vsel %vm2852, %v4179, %v4180
      %v4182 = vrot.slane %v4155, 5
      %v4183 = vrot.slane %v4182, 4
      %v4184 = vrot.slane %v3875, 5
      %v4185 = vsel %vm2852, %v4183, %v4184
      %v4186 = vrot.slane %v4156, 5
      %v4187 = vrot.slane %v4186, 4
      %v4188 = vrot.slane %v3877, 5
      %v4189 = vsel %vm2852, %v4187, %v4188
      %v4190 = vrot.slane %v4157, 5
      %v4191 = vrot.slane %v4190, 4
      %v4192 = vrot.slane %v3879, 5
      %v4193 = vsel %vm2852, %v4191, %v4192
      %v4194 = vrot.slane %v4158, 5
      %v4195 = vrot.slane %v4194, 4
      %v4196 = vrot.slane %v3881, 5
      %v4197 = vsel %vm2852, %v4195, %v4196
      %v4198 = vrot.slane %v4159, 5
      %v4199 = vrot.slane %v4198, 4
      %v4200 = vrot.slane %v3883, 5
      %v4201 = vsel %vm2852, %v4199, %v4200
      %v4202 = vrot.slane %v4160, 5
      %v4203 = vrot.slane %v4202, 4
      %v4204 = vrot.slane %v3885, 5
      %v4205 = vsel %vm2852, %v4203, %v4204
      %v4206 = vrot.slane %v4161, 5
      %v4207 = vrot.slane %v4206, 4
      %v4208 = vrot.slane %v3887, 5
      %v4209 = vsel %vm2852, %v4207, %v4208
      %s4210 = scalar_lea.vmem %s3, 512
      %v4211 = vld [vmem:[%s4210] sm:$0xf]
      %v4212 = vld [vmem:[%s4210 + $0x4] sm:$0xf]
      %v4213 = vld [vmem:[%s4210 + $0x8] sm:$0xf]
      %v4214 = vld [vmem:[%s4210 + $0xc] sm:$0xf]
      %v4215 = vld [vmem:[%s4210 + $0x10] sm:$0xf]
      %v4216 = vld [vmem:[%s4210 + $0x14] sm:$0xf]
      %v4217 = vld [vmem:[%s4210 + $0x18] sm:$0xf]
      %v4218 = vld [vmem:[%s4210 + $0x1c] sm:$0xf]
      %v4219 = vld [vmem:[%s4210 + $0x20] sm:$0xf]
      %v4220 = vld [vmem:[%s4210 + $0x24] sm:$0xf]
      %v4221 = vld [vmem:[%s4210 + $0x28] sm:$0xf]
      %v4222 = vld [vmem:[%s4210 + $0x2c] sm:$0xf]
      %v4223 = vld [vmem:[%s4210 + $0x30] sm:$0xf]
      %v4224 = vld [vmem:[%s4210 + $0x34] sm:$0xf]
      %v4225 = vld [vmem:[%s4210 + $0x38] sm:$0xf]
      %v4226 = vld [vmem:[%s4210 + $0x3c] sm:$0xf]
      %v4227 = vunpack.c.l.b16 %v4181
      %v4228 = vunpack.c.l.b16 %v4185
      %v4229 = vunpack.c.l.b16 %v4189
      %v4230 = vunpack.c.l.b16 %v4193
      %v4231 = vunpack.c.l.b16 %v4197
      %v4232 = vunpack.c.l.b16 %v4201
      %v4233 = vunpack.c.l.b16 %v4205
      %v4234 = vunpack.c.l.b16 %v4209
      %v4235 = vpack.c.b16 %v4228, %v4227
      %v4236 = vpack.c.b16 %v4230, %v4229
      %v4237 = vpack.c.b16 %v4232, %v4231
      %v4238 = vpack.c.b16 %v4234, %v4233
      %v4259 = vunpack.c.l.b16 %v4211
      %v4260 = vunpack.c.l.b16 %v4212
      %v4261 = vunpack.c.l.b16 %v4213
      %v4262 = vunpack.c.l.b16 %v4214
      %v4263 = vunpack.c.l.b16 %v4215
      %v4264 = vunpack.c.l.b16 %v4216
      %v4265 = vunpack.c.l.b16 %v4217
      %v4266 = vunpack.c.l.b16 %v4218
      %v4267 = vunpack.c.l.b16 %v4219
      %v4268 = vunpack.c.l.b16 %v4220
      %v4269 = vunpack.c.l.b16 %v4221
      %v4270 = vunpack.c.l.b16 %v4222
      %v4271 = vunpack.c.l.b16 %v4223
      %v4272 = vunpack.c.l.b16 %v4224
      %v4273 = vunpack.c.l.b16 %v4225
      %v4274 = vunpack.c.l.b16 %v4226
      %v4275 = vpack.c.b16 %v4260, %v4259
      %v4276 = vpack.c.b16 %v4262, %v4261
      %v4277 = vpack.c.b16 %v4264, %v4263
      %v4278 = vpack.c.b16 %v4266, %v4265
      %v4279 = vpack.c.b16 %v4268, %v4267
      %v4280 = vpack.c.b16 %v4270, %v4269
      %v4281 = vpack.c.b16 %v4272, %v4271
      %v4282 = vpack.c.b16 %v4274, %v4273
      %4291 = vmatprep.subr.bf16.mxu0 0
      %4292 = vmatpush1.bf16.msra.mxu0 %v4282
      %4293 = vmatprep.subr.bf16.mxu0 0
      %4294 = vmatpush1.bf16.msra.mxu0 %v4281
      %4295 = vmatprep.subr.bf16.mxu0 0
      %4296 = vmatpush1.bf16.msra.mxu0 %v4280
      %4297 = vmatprep.subr.bf16.mxu0 0
      %4298 = vmatpush1.bf16.msra.mxu0 %v4279
      %4299 = vmatprep.subr.bf16.mxu0 0
      %4300 = vmatpush1.bf16.msra.mxu0 %v4278
      %4301 = vmatprep.subr.bf16.mxu0 0
      %4302 = vmatpush1.bf16.msra.mxu0 %v4277
      %4303 = vmatprep.subr.bf16.mxu0 0
      %4304 = vmatpush1.bf16.msra.mxu0 %v4276
      %4305 = vmatprep.subr.bf16.mxu0 0
      %4306 = vmatpush1.bf16.msra.mxu0 %v4275
      %4307 = vmatprep.subr.bf16.mxu0 0
      %4308 = vmatpush2.bf16.msra.mxu0 0
      %4309 = vmatprep.subr.bf16.mxu0 0
      %4310 = vmatpush2.bf16.msra.mxu0 0
      %4311 = vmatprep.subr.bf16.mxu0 0
      %4312 = vmatpush2.bf16.msra.mxu0 0
      %4313 = vmatprep.subr.bf16.mxu0 0
      %4314 = vmatpush2.bf16.msra.mxu0 0
      %4315 = vmatprep.subr.bf16.mxu0 0
      %4316 = vmatpush2.bf16.msra.mxu0 0
      %4317 = vmatprep.subr.bf16.mxu0 0
      %4318 = vmatpush2.bf16.msra.mxu0 0
      %4319 = vmatprep.subr.bf16.mxu0 0
      %4320 = vmatpush2.bf16.msra.mxu0 0
      %4321 = vmatprep.subr.bf16.mxu0 0
      %4322 = vmatpush2.bf16.msra.mxu0 0
      %4323 = vmatprep.mubr.bf16.mxu0 0
      %4324 = vmatmul.mubr.bf16.gmra.mxu0 %v4235
      %v4325 = vpop.f32.mrf.mxu0
      %v4326 = vadd.f32 0.0, %v4325
      %v4327 = vpop.f32.mrf.mxu0
      %v4328 = vpop.f32.mrf.mxu0
      %v4329 = vadd.f32 0.0, %v4328
      %v4330 = vpop.f32.mrf.mxu0
      %4331 = vmatprep.mubr.bf16.mxu0 0
      %4332 = vmatmul.mubr.bf16.gmra.mxu0 %v4236
      %v4333 = vpop.f32.mrf.mxu0
      %v4334 = vadd.f32 0.0, %v4333
      %v4335 = vpop.f32.mrf.mxu0
      %v4336 = vpop.f32.mrf.mxu0
      %v4337 = vadd.f32 0.0, %v4336
      %v4338 = vpop.f32.mrf.mxu0
      %4339 = vmatprep.mubr.bf16.mxu0 0
      %4340 = vmatmul.mubr.bf16.gmra.mxu0 %v4237
      %v4341 = vpop.f32.mrf.mxu0
      %v4342 = vadd.f32 0.0, %v4341
      %v4343 = vpop.f32.mrf.mxu0
      %v4344 = vpop.f32.mrf.mxu0
      %v4345 = vadd.f32 0.0, %v4344
      %v4346 = vpop.f32.mrf.mxu0
      %4347 = vmatprep.mubr.bf16.mxu0 0
      %4348 = vmatmul.mubr.bf16.gmra.mxu0 %v4238
      %v4349 = vpop.f32.mrf.mxu0
      %v4350 = vadd.f32 0.0, %v4349
      %v4351 = vpop.f32.mrf.mxu0
      %v4352 = vpop.f32.mrf.mxu0
      %v4353 = vadd.f32 0.0, %v4352
      %v4354 = vpop.f32.mrf.mxu0
      %4355 = vdwg.mxu0
      %v4356 = vadd.f32 %v4146, %v4326
      %v4357 = vadd.f32 %v4147, %v4329
      %v4358 = vadd.f32 %v4148, %v4334
      %v4359 = vadd.f32 %v4149, %v4337
      %v4360 = vadd.f32 %v4150, %v4342
      %v4361 = vadd.f32 %v4151, %v4345
      %v4362 = vadd.f32 %v4152, %v4350
      %v4363 = vadd.f32 %v4153, %v4353
      %v4364 = vld [vmem:[%s4] sm:$0x1]
      %v4366 = vlaneseq
      %v4367 = vshrl.u32 %v4366, 7
      %v4368 = vsub.s32 0, %v4367
      %v4369 = vrot.slane %v4364, %v4368
      %v4371 = vadd.f32 %v4356, %v4369
      %v4372 = vadd.f32 %v4357, %v4369
      %v4373 = vadd.f32 %v4358, %v4369
      %v4374 = vadd.f32 %v4359, %v4369
      %v4375 = vadd.f32 %v4360, %v4369
      %v4376 = vadd.f32 %v4361, %v4369
      %v4377 = vadd.f32 %v4362, %v4369
      %v4378 = vadd.f32 %v4363, %v4369
      %v4379 = vld [vmem:[%s325] sm:$0xf]
      %v4380 = vld [vmem:[%s325 + $0x4] sm:$0xf]
      %v4381 = vld [vmem:[%s325 + $0x8] sm:$0xf]
      %v4382 = vld [vmem:[%s325 + $0xc] sm:$0xf]
      %v4383 = vld [vmem:[%s325 + $0x10] sm:$0xf]
      %v4384 = vld [vmem:[%s325 + $0x14] sm:$0xf]
      %v4385 = vld [vmem:[%s325 + $0x18] sm:$0xf]
      %v4386 = vld [vmem:[%s325 + $0x1c] sm:$0xf]
      %v4387 = vld [vmem:[%s6] sm:$0xf]
      %v4388 = vld [vmem:[%s6 + $0x4] sm:$0xf]
      %v4389 = vld [vmem:[%s6 + $0x8] sm:$0xf]
      %v4390 = vld [vmem:[%s6 + $0xc] sm:$0xf]
      %v4391 = vld [vmem:[%s6 + $0x10] sm:$0xf]
      %v4392 = vld [vmem:[%s6 + $0x14] sm:$0xf]
      %v4393 = vld [vmem:[%s6 + $0x18] sm:$0xf]
      %v4394 = vld [vmem:[%s6 + $0x1c] sm:$0xf]
      %v4395 = vld [vmem:[%s6 + $0x20] sm:$0xf]
      %v4396 = vld [vmem:[%s6 + $0x24] sm:$0xf]
      %v4397 = vld [vmem:[%s6 + $0x28] sm:$0xf]
      %v4398 = vld [vmem:[%s6 + $0x2c] sm:$0xf]
      %v4399 = vld [vmem:[%s6 + $0x30] sm:$0xf]
      %v4400 = vld [vmem:[%s6 + $0x34] sm:$0xf]
      %v4401 = vld [vmem:[%s6 + $0x38] sm:$0xf]
      %v4402 = vld [vmem:[%s6 + $0x3c] sm:$0xf]
      %v4403 = vld [vmem:[%s7] sm:$0x1]
      %v4405 = vlaneseq
      %v4406 = vshrl.u32 %v4405, 7
      %v4407 = vsub.s32 0, %v4406
      %v4408 = vrot.slane %v4403, %v4407
      %v4418 = vunpack.c.l.b16 %v4379
      %v4419 = vunpack.c.l.b16 %v4380
      %v4420 = vunpack.c.l.b16 %v4381
      %v4421 = vunpack.c.l.b16 %v4382
      %v4422 = vunpack.c.l.b16 %v4383
      %v4423 = vunpack.c.l.b16 %v4384
      %v4424 = vunpack.c.l.b16 %v4385
      %v4425 = vunpack.c.l.b16 %v4386
      %v4426 = vpack.c.b16 %v4419, %v4418
      %v4427 = vpack.c.b16 %v4421, %v4420
      %v4428 = vpack.c.b16 %v4423, %v4422
      %v4429 = vpack.c.b16 %v4425, %v4424
      %v4450 = vunpack.c.l.b16 %v4387
      %v4451 = vunpack.c.l.b16 %v4388
      %v4452 = vunpack.c.l.b16 %v4389
      %v4453 = vunpack.c.l.b16 %v4390
      %v4454 = vunpack.c.l.b16 %v4391
      %v4455 = vunpack.c.l.b16 %v4392
      %v4456 = vunpack.c.l.b16 %v4393
      %v4457 = vunpack.c.l.b16 %v4394
      %v4458 = vunpack.c.l.b16 %v4395
      %v4459 = vunpack.c.l.b16 %v4396
      %v4460 = vunpack.c.l.b16 %v4397
      %v4461 = vunpack.c.l.b16 %v4398
      %v4462 = vunpack.c.l.b16 %v4399
      %v4463 = vunpack.c.l.b16 %v4400
      %v4464 = vunpack.c.l.b16 %v4401
      %v4465 = vunpack.c.l.b16 %v4402
      %v4466 = vpack.c.b16 %v4451, %v4450
      %v4467 = vpack.c.b16 %v4453, %v4452
      %v4468 = vpack.c.b16 %v4455, %v4454
      %v4469 = vpack.c.b16 %v4457, %v4456
      %v4470 = vpack.c.b16 %v4459, %v4458
      %v4471 = vpack.c.b16 %v4461, %v4460
      %v4472 = vpack.c.b16 %v4463, %v4462
      %v4473 = vpack.c.b16 %v4465, %v4464
      %4482 = vmatprep.subr.bf16.mxu0 0
      %4483 = vmatpush1.bf16.msra.mxu0 %v4473
      %4484 = vmatprep.subr.bf16.mxu0 0
      %4485 = vmatpush1.bf16.msra.mxu0 %v4472
      %4486 = vmatprep.subr.bf16.mxu0 0
      %4487 = vmatpush1.bf16.msra.mxu0 %v4471
      %4488 = vmatprep.subr.bf16.mxu0 0
      %4489 = vmatpush1.bf16.msra.mxu0 %v4470
      %4490 = vmatprep.subr.bf16.mxu0 0
      %4491 = vmatpush1.bf16.msra.mxu0 %v4469
      %4492 = vmatprep.subr.bf16.mxu0 0
      %4493 = vmatpush1.bf16.msra.mxu0 %v4468
      %4494 = vmatprep.subr.bf16.mxu0 0
      %4495 = vmatpush1.bf16.msra.mxu0 %v4467
      %4496 = vmatprep.subr.bf16.mxu0 0
      %4497 = vmatpush1.bf16.msra.mxu0 %v4466
      %4498 = vmatprep.subr.bf16.mxu0 0
      %4499 = vmatpush2.bf16.msra.mxu0 0
      %4500 = vmatprep.subr.bf16.mxu0 0
      %4501 = vmatpush2.bf16.msra.mxu0 0
      %4502 = vmatprep.subr.bf16.mxu0 0
      %4503 = vmatpush2.bf16.msra.mxu0 0
      %4504 = vmatprep.subr.bf16.mxu0 0
      %4505 = vmatpush2.bf16.msra.mxu0 0
      %4506 = vmatprep.subr.bf16.mxu0 0
      %4507 = vmatpush2.bf16.msra.mxu0 0
      %4508 = vmatprep.subr.bf16.mxu0 0
      %4509 = vmatpush2.bf16.msra.mxu0 0
      %4510 = vmatprep.subr.bf16.mxu0 0
      %4511 = vmatpush2.bf16.msra.mxu0 0
      %4512 = vmatprep.subr.bf16.mxu0 0
      %4513 = vmatpush2.bf16.msra.mxu0 0
      %4514 = vmatprep.mubr.bf16.mxu0 0
      %4515 = vmatmul.mubr.bf16.gmra.mxu0 %v4426
      %v4516 = vpop.f32.mrf.mxu0
      %v4517 = vadd.f32 %v4408, %v4516
      %v4518 = vpop.f32.mrf.mxu0
      %v4519 = vpop.f32.mrf.mxu0
      %v4520 = vadd.f32 %v4408, %v4519
      %v4521 = vpop.f32.mrf.mxu0
      %4522 = vmatprep.mubr.bf16.mxu0 0
      %4523 = vmatmul.mubr.bf16.gmra.mxu0 %v4427
      %v4524 = vpop.f32.mrf.mxu0
      %v4525 = vadd.f32 %v4408, %v4524
      %v4526 = vpop.f32.mrf.mxu0
      %v4527 = vpop.f32.mrf.mxu0
      %v4528 = vadd.f32 %v4408, %v4527
      %v4529 = vpop.f32.mrf.mxu0
      %4530 = vmatprep.mubr.bf16.mxu0 0
      %4531 = vmatmul.mubr.bf16.gmra.mxu0 %v4428
      %v4532 = vpop.f32.mrf.mxu0
      %v4533 = vadd.f32 %v4408, %v4532
      %v4534 = vpop.f32.mrf.mxu0
      %v4535 = vpop.f32.mrf.mxu0
      %v4536 = vadd.f32 %v4408, %v4535
      %v4537 = vpop.f32.mrf.mxu0
      %4538 = vmatprep.mubr.bf16.mxu0 0
      %4539 = vmatmul.mubr.bf16.gmra.mxu0 %v4429
      %v4540 = vpop.f32.mrf.mxu0
      %v4541 = vadd.f32 %v4408, %v4540
      %v4542 = vpop.f32.mrf.mxu0
      %v4543 = vpop.f32.mrf.mxu0
      %v4544 = vadd.f32 %v4408, %v4543
      %v4545 = vpop.f32.mrf.mxu0
      %4546 = vdwg.mxu0
      %v4547 = vadd.f32 %v4371, %v4517
      %v4548 = vadd.f32 %v4372, %v4520
      %v4549 = vadd.f32 %v4373, %v4525
      %v4550 = vadd.f32 %v4374, %v4528
      %v4551 = vadd.f32 %v4375, %v4533
      %v4552 = vadd.f32 %v4376, %v4536
      %v4553 = vadd.f32 %v4377, %v4541
      %v4554 = vadd.f32 %v4378, %v4544
      %v4555 = vmax.f32 %v4547, 0.0
      %v4556 = vmax.f32 %v4548, 0.0
      %v4557 = vmax.f32 %v4549, 0.0
      %v4558 = vmax.f32 %v4550, 0.0
      %v4559 = vmax.f32 %v4551, 0.0
      %v4560 = vmax.f32 %v4552, 0.0
      %v4561 = vmax.f32 %v4553, 0.0
      %v4562 = vmax.f32 %v4554, 0.0
      %4563 = vst [vmem:[%s330] sm:$0xff] %v4555
      %4564 = vst [vmem:[%s330 + $0x8] sm:$0xff] %v4556
      %4565 = vst [vmem:[%s330 + $0x10] sm:$0xff] %v4557
      %4566 = vst [vmem:[%s330 + $0x18] sm:$0xff] %v4558
      %4567 = vst [vmem:[%s330 + $0x20] sm:$0xff] %v4559
      %4568 = vst [vmem:[%s330 + $0x28] sm:$0xff] %v4560
      %4569 = vst [vmem:[%s330 + $0x30] sm:$0xff] %v4561
      %4570 = vst [vmem:[%s330 + $0x38] sm:$0xff] %v4562
      %p4571 = scmp.lt.s32.totalorder %s19, 1
      %s4572 = scalar_select %p4571, %s19, 1
      %s4573 = smul.addr %s4572, 8
      %s4574 = smul.addr %s4573, 8
      %s4575 = scalar_lea.vmem %s8, %s4574
      // Predicated region
      $region53: #{residual_block_forward.1} parent=51 // pred_check
        %p4576 = pneg %p215
      $region54: #{residual_block_forward.1} parent=51 // pred_check_branch
        %4578 = sbr.rel (%p4576) target = $region56
      $region55: #{residual_block_forward.1} parent=51 // pred_region
        _
      $region56: #{residual_block_forward.1} parent=51 // pred_fallthru
        _
    $region52: #{residual_block_forward.1} parent=5 // pred_fallthru
      _
    %p4579 = scmp.le.s32.totalorder 2, %s14
    // Predicated region
    $region57: #{residual_block_forward.1} parent=5 // pred_check
      %p4580 = pneg %p4579
    $region58: #{residual_block_forward.1} parent=5 // pred_check_branch
      %4582 = sbr.rel (%p4580) target = $region60
    $region59: #{residual_block_forward.1} parent=5 // pred_region
      %s4583 = ssub.s32 %s14, 2
      // Predicated region
      $region61: #{residual_block_forward.1} parent=59 // pred_check
        %p4584 = pneg %p221
      $region62: #{residual_block_forward.1} parent=59 // pred_check_branch
        %4586 = sbr.rel (%p4584) target = $region64
      $region63: #{residual_block_forward.1} parent=59 // pred_region
        %p4587 = scmp.lt.s32.totalorder %s20, 1
        %s4588 = scalar_select %p4587, %s20, 1
        %s4589 = smul.addr %s4588, 8
        %s4590 = smul.addr %s4589, 8
        %s4591 = scalar_lea.vmem %s8, %s4590
      $region64: #{residual_block_forward.1} parent=59 // pred_fallthru
        _
    $region60: #{residual_block_forward.1} parent=5 // pred_fallthru
      _
  $region6: #{residual_block_forward.1} parent=0 // loop_footer
    %s18 = sadd.s32 1, %s14
  $region7: #{residual_block_forward.1} parent=0 // loop_footer_branch
    %13 = sbr.rel target = $region3
  $region8: #{residual_block_forward.1} parent=0 // loop_exit
    _

</llo_original>
